<compile_context>
chip_gen: v6e
topology: v6e:2x2x1
jax: 0.10.0
libtpu: 0.0.40
codegen_flags: <defaults>
</compile_context>

<pallas_src>
import math
from functools import partial

import jax
import jax.numpy as jnp
from jax import lax
from jax.experimental import pallas as pl
from jax.experimental.pallas import tpu as pltpu


def _stacked_residual_cnn_kernel(x_ref, w_ref, b_ref, o_ref, *,
                                 kernel_size, layers, seq_len):
    """One block = several lane-packed batch groups flattened along rows.

    x_ref: (M, Pc)                  M = groups_per_step * seq_len, Pc = P*C (f32)
    w_ref: (layers, k, Pc, 2*Pc)    block-diagonal, 'out' half pre-scaled (bf16)
    b_ref: (layers, 1, 2*Pc)        packed bias ('out' half pre-scaled)    (f32)
    o_ref: (M, Pc)
    """
    M, Pc = x_ref.shape
    pad = (kernel_size - 1) // 2

    x = x_ref[...]                                            # (M, Pc) f32

    # Boundary masks hoisted out of the layer loop: (k-1) distinct shifts.
    # The int32 row-index tensor is only needed here, not across layers.
    masks = {}
    if kernel_size > 1:
        row_in_group = lax.rem(
            lax.broadcasted_iota(jnp.int32, (M, Pc), 0), seq_len)
        for t in range(kernel_size):
            shift = pad - t
            if shift > 0:
                masks[shift] = row_in_group >= shift
            elif shift < 0:
                masks[shift] = row_in_group < seq_len + shift

    # few layers -> static unroll; switch to lax.fori_loop if `layers` grows.
    for layer in range(layers):
        # accumulate k per-tap dots (no (M, k*Pc) window materialization)
        y = b_ref[layer]                                      # (1, 2*Pc) f32
        for t in range(kernel_size):
            shift = pad - t
            if shift == 0:
                col = x
            else:
                col = pltpu.roll(x, shift % M, axis=0)        # XLU sublane rotate
                col = jnp.where(masks[shift], col, 0.0)       # zero wrapped rows
            y = y + jnp.dot(col.astype(jnp.bfloat16), w_ref[layer, t],
                            preferred_element_type=jnp.float32)
        out, gate = y[:, :Pc], y[:, Pc:]
        # sqrt(0.5) is already folded into the 'out' half of w/b.
        x = x + out * jax.nn.sigmoid(gate)

    o_ref[...] = x


def _pick_pack_factor(C):
    # pack P batch elements along lanes so P*C hits the 128-lane vreg width
    if C < 128 and 128 % C == 0:
        return 128 // C
    return 1


def _num_tensorcores_per_chip():
    try:
        kind = jax.devices()[0].device_kind.lower()
    except Exception:
        return 1
    # v7x (and v3/v4 megacore) expose 2 TensorCores per device; v5e/v6e have 1.
    return 2 if any(v in kind for v in ("v7", "v4", "v3")) else 1


def _vmem_budget_bytes():
    # stay inside the 32 MiB scoped default; v7x only has 64 MiB physical VMEM.
    try:
        cap = pltpu.get_tpu_info().vmem_capacity_bytes
    except Exception:
        cap = 64 * 1024 * 1024
    return min(cap // 4, 20 * 1024 * 1024)


def _pick_groups_per_step(num_groups, seq_len, pc, *, min_steps, vmem_budget):
    """Largest groups-per-step tile that fits the VMEM budget while keeping at
    least `min_steps` grid steps (megacore sharding + per-core pipelining)."""
    # rough per-row bytes: in/out f32 blocks double-buffered + f32 y(2Pc)
    # + bf16 col + masks
    bytes_per_row = 2 * 2 * pc * 4 + 2 * pc * 4 + pc * 2 + pc * 4
    max_rows = max(seq_len, vmem_budget // max(bytes_per_row, 1))
    # TODO(synk): if a single group (seq_len rows) already exceeds max_rows, an
    # L-tiling grid axis with a (k-1)//2-row halo is needed (matters on v7x).
    divisors = [d for d in range(1, num_groups + 1) if num_groups % d == 0]
    fitting = [d for d in divisors if d * seq_len <= max_rows] or [1]
    good = [d for d in fitting if num_groups // d >= min_steps]
    if good:
        return max(good)
    ok = [d for d in fitting if num_groups // d >= min(2, min_steps)]
    return max(ok) if ok else max(fitting)


def _pack_params(weights, bias, pack, scale):
    """(layers,k,C,2C)/(layers,1,2C) -> block-diag (layers,k,Pc,2Pc) bf16 + (layers,1,2Pc) f32."""
    layers, k, C, _ = weights.shape
    Pc = pack * C
    w_out = weights[..., :C] * scale                 # fold sqrt(0.5) into 'out' half
    w_gate = weights[..., C:]
    wp = jnp.zeros((layers, k, Pc, 2 * Pc), jnp.float32)
    for p in range(pack):
        rows = slice(p * C, (p + 1) * C)
        wp = wp.at[:, :, rows, p * C:(p + 1) * C].set(w_out)
        wp = wp.at[:, :, rows, Pc + p * C:Pc + (p + 1) * C].set(w_gate)
    wp = wp.astype(jnp.bfloat16)

    b_out = bias[:, :, :C] * scale
    b_gate = bias[:, :, C:]
    bp = jnp.concatenate([jnp.tile(b_out, (1, 1, pack)),
                          jnp.tile(b_gate, (1, 1, pack))], axis=-1).astype(jnp.float32)
    return wp, bp


@partial(jax.jit, static_argnames=("kernel_size",))
def stacked_residual_cnn(x_nchw, weights, bias, *, kernel_size):
    """x_nchw: (B, C, L, 1) float32 (PyTorch NCHW). Returns same shape.

    Jitted end-to-end so the pack/unpack transpose+reshape chains around the
    pallas_call fuse into a single copy pass per side.
    """
    assert kernel_size % 2 == 1, "even kernel sizes change output length in PyTorch"
    B, C, L, w1 = x_nchw.shape
    assert w1 == 1, "width dim must be 1 (conv kernel is (k, 1))"
    assert L % 8 == 0, "sequence length must be a multiple of 8 (sublane tiling)"
    layers = weights.shape[0]

    pack = _pick_pack_factor(C)
    Pc = pack * C

    # NCHW -> (B, L, C); pad batch to a multiple of the lane-pack factor
    x = jnp.transpose(x_nchw[..., 0], (0, 2, 1))
    Bp = ((B + pack - 1) // pack) * pack
    if Bp != B:
        x = jnp.pad(x, ((0, Bp - B), (0, 0), (0, 0)))
    G = Bp // pack

    # lane-pack: (Bp, L, C) -> (G, pack, L, C) -> (G, L, pack*C) -> (G*L, Pc)
    x2d = (x.reshape(G, pack, L, C)
             .transpose(0, 2, 1, 3)
             .reshape(G * L, Pc))

    wp, bp = _pack_params(weights.astype(jnp.float32),
                          bias.astype(jnp.float32), pack, 0.5 ** 0.5)

    cores = _num_tensorcores_per_chip()
    bt = _pick_groups_per_step(G, L, Pc,
                               min_steps=4 if cores > 1 else 1,
                               vmem_budget=_vmem_budget_bytes())
    rows = bt * L

    kern = partial(_stacked_residual_cnn_kernel,
                   kernel_size=kernel_size, layers=layers, seq_len=L)

    out2d = pl.pallas_call(
        kern,
        out_shape=jax.ShapeDtypeStruct((G * L, Pc), jnp.float32),
        grid_spec=pltpu.PrefetchScalarGridSpec(
            num_scalar_prefetch=0,
            grid=(G // bt,),
            in_specs=[
                pl.BlockSpec((rows, Pc), lambda i: (i, 0)),
                # weights/bias are grid-invariant -> single-buffer them
                pl.BlockSpec(wp.shape, lambda i: (0, 0, 0, 0),
                             pipeline_mode=pl.Buffered(1)),
                pl.BlockSpec(bp.shape, lambda i: (0, 0, 0),
                             pipeline_mode=pl.Buffered(1)),
            ],
            out_specs=pl.BlockSpec((rows, Pc), lambda i: (i, 0)),
        ),
        # each grid step fully overwrites the x block it read -> alias is safe
        input_output_aliases={0: 0},
        compiler_params=pltpu.CompilerParams(
            dimension_semantics=("parallel",),
            vmem_limit_bytes=32 * 1024 * 1024),
    )(x2d, wp, bp)

    # unpack: (G*L, Pc) -> (G, L, pack, C) -> (Bp, L, C) -> slice -> NCHW
    out = (out2d.reshape(G, L, pack, C)
                .transpose(0, 2, 1, 3)
                .reshape(Bp, L, C)[:B])
    return jnp.transpose(out, (0, 2, 1))[..., None]


def _reference_forward(x_nchw, weights, bias, *, kernel_size):
    """Pure-JAX reference using lax.conv (mirrors nn.Conv2d semantics)."""
    layers, k, C, _ = weights.shape
    pad = (kernel_size - 1) // 2
    x = x_nchw
    for layer in range(layers):
        # our (k, Cin, Cout) tap layout -> torch OIHW (Cout, Cin, k, 1)
        w_oihw = jnp.transpose(weights[layer], (2, 1, 0))[..., None]
        y = lax.conv_general_dilated(
            x, w_oihw, window_strides=(1, 1),
            padding=((pad, pad), (0, 0)),
            dimension_numbers=("NCHW", "OIHW", "NCHW"),
            precision=lax.Precision.HIGHEST)
        y = y + bias[layer, 0][None, :, None, None]
        out, gate = y[:, :C], y[:, C:]
        x = x + out * jax.nn.sigmoid(gate) * (0.5 ** 0.5)
    return x


if __name__ == "__main__":
    # module hyperparameters (small but lane/sublane friendly: 4*C = 128 lanes)
    inp_dim = 32          # channels C
    kernel_size = 3
    layers = 3
    batch = 16
    seq_len = 64

    key = jax.random.PRNGKey(0)
    k_x, k_w, k_b = jax.random.split(key, 3)

    # input: NCHW (B, C, L, 1), matching PyTorch Conv2d convention
    x = jax.random.normal(k_x, (batch, inp_dim, seq_len, 1), dtype=jnp.float32)

    # deterministic xavier-uniform-ish init (gain = 2 for dropout=0, per custom_init)
    fan_in = inp_dim * kernel_size
    fan_out = 2 * inp_dim * kernel_size
    gain = (4 * (1 - 0.0)) ** 0.5
    a = gain * math.sqrt(6.0 / (fan_in + fan_out))
    weights = jax.random.uniform(
        k_w, (layers, kernel_size, inp_dim, 2 * inp_dim),
        minval=-a, maxval=a, dtype=jnp.float32)
    b_bound = 1.0 / math.sqrt(fan_in)
    bias = jax.random.uniform(
        k_b, (layers, 1, 2 * inp_dim),
        minval=-b_bound, maxval=b_bound, dtype=jnp.float32)

    out = stacked_residual_cnn(x, weights, bias, kernel_size=kernel_size)
    out = jax.block_until_ready(out)

    ref = _reference_forward(x, weights, bias, kernel_size=kernel_size)
    assert out.shape == x.shape
    # conv matmuls run in bf16 (f32 accumulation) and the bf16 error compounds
    # across `layers`; only the residual stream stays f32.  Acceptable for
    # inference -> loose but bug-catching tolerance.
    assert jnp.allclose(out, ref, atol=1e-1, rtol=5e-2), "mismatch vs reference"

    print("KERNEL_OK")
</pallas_src>

<mosaic_0001>
module attributes {stable_mosaic.version = 11 : i64} {
  func.func @_stacked_residual_cnn_kernel(%arg0: i32, %arg1: memref<256x128xf32, #tpu.memory_space<vmem>>, %arg2: memref<3x3x128x256xbf16, #tpu.memory_space<vmem>>, %arg3: memref<3x1x256xf32, #tpu.memory_space<vmem>>, %arg4: memref<256x128xf32, #tpu.memory_space<vmem>>) attributes {dimension_semantics = [#tpu.dimension_semantics<parallel>], iteration_bounds = array<i64: 1>, scalar_prefetch = 0 : i64, scratch_operands = 0 : i64, tpu.core_type = #tpu.core_type<tc>, window_params = [{transform_indices = @transform_0, window_bounds = array<i64: 256, 128>}, {pipeline_mode = #tpu.pipeline_mode<synchronous>, transform_indices = @transform_1, window_bounds = array<i64: 3, 3, 128, 256>}, {pipeline_mode = #tpu.pipeline_mode<synchronous>, transform_indices = @transform_2, window_bounds = array<i64: 3, 1, 256>}, {transform_indices = @transform_3, window_bounds = array<i64: 256, 128>}]} {
    %c0 = arith.constant 0 : index
    %c0_0 = arith.constant 0 : index
    %0 = vector.load %arg1[%c0, %c0_0] : memref<256x128xf32, #tpu.memory_space<vmem>>, vector<256x128xf32>
    %1 = tpu.iota {dimensions = array<i32: 0>} : vector<256x128xi32>
    %c64_i32 = arith.constant 64 : i32
    %2 = vector.broadcast %c64_i32 : i32 to vector<256x128xi32>
    %3 = arith.remsi %1, %2 : vector<256x128xi32>
    %c1_i32 = arith.constant 1 : i32
    %4 = vector.broadcast %c1_i32 : i32 to vector<256x128xi32>
    %5 = arith.cmpi sge, %3, %4 : vector<256x128xi32>
    %c63_i32 = arith.constant 63 : i32
    %6 = vector.broadcast %c63_i32 : i32 to vector<256x128xi32>
    %7 = arith.cmpi slt, %3, %6 : vector<256x128xi32>
    %c0_1 = arith.constant 0 : index
    %c0_2 = arith.constant 0 : index
    %c0_3 = arith.constant 0 : index
    %8 = vector.load %arg3[%c0_1, %c0_2, %c0_3] : memref<3x1x256xf32, #tpu.memory_space<vmem>>, vector<1x1x256xf32>
    %9 = vector.shape_cast %8 : vector<1x1x256xf32> to vector<1x256xf32>
    %c1_i32_4 = arith.constant 1 : i32
    %10 = tpu.dynamic_rotate %0 by %c1_i32_4 dim 0 : vector<256x128xf32>, i32 -> vector<256x128xf32>
    %cst = arith.constant 0.000000e+00 : f32
    %11 = vector.broadcast %cst : f32 to vector<256x128xf32>
    %12 = arith.select %5, %10, %11 : vector<256x128xi1>, vector<256x128xf32>
    %13 = arith.truncf %12 : vector<256x128xf32> to vector<256x128xbf16>
    %c0_5 = arith.constant 0 : index
    %c0_6 = arith.constant 0 : index
    %c0_7 = arith.constant 0 : index
    %c0_8 = arith.constant 0 : index
    %14 = vector.load %arg2[%c0_5, %c0_6, %c0_7, %c0_8] : memref<3x3x128x256xbf16, #tpu.memory_space<vmem>>, vector<1x1x128x256xbf16>
    %15 = vector.shape_cast %14 : vector<1x1x128x256xbf16> to vector<128x256xbf16>
    %cst_9 = arith.constant dense<0.000000e+00> : vector<256x256xf32>
    %16 = tpu.matmul %13, %15, %cst_9 {dimension_numbers = #tpu.dot_dimension_numbers<[1], [0], [0], [1], [0, 0, 1, 1], [], []>} : vector<256x128xbf16>, vector<128x256xbf16>, vector<256x256xf32> -> vector<256x256xf32>
    %17 = vector.broadcast %9 : vector<1x256xf32> to vector<256x256xf32>
    %18 = arith.addf %17, %16 : vector<256x256xf32>
    %19 = arith.truncf %0 : vector<256x128xf32> to vector<256x128xbf16>
    %c0_10 = arith.constant 0 : index
    %c1 = arith.constant 1 : index
    %c0_11 = arith.constant 0 : index
    %c0_12 = arith.constant 0 : index
    %20 = vector.load %arg2[%c0_10, %c1, %c0_11, %c0_12] : memref<3x3x128x256xbf16, #tpu.memory_space<vmem>>, vector<1x1x128x256xbf16>
    %21 = vector.shape_cast %20 : vector<1x1x128x256xbf16> to vector<128x256xbf16>
    %cst_13 = arith.constant dense<0.000000e+00> : vector<256x256xf32>
    %22 = tpu.matmul %19, %21, %cst_13 {dimension_numbers = #tpu.dot_dimension_numbers<[1], [0], [0], [1], [0, 0, 1, 1], [], []>} : vector<256x128xbf16>, vector<128x256xbf16>, vector<256x256xf32> -> vector<256x256xf32>
    %23 = arith.addf %18, %22 : vector<256x256xf32>
    %c255_i32 = arith.constant 255 : i32
    %24 = tpu.dynamic_rotate %0 by %c255_i32 dim 0 : vector<256x128xf32>, i32 -> vector<256x128xf32>
    %cst_14 = arith.constant 0.000000e+00 : f32
    %25 = vector.broadcast %cst_14 : f32 to vector<256x128xf32>
    %26 = arith.select %7, %24, %25 : vector<256x128xi1>, vector<256x128xf32>
    %27 = arith.truncf %26 : vector<256x128xf32> to vector<256x128xbf16>
    %c0_15 = arith.constant 0 : index
    %c2 = arith.constant 2 : index
    %c0_16 = arith.constant 0 : index
    %c0_17 = arith.constant 0 : index
    %28 = vector.load %arg2[%c0_15, %c2, %c0_16, %c0_17] : memref<3x3x128x256xbf16, #tpu.memory_space<vmem>>, vector<1x1x128x256xbf16>
    %29 = vector.shape_cast %28 : vector<1x1x128x256xbf16> to vector<128x256xbf16>
    %cst_18 = arith.constant dense<0.000000e+00> : vector<256x256xf32>
    %30 = tpu.matmul %27, %29, %cst_18 {dimension_numbers = #tpu.dot_dimension_numbers<[1], [0], [0], [1], [0, 0, 1, 1], [], []>} : vector<256x128xbf16>, vector<128x256xbf16>, vector<256x256xf32> -> vector<256x256xf32>
    %31 = arith.addf %23, %30 : vector<256x256xf32>
    %32 = vector.extract_strided_slice %31 {offsets = [0, 0], sizes = [256, 128], strides = [1, 1]} : vector<256x256xf32> to vector<256x128xf32>
    %33 = vector.extract_strided_slice %31 {offsets = [0, 128], sizes = [256, 128], strides = [1, 1]} : vector<256x256xf32> to vector<256x128xf32>
    %34 = arith.negf %33 : vector<256x128xf32>
    %35 = math.exp %34 : vector<256x128xf32>
    %cst_19 = arith.constant 1.000000e+00 : f32
    %36 = vector.broadcast %cst_19 : f32 to vector<256x128xf32>
    %37 = arith.addf %36, %35 : vector<256x128xf32>
    %38 = arith.divf %36, %37 : vector<256x128xf32>
    %39 = arith.mulf %32, %38 : vector<256x128xf32>
    %40 = arith.addf %0, %39 : vector<256x128xf32>
    %c1_20 = arith.constant 1 : index
    %c0_21 = arith.constant 0 : index
    %c0_22 = arith.constant 0 : index
    %41 = vector.load %arg3[%c1_20, %c0_21, %c0_22] : memref<3x1x256xf32, #tpu.memory_space<vmem>>, vector<1x1x256xf32>
    %42 = vector.shape_cast %41 : vector<1x1x256xf32> to vector<1x256xf32>
    %c1_i32_23 = arith.constant 1 : i32
    %43 = tpu.dynamic_rotate %40 by %c1_i32_23 dim 0 : vector<256x128xf32>, i32 -> vector<256x128xf32>
    %cst_24 = arith.constant 0.000000e+00 : f32
    %44 = vector.broadcast %cst_24 : f32 to vector<256x128xf32>
    %45 = arith.select %5, %43, %44 : vector<256x128xi1>, vector<256x128xf32>
    %46 = arith.truncf %45 : vector<256x128xf32> to vector<256x128xbf16>
    %c1_25 = arith.constant 1 : index
    %c0_26 = arith.constant 0 : index
    %c0_27 = arith.constant 0 : index
    %c0_28 = arith.constant 0 : index
    %47 = vector.load %arg2[%c1_25, %c0_26, %c0_27, %c0_28] : memref<3x3x128x256xbf16, #tpu.memory_space<vmem>>, vector<1x1x128x256xbf16>
    %48 = vector.shape_cast %47 : vector<1x1x128x256xbf16> to vector<128x256xbf16>
    %cst_29 = arith.constant dense<0.000000e+00> : vector<256x256xf32>
    %49 = tpu.matmul %46, %48, %cst_29 {dimension_numbers = #tpu.dot_dimension_numbers<[1], [0], [0], [1], [0, 0, 1, 1], [], []>} : vector<256x128xbf16>, vector<128x256xbf16>, vector<256x256xf32> -> vector<256x256xf32>
    %50 = vector.broadcast %42 : vector<1x256xf32> to vector<256x256xf32>
    %51 = arith.addf %50, %49 : vector<256x256xf32>
    %52 = arith.truncf %40 : vector<256x128xf32> to vector<256x128xbf16>
    %c1_30 = arith.constant 1 : index
    %c1_31 = arith.constant 1 : index
    %c0_32 = arith.constant 0 : index
    %c0_33 = arith.constant 0 : index
    %53 = vector.load %arg2[%c1_30, %c1_31, %c0_32, %c0_33] : memref<3x3x128x256xbf16, #tpu.memory_space<vmem>>, vector<1x1x128x256xbf16>
    %54 = vector.shape_cast %53 : vector<1x1x128x256xbf16> to vector<128x256xbf16>
    %cst_34 = arith.constant dense<0.000000e+00> : vector<256x256xf32>
    %55 = tpu.matmul %52, %54, %cst_34 {dimension_numbers = #tpu.dot_dimension_numbers<[1], [0], [0], [1], [0, 0, 1, 1], [], []>} : vector<256x128xbf16>, vector<128x256xbf16>, vector<256x256xf32> -> vector<256x256xf32>
    %56 = arith.addf %51, %55 : vector<256x256xf32>
    %c255_i32_35 = arith.constant 255 : i32
    %57 = tpu.dynamic_rotate %40 by %c255_i32_35 dim 0 : vector<256x128xf32>, i32 -> vector<256x128xf32>
    %cst_36 = arith.constant 0.000000e+00 : f32
    %58 = vector.broadcast %cst_36 : f32 to vector<256x128xf32>
    %59 = arith.select %7, %57, %58 : vector<256x128xi1>, vector<256x128xf32>
    %60 = arith.truncf %59 : vector<256x128xf32> to vector<256x128xbf16>
    %c1_37 = arith.constant 1 : index
    %c2_38 = arith.constant 2 : index
    %c0_39 = arith.constant 0 : index
    %c0_40 = arith.constant 0 : index
    %61 = vector.load %arg2[%c1_37, %c2_38, %c0_39, %c0_40] : memref<3x3x128x256xbf16, #tpu.memory_space<vmem>>, vector<1x1x128x256xbf16>
    %62 = vector.shape_cast %61 : vector<1x1x128x256xbf16> to vector<128x256xbf16>
    %cst_41 = arith.constant dense<0.000000e+00> : vector<256x256xf32>
    %63 = tpu.matmul %60, %62, %cst_41 {dimension_numbers = #tpu.dot_dimension_numbers<[1], [0], [0], [1], [0, 0, 1, 1], [], []>} : vector<256x128xbf16>, vector<128x256xbf16>, vector<256x256xf32> -> vector<256x256xf32>
    %64 = arith.addf %56, %63 : vector<256x256xf32>
    %65 = vector.extract_strided_slice %64 {offsets = [0, 0], sizes = [256, 128], strides = [1, 1]} : vector<256x256xf32> to vector<256x128xf32>
    %66 = vector.extract_strided_slice %64 {offsets = [0, 128], sizes = [256, 128], strides = [1, 1]} : vector<256x256xf32> to vector<256x128xf32>
    %67 = arith.negf %66 : vector<256x128xf32>
    %68 = math.exp %67 : vector<256x128xf32>
    %cst_42 = arith.constant 1.000000e+00 : f32
    %69 = vector.broadcast %cst_42 : f32 to vector<256x128xf32>
    %70 = arith.addf %69, %68 : vector<256x128xf32>
    %71 = arith.divf %69, %70 : vector<256x128xf32>
    %72 = arith.mulf %65, %71 : vector<256x128xf32>
    %73 = arith.addf %40, %72 : vector<256x128xf32>
    %c2_43 = arith.constant 2 : index
    %c0_44 = arith.constant 0 : index
    %c0_45 = arith.constant 0 : index
    %74 = vector.load %arg3[%c2_43, %c0_44, %c0_45] : memref<3x1x256xf32, #tpu.memory_space<vmem>>, vector<1x1x256xf32>
    %75 = vector.shape_cast %74 : vector<1x1x256xf32> to vector<1x256xf32>
    %c1_i32_46 = arith.constant 1 : i32
    %76 = tpu.dynamic_rotate %73 by %c1_i32_46 dim 0 : vector<256x128xf32>, i32 -> vector<256x128xf32>
    %cst_47 = arith.constant 0.000000e+00 : f32
    %77 = vector.broadcast %cst_47 : f32 to vector<256x128xf32>
    %78 = arith.select %5, %76, %77 : vector<256x128xi1>, vector<256x128xf32>
    %79 = arith.truncf %78 : vector<256x128xf32> to vector<256x128xbf16>
    %c2_48 = arith.constant 2 : index
    %c0_49 = arith.constant 0 : index
    %c0_50 = arith.constant 0 : index
    %c0_51 = arith.constant 0 : index
    %80 = vector.load %arg2[%c2_48, %c0_49, %c0_50, %c0_51] : memref<3x3x128x256xbf16, #tpu.memory_space<vmem>>, vector<1x1x128x256xbf16>
    %81 = vector.shape_cast %80 : vector<1x1x128x256xbf16> to vector<128x256xbf16>
    %cst_52 = arith.constant dense<0.000000e+00> : vector<256x256xf32>
    %82 = tpu.matmul %79, %81, %cst_52 {dimension_numbers = #tpu.dot_dimension_numbers<[1], [0], [0], [1], [0, 0, 1, 1], [], []>} : vector<256x128xbf16>, vector<128x256xbf16>, vector<256x256xf32> -> vector<256x256xf32>
    %83 = vector.broadcast %75 : vector<1x256xf32> to vector<256x256xf32>
    %84 = arith.addf %83, %82 : vector<256x256xf32>
    %85 = arith.truncf %73 : vector<256x128xf32> to vector<256x128xbf16>
    %c2_53 = arith.constant 2 : index
    %c1_54 = arith.constant 1 : index
    %c0_55 = arith.constant 0 : index
    %c0_56 = arith.constant 0 : index
    %86 = vector.load %arg2[%c2_53, %c1_54, %c0_55, %c0_56] : memref<3x3x128x256xbf16, #tpu.memory_space<vmem>>, vector<1x1x128x256xbf16>
    %87 = vector.shape_cast %86 : vector<1x1x128x256xbf16> to vector<128x256xbf16>
    %cst_57 = arith.constant dense<0.000000e+00> : vector<256x256xf32>
    %88 = tpu.matmul %85, %87, %cst_57 {dimension_numbers = #tpu.dot_dimension_numbers<[1], [0], [0], [1], [0, 0, 1, 1], [], []>} : vector<256x128xbf16>, vector<128x256xbf16>, vector<256x256xf32> -> vector<256x256xf32>
    %89 = arith.addf %84, %88 : vector<256x256xf32>
    %c255_i32_58 = arith.constant 255 : i32
    %90 = tpu.dynamic_rotate %73 by %c255_i32_58 dim 0 : vector<256x128xf32>, i32 -> vector<256x128xf32>
    %cst_59 = arith.constant 0.000000e+00 : f32
    %91 = vector.broadcast %cst_59 : f32 to vector<256x128xf32>
    %92 = arith.select %7, %90, %91 : vector<256x128xi1>, vector<256x128xf32>
    %93 = arith.truncf %92 : vector<256x128xf32> to vector<256x128xbf16>
    %c2_60 = arith.constant 2 : index
    %c2_61 = arith.constant 2 : index
    %c0_62 = arith.constant 0 : index
    %c0_63 = arith.constant 0 : index
    %94 = vector.load %arg2[%c2_60, %c2_61, %c0_62, %c0_63] : memref<3x3x128x256xbf16, #tpu.memory_space<vmem>>, vector<1x1x128x256xbf16>
    %95 = vector.shape_cast %94 : vector<1x1x128x256xbf16> to vector<128x256xbf16>
    %cst_64 = arith.constant dense<0.000000e+00> : vector<256x256xf32>
    %96 = tpu.matmul %93, %95, %cst_64 {dimension_numbers = #tpu.dot_dimension_numbers<[1], [0], [0], [1], [0, 0, 1, 1], [], []>} : vector<256x128xbf16>, vector<128x256xbf16>, vector<256x256xf32> -> vector<256x256xf32>
    %97 = arith.addf %89, %96 : vector<256x256xf32>
    %98 = vector.extract_strided_slice %97 {offsets = [0, 0], sizes = [256, 128], strides = [1, 1]} : vector<256x256xf32> to vector<256x128xf32>
    %99 = vector.extract_strided_slice %97 {offsets = [0, 128], sizes = [256, 128], strides = [1, 1]} : vector<256x256xf32> to vector<256x128xf32>
    %100 = arith.negf %99 : vector<256x128xf32>
    %101 = math.exp %100 : vector<256x128xf32>
    %cst_65 = arith.constant 1.000000e+00 : f32
    %102 = vector.broadcast %cst_65 : f32 to vector<256x128xf32>
    %103 = arith.addf %102, %101 : vector<256x128xf32>
    %104 = arith.divf %102, %103 : vector<256x128xf32>
    %105 = arith.mulf %98, %104 : vector<256x128xf32>
    %106 = arith.addf %73, %105 : vector<256x128xf32>
    %c0_66 = arith.constant 0 : index
    %c0_67 = arith.constant 0 : index
    %107 = vector.load %arg4[%c0_66, %c0_67] : memref<256x128xf32, #tpu.memory_space<vmem>>, vector<256x128xf32>
    tpu.vector_store %arg4[%c0_66, %c0_67], %106 {strides = array<i32>} : memref<256x128xf32, #tpu.memory_space<vmem>>, vector<256x128xf32>,
    return
  }
  func.func @transform_0(%arg0: i32) -> (i32, i32) {
    %c0_i32 = arith.constant 0 : i32
    %c0_i32_0 = arith.constant 0 : i32
    return %arg0, %c0_i32 : i32, i32
  }
  func.func @transform_1(%arg0: i32) -> (i32, i32, i32, i32) {
    %c0_i32 = arith.constant 0 : i32
    %c0_i32_0 = arith.constant 0 : i32
    %c0_i32_1 = arith.constant 0 : i32
    %c0_i32_2 = arith.constant 0 : i32
    %c0_i32_3 = arith.constant 0 : i32
    return %c0_i32, %c0_i32_0, %c0_i32_1, %c0_i32_2 : i32, i32, i32, i32
  }
  func.func @transform_2(%arg0: i32) -> (i32, i32, i32) {
    %c0_i32 = arith.constant 0 : i32
    %c0_i32_0 = arith.constant 0 : i32
    %c0_i32_1 = arith.constant 0 : i32
    %c0_i32_2 = arith.constant 0 : i32
    return %c0_i32, %c0_i32_0, %c0_i32_1 : i32, i32, i32
  }
  func.func @transform_3(%arg0: i32) -> (i32, i32) {
    %c0_i32 = arith.constant 0 : i32
    %c0_i32_0 = arith.constant 0 : i32
    return %arg0, %c0_i32 : i32, i32
  }
}

</mosaic_0001>

<llo_original>
// kernel: stacked_residual_cnn.1
$region0: #{stacked_residual_cnn.1}
  #allocation0 [shape = 'u32[]', space=smem, size = 0x4, offset = 0x4, fixed_abs, tag = 'smem constant byte address 0x4 - core index']
  #allocation1 [shape = 'u32[144,128]{1,0:T(1,128)}', space=vmem, size = 0x12000, scoped, tag = 'internal scratch']
  %s0 = inlined_call_operand.vmem [shape: f32[256,128], index: 0, kind: input, shape index: {}, may-alias: {0,3}]
  %s1 = inlined_call_operand.vmem [shape: bf16[3,3,128,256], index: 1, kind: input, shape index: {}]
  %s2 = inlined_call_operand.vmem [shape: f32[3,1,256], index: 2, kind: input, shape index: {}]
  %s3 = inlined_call_operand.vmem [shape: f32[256,128], index: 3, kind: output, shape index: {}, may-alias: {0,3}]
  %s4 = sld [smem:[#allocation0]]
  $region22: #{stacked_residual_cnn.1} parent=0
    _
  %s6 = ssub.s32 1, %s4
  %s7 = scalar_select 0, %s6, %s4
  // Predicated region
  $region2: #{stacked_residual_cnn.1} parent=0 // pred_check
    _
  $region3: #{stacked_residual_cnn.1} parent=0 // pred_check_branch
    %9 = sbr.rel (0) target = $region5
  $region4: #{stacked_residual_cnn.1} parent=0 // pred_region
    _
  $region5: #{stacked_residual_cnn.1} parent=0 // pred_fallthru
    _
  // Predicated region
  $region6: #{stacked_residual_cnn.1} parent=0 // pred_check
    _
  $region7: #{stacked_residual_cnn.1} parent=0 // pred_check_branch
    %11 = sbr.rel (0) target = $region9
  $region8: #{stacked_residual_cnn.1} parent=0 // pred_region
    _
  $region9: #{stacked_residual_cnn.1} parent=0 // pred_fallthru
    _
  // Predicated region
  $region10: #{stacked_residual_cnn.1} parent=0 // pred_check
    _
  $region11: #{stacked_residual_cnn.1} parent=0 // pred_check_branch
    %13 = sbr.rel (0) target = $region13
  $region12: #{stacked_residual_cnn.1} parent=0 // pred_region
    _
  $region13: #{stacked_residual_cnn.1} parent=0 // pred_fallthru
    _
  %v15 = vld [vmem:[%s0] sm:$0xff]
  %v16 = vld [vmem:[%s0 + $0x8] sm:$0xff]
  %v17 = vld [vmem:[%s0 + $0x10] sm:$0xff]
  %v18 = vld [vmem:[%s0 + $0x18] sm:$0xff]
  %v19 = vld [vmem:[%s0 + $0x20] sm:$0xff]
  %v20 = vld [vmem:[%s0 + $0x28] sm:$0xff]
  %v21 = vld [vmem:[%s0 + $0x30] sm:$0xff]
  %v22 = vld [vmem:[%s0 + $0x38] sm:$0xff]
  %v23 = vld [vmem:[%s0 + $0x40] sm:$0xff]
  %v24 = vld [vmem:[%s0 + $0x48] sm:$0xff]
  %v25 = vld [vmem:[%s0 + $0x50] sm:$0xff]
  %v26 = vld [vmem:[%s0 + $0x58] sm:$0xff]
  %v27 = vld [vmem:[%s0 + $0x60] sm:$0xff]
  %v28 = vld [vmem:[%s0 + $0x68] sm:$0xff]
  %v29 = vld [vmem:[%s0 + $0x70] sm:$0xff]
  %v30 = vld [vmem:[%s0 + $0x78] sm:$0xff]
  %v31 = vld [vmem:[%s0 + $0x80] sm:$0xff]
  %v32 = vld [vmem:[%s0 + $0x88] sm:$0xff]
  %v33 = vld [vmem:[%s0 + $0x90] sm:$0xff]
  %v34 = vld [vmem:[%s0 + $0x98] sm:$0xff]
  %v35 = vld [vmem:[%s0 + $0xa0] sm:$0xff]
  %v36 = vld [vmem:[%s0 + $0xa8] sm:$0xff]
  %v37 = vld [vmem:[%s0 + $0xb0] sm:$0xff]
  %v38 = vld [vmem:[%s0 + $0xb8] sm:$0xff]
  %v39 = vld [vmem:[%s0 + $0xc0] sm:$0xff]
  %v40 = vld [vmem:[%s0 + $0xc8] sm:$0xff]
  %v41 = vld [vmem:[%s0 + $0xd0] sm:$0xff]
  %v42 = vld [vmem:[%s0 + $0xd8] sm:$0xff]
  %v43 = vld [vmem:[%s0 + $0xe0] sm:$0xff]
  %v44 = vld [vmem:[%s0 + $0xe8] sm:$0xff]
  %v45 = vld [vmem:[%s0 + $0xf0] sm:$0xff]
  %v46 = vld [vmem:[%s0 + $0xf8] sm:$0xff]
  %v47 = vlaneseq
  %v48 = vshrl.u32 %v47, 7
  %v49 = vadd.s32 %v48, 8
  %v50 = vadd.s32 %v48, 16
  %v51 = vadd.s32 %v48, 24
  %v52 = vadd.s32 %v48, 32
  %v53 = vadd.s32 %v48, 40
  %v54 = vadd.s32 %v48, 48
  %v55 = vadd.s32 %v48, 56
  %v56 = vadd.s32 %v48, 64
  %v57 = vadd.s32 %v48, 72
  %v58 = vadd.s32 %v48, 80
  %v59 = vadd.s32 %v48, 88
  %v60 = vadd.s32 %v48, 96
  %v61 = vadd.s32 %v48, 104
  %v62 = vadd.s32 %v48, 112
  %v63 = vadd.s32 %v48, 120
  %v64 = vadd.s32 %v48, 128
  %v65 = vadd.s32 %v48, 136
  %v66 = vadd.s32 %v48, 144
  %v67 = vadd.s32 %v48, 152
  %v68 = vadd.s32 %v48, 160
  %v69 = vadd.s32 %v48, 168
  %v70 = vadd.s32 %v48, 176
  %v71 = vadd.s32 %v48, 184
  %v72 = vadd.s32 %v48, 192
  %v73 = vadd.s32 %v48, 200
  %v74 = vadd.s32 %v48, 208
  %v75 = vadd.s32 %v48, 216
  %v76 = vadd.s32 %v48, 224
  %v77 = vadd.s32 %v48, 232
  %v78 = vadd.s32 %v48, 240
  %v79 = vadd.s32 %v48, 248
  %vm80 = vcmp.lt.s32.totalorder %v48, 0
  %v81 = vsub.s32 0, %v48
  %v82 = vsel %vm80, %v81, %v48
  %v83 = vshrl.u32 %v82, 6
  %v84 = vand.u32 %v82, 63
  %v85 = vsub.s32 0, %v84
  %v86 = vsel %vm80, %v85, %v84
  %vm87 = vcmp.lt.s32.totalorder %v49, 0
  %v88 = vsub.s32 0, %v49
  %v89 = vsel %vm87, %v88, %v49
  %v90 = vshrl.u32 %v89, 6
  %v91 = vand.u32 %v89, 63
  %v92 = vsub.s32 0, %v91
  %v93 = vsel %vm87, %v92, %v91
  %vm94 = vcmp.lt.s32.totalorder %v50, 0
  %v95 = vsub.s32 0, %v50
  %v96 = vsel %vm94, %v95, %v50
  %v97 = vshrl.u32 %v96, 6
  %v98 = vand.u32 %v96, 63
  %v99 = vsub.s32 0, %v98
  %v100 = vsel %vm94, %v99, %v98
  %vm101 = vcmp.lt.s32.totalorder %v51, 0
  %v102 = vsub.s32 0, %v51
  %v103 = vsel %vm101, %v102, %v51
  %v104 = vshrl.u32 %v103, 6
  %v105 = vand.u32 %v103, 63
  %v106 = vsub.s32 0, %v105
  %v107 = vsel %vm101, %v106, %v105
  %vm108 = vcmp.lt.s32.totalorder %v52, 0
  %v109 = vsub.s32 0, %v52
  %v110 = vsel %vm108, %v109, %v52
  %v111 = vshrl.u32 %v110, 6
  %v112 = vand.u32 %v110, 63
  %v113 = vsub.s32 0, %v112
  %v114 = vsel %vm108, %v113, %v112
  %vm115 = vcmp.lt.s32.totalorder %v53, 0
  %v116 = vsub.s32 0, %v53
  %v117 = vsel %vm115, %v116, %v53
  %v118 = vshrl.u32 %v117, 6
  %v119 = vand.u32 %v117, 63
  %v120 = vsub.s32 0, %v119
  %v121 = vsel %vm115, %v120, %v119
  %vm122 = vcmp.lt.s32.totalorder %v54, 0
  %v123 = vsub.s32 0, %v54
  %v124 = vsel %vm122, %v123, %v54
  %v125 = vshrl.u32 %v124, 6
  %v126 = vand.u32 %v124, 63
  %v127 = vsub.s32 0, %v126
  %v128 = vsel %vm122, %v127, %v126
  %vm129 = vcmp.lt.s32.totalorder %v55, 0
  %v130 = vsub.s32 0, %v55
  %v131 = vsel %vm129, %v130, %v55
  %v132 = vshrl.u32 %v131, 6
  %v133 = vand.u32 %v131, 63
  %v134 = vsub.s32 0, %v133
  %v135 = vsel %vm129, %v134, %v133
  %vm136 = vcmp.lt.s32.totalorder %v56, 0
  %v137 = vsub.s32 0, %v56
  %v138 = vsel %vm136, %v137, %v56
  %v139 = vshrl.u32 %v138, 6
  %v140 = vand.u32 %v138, 63
  %v141 = vsub.s32 0, %v140
  %v142 = vsel %vm136, %v141, %v140
  %vm143 = vcmp.lt.s32.totalorder %v57, 0
  %v144 = vsub.s32 0, %v57
  %v145 = vsel %vm143, %v144, %v57
  %v146 = vshrl.u32 %v145, 6
  %v147 = vand.u32 %v145, 63
  %v148 = vsub.s32 0, %v147
  %v149 = vsel %vm143, %v148, %v147
  %vm150 = vcmp.lt.s32.totalorder %v58, 0
  %v151 = vsub.s32 0, %v58
  %v152 = vsel %vm150, %v151, %v58
  %v153 = vshrl.u32 %v152, 6
  %v154 = vand.u32 %v152, 63
  %v155 = vsub.s32 0, %v154
  %v156 = vsel %vm150, %v155, %v154
  %vm157 = vcmp.lt.s32.totalorder %v59, 0
  %v158 = vsub.s32 0, %v59
  %v159 = vsel %vm157, %v158, %v59
  %v160 = vshrl.u32 %v159, 6
  %v161 = vand.u32 %v159, 63
  %v162 = vsub.s32 0, %v161
  %v163 = vsel %vm157, %v162, %v161
  %vm164 = vcmp.lt.s32.totalorder %v60, 0
  %v165 = vsub.s32 0, %v60
  %v166 = vsel %vm164, %v165, %v60
  %v167 = vshrl.u32 %v166, 6
  %v168 = vand.u32 %v166, 63
  %v169 = vsub.s32 0, %v168
  %v170 = vsel %vm164, %v169, %v168
  %vm171 = vcmp.lt.s32.totalorder %v61, 0
  %v172 = vsub.s32 0, %v61
  %v173 = vsel %vm171, %v172, %v61
  %v174 = vshrl.u32 %v173, 6
  %v175 = vand.u32 %v173, 63
  %v176 = vsub.s32 0, %v175
  %v177 = vsel %vm171, %v176, %v175
  %vm178 = vcmp.lt.s32.totalorder %v62, 0
  %v179 = vsub.s32 0, %v62
  %v180 = vsel %vm178, %v179, %v62
  %v181 = vshrl.u32 %v180, 6
  %v182 = vand.u32 %v180, 63
  %v183 = vsub.s32 0, %v182
  %v184 = vsel %vm178, %v183, %v182
  %vm185 = vcmp.lt.s32.totalorder %v63, 0
  %v186 = vsub.s32 0, %v63
  %v187 = vsel %vm185, %v186, %v63
  %v188 = vshrl.u32 %v187, 6
  %v189 = vand.u32 %v187, 63
  %v190 = vsub.s32 0, %v189
  %v191 = vsel %vm185, %v190, %v189
  %vm192 = vcmp.lt.s32.totalorder %v64, 0
  %v193 = vsub.s32 0, %v64
  %v194 = vsel %vm192, %v193, %v64
  %v195 = vshrl.u32 %v194, 6
  %v196 = vand.u32 %v194, 63
  %v197 = vsub.s32 0, %v196
  %v198 = vsel %vm192, %v197, %v196
  %vm199 = vcmp.lt.s32.totalorder %v65, 0
  %v200 = vsub.s32 0, %v65
  %v201 = vsel %vm199, %v200, %v65
  %v202 = vshrl.u32 %v201, 6
  %v203 = vand.u32 %v201, 63
  %v204 = vsub.s32 0, %v203
  %v205 = vsel %vm199, %v204, %v203
  %vm206 = vcmp.lt.s32.totalorder %v66, 0
  %v207 = vsub.s32 0, %v66
  %v208 = vsel %vm206, %v207, %v66
  %v209 = vshrl.u32 %v208, 6
  %v210 = vand.u32 %v208, 63
  %v211 = vsub.s32 0, %v210
  %v212 = vsel %vm206, %v211, %v210
  %vm213 = vcmp.lt.s32.totalorder %v67, 0
  %v214 = vsub.s32 0, %v67
  %v215 = vsel %vm213, %v214, %v67
  %v216 = vshrl.u32 %v215, 6
  %v217 = vand.u32 %v215, 63
  %v218 = vsub.s32 0, %v217
  %v219 = vsel %vm213, %v218, %v217
  %vm220 = vcmp.lt.s32.totalorder %v68, 0
  %v221 = vsub.s32 0, %v68
  %v222 = vsel %vm220, %v221, %v68
  %v223 = vshrl.u32 %v222, 6
  %v224 = vand.u32 %v222, 63
  %v225 = vsub.s32 0, %v224
  %v226 = vsel %vm220, %v225, %v224
  %vm227 = vcmp.lt.s32.totalorder %v69, 0
  %v228 = vsub.s32 0, %v69
  %v229 = vsel %vm227, %v228, %v69
  %v230 = vshrl.u32 %v229, 6
  %v231 = vand.u32 %v229, 63
  %v232 = vsub.s32 0, %v231
  %v233 = vsel %vm227, %v232, %v231
  %vm234 = vcmp.lt.s32.totalorder %v70, 0
  %v235 = vsub.s32 0, %v70
  %v236 = vsel %vm234, %v235, %v70
  %v237 = vshrl.u32 %v236, 6
  %v238 = vand.u32 %v236, 63
  %v239 = vsub.s32 0, %v238
  %v240 = vsel %vm234, %v239, %v238
  %vm241 = vcmp.lt.s32.totalorder %v71, 0
  %v242 = vsub.s32 0, %v71
  %v243 = vsel %vm241, %v242, %v71
  %v244 = vshrl.u32 %v243, 6
  %v245 = vand.u32 %v243, 63
  %v246 = vsub.s32 0, %v245
  %v247 = vsel %vm241, %v246, %v245
  %vm248 = vcmp.lt.s32.totalorder %v72, 0
  %v249 = vsub.s32 0, %v72
  %v250 = vsel %vm248, %v249, %v72
  %v251 = vshrl.u32 %v250, 6
  %v252 = vand.u32 %v250, 63
  %v253 = vsub.s32 0, %v252
  %v254 = vsel %vm248, %v253, %v252
  %vm255 = vcmp.lt.s32.totalorder %v73, 0
  %v256 = vsub.s32 0, %v73
  %v257 = vsel %vm255, %v256, %v73
  %v258 = vshrl.u32 %v257, 6
  %v259 = vand.u32 %v257, 63
  %v260 = vsub.s32 0, %v259
  %v261 = vsel %vm255, %v260, %v259
  %vm262 = vcmp.lt.s32.totalorder %v74, 0
  %v263 = vsub.s32 0, %v74
  %v264 = vsel %vm262, %v263, %v74
  %v265 = vshrl.u32 %v264, 6
  %v266 = vand.u32 %v264, 63
  %v267 = vsub.s32 0, %v266
  %v268 = vsel %vm262, %v267, %v266
  %vm269 = vcmp.lt.s32.totalorder %v75, 0
  %v270 = vsub.s32 0, %v75
  %v271 = vsel %vm269, %v270, %v75
  %v272 = vshrl.u32 %v271, 6
  %v273 = vand.u32 %v271, 63
  %v274 = vsub.s32 0, %v273
  %v275 = vsel %vm269, %v274, %v273
  %vm276 = vcmp.lt.s32.totalorder %v76, 0
  %v277 = vsub.s32 0, %v76
  %v278 = vsel %vm276, %v277, %v76
  %v279 = vshrl.u32 %v278, 6
  %v280 = vand.u32 %v278, 63
  %v281 = vsub.s32 0, %v280
  %v282 = vsel %vm276, %v281, %v280
  %vm283 = vcmp.lt.s32.totalorder %v77, 0
  %v284 = vsub.s32 0, %v77
  %v285 = vsel %vm283, %v284, %v77
  %v286 = vshrl.u32 %v285, 6
  %v287 = vand.u32 %v285, 63
  %v288 = vsub.s32 0, %v287
  %v289 = vsel %vm283, %v288, %v287
  %vm290 = vcmp.lt.s32.totalorder %v78, 0
  %v291 = vsub.s32 0, %v78
  %v292 = vsel %vm290, %v291, %v78
  %v293 = vshrl.u32 %v292, 6
  %v294 = vand.u32 %v292, 63
  %v295 = vsub.s32 0, %v294
  %v296 = vsel %vm290, %v295, %v294
  %vm297 = vcmp.lt.s32.totalorder %v79, 0
  %v298 = vsub.s32 0, %v79
  %v299 = vsel %vm297, %v298, %v79
  %v300 = vshrl.u32 %v299, 6
  %v301 = vand.u32 %v299, 63
  %v302 = vsub.s32 0, %v301
  %v303 = vsel %vm297, %v302, %v301
  %vm304 = vcmp.ge.s32.totalorder %v86, 1
  %vm305 = vcmp.ge.s32.totalorder %v93, 1
  %vm306 = vcmp.ge.s32.totalorder %v100, 1
  %vm307 = vcmp.ge.s32.totalorder %v107, 1
  %vm308 = vcmp.ge.s32.totalorder %v114, 1
  %vm309 = vcmp.ge.s32.totalorder %v121, 1
  %vm310 = vcmp.ge.s32.totalorder %v128, 1
  %vm311 = vcmp.ge.s32.totalorder %v135, 1
  %vm312 = vcmp.ge.s32.totalorder %v142, 1
  %vm313 = vcmp.ge.s32.totalorder %v149, 1
  %vm314 = vcmp.ge.s32.totalorder %v156, 1
  %vm315 = vcmp.ge.s32.totalorder %v163, 1
  %vm316 = vcmp.ge.s32.totalorder %v170, 1
  %vm317 = vcmp.ge.s32.totalorder %v177, 1
  %vm318 = vcmp.ge.s32.totalorder %v184, 1
  %vm319 = vcmp.ge.s32.totalorder %v191, 1
  %vm320 = vcmp.ge.s32.totalorder %v198, 1
  %vm321 = vcmp.ge.s32.totalorder %v205, 1
  %vm322 = vcmp.ge.s32.totalorder %v212, 1
  %vm323 = vcmp.ge.s32.totalorder %v219, 1
  %vm324 = vcmp.ge.s32.totalorder %v226, 1
  %vm325 = vcmp.ge.s32.totalorder %v233, 1
  %vm326 = vcmp.ge.s32.totalorder %v240, 1
  %vm327 = vcmp.ge.s32.totalorder %v247, 1
  %vm328 = vcmp.ge.s32.totalorder %v254, 1
  %vm329 = vcmp.ge.s32.totalorder %v261, 1
  %vm330 = vcmp.ge.s32.totalorder %v268, 1
  %vm331 = vcmp.ge.s32.totalorder %v275, 1
  %vm332 = vcmp.ge.s32.totalorder %v282, 1
  %vm333 = vcmp.ge.s32.totalorder %v289, 1
  %vm334 = vcmp.ge.s32.totalorder %v296, 1
  %vm335 = vcmp.ge.s32.totalorder %v303, 1
  %vm336 = vcmp.lt.s32.totalorder %v86, 63
  %vm337 = vcmp.lt.s32.totalorder %v93, 63
  %vm338 = vcmp.lt.s32.totalorder %v100, 63
  %vm339 = vcmp.lt.s32.totalorder %v107, 63
  %vm340 = vcmp.lt.s32.totalorder %v114, 63
  %vm341 = vcmp.lt.s32.totalorder %v121, 63
  %vm342 = vcmp.lt.s32.totalorder %v128, 63
  %vm343 = vcmp.lt.s32.totalorder %v135, 63
  %vm344 = vcmp.lt.s32.totalorder %v142, 63
  %vm345 = vcmp.lt.s32.totalorder %v149, 63
  %vm346 = vcmp.lt.s32.totalorder %v156, 63
  %vm347 = vcmp.lt.s32.totalorder %v163, 63
  %vm348 = vcmp.lt.s32.totalorder %v170, 63
  %vm349 = vcmp.lt.s32.totalorder %v177, 63
  %vm350 = vcmp.lt.s32.totalorder %v184, 63
  %vm351 = vcmp.lt.s32.totalorder %v191, 63
  %vm352 = vcmp.lt.s32.totalorder %v198, 63
  %vm353 = vcmp.lt.s32.totalorder %v205, 63
  %vm354 = vcmp.lt.s32.totalorder %v212, 63
  %vm355 = vcmp.lt.s32.totalorder %v219, 63
  %vm356 = vcmp.lt.s32.totalorder %v226, 63
  %vm357 = vcmp.lt.s32.totalorder %v233, 63
  %vm358 = vcmp.lt.s32.totalorder %v240, 63
  %vm359 = vcmp.lt.s32.totalorder %v247, 63
  %vm360 = vcmp.lt.s32.totalorder %v254, 63
  %vm361 = vcmp.lt.s32.totalorder %v261, 63
  %vm362 = vcmp.lt.s32.totalorder %v268, 63
  %vm363 = vcmp.lt.s32.totalorder %v275, 63
  %vm364 = vcmp.lt.s32.totalorder %v282, 63
  %vm365 = vcmp.lt.s32.totalorder %v289, 63
  %vm366 = vcmp.lt.s32.totalorder %v296, 63
  %vm367 = vcmp.lt.s32.totalorder %v303, 63
  %v368 = vld [vmem:[%s2] sm:$0x3]
  %v369 = vrot.slane %v15, 7
  %v370 = vrot.slane %v16, 7
  %v371 = vrot.slane %v17, 7
  %v372 = vrot.slane %v18, 7
  %v373 = vrot.slane %v19, 7
  %v374 = vrot.slane %v20, 7
  %v375 = vrot.slane %v21, 7
  %v376 = vrot.slane %v22, 7
  %v377 = vrot.slane %v23, 7
  %v378 = vrot.slane %v24, 7
  %v379 = vrot.slane %v25, 7
  %v380 = vrot.slane %v26, 7
  %v381 = vrot.slane %v27, 7
  %v382 = vrot.slane %v28, 7
  %v383 = vrot.slane %v29, 7
  %v384 = vrot.slane %v30, 7
  %v385 = vrot.slane %v31, 7
  %v386 = vrot.slane %v32, 7
  %v387 = vrot.slane %v33, 7
  %v388 = vrot.slane %v34, 7
  %v389 = vrot.slane %v35, 7
  %v390 = vrot.slane %v36, 7
  %v391 = vrot.slane %v37, 7
  %v392 = vrot.slane %v38, 7
  %v393 = vrot.slane %v39, 7
  %v394 = vrot.slane %v40, 7
  %v395 = vrot.slane %v41, 7
  %v396 = vrot.slane %v42, 7
  %v397 = vrot.slane %v43, 7
  %v398 = vrot.slane %v44, 7
  %v399 = vrot.slane %v45, 7
  %v400 = vrot.slane %v46, 7
  %vm401 = vcmp.lt.s32.totalorder %v48, 1
  %v402 = vsel %vm401, %v399, %v400
  %v403 = vsel %vm401, %v398, %v399
  %v404 = vsel %vm401, %v397, %v398
  %v405 = vsel %vm401, %v396, %v397
  %v406 = vsel %vm401, %v395, %v396
  %v407 = vsel %vm401, %v394, %v395
  %v408 = vsel %vm401, %v393, %v394
  %v409 = vsel %vm401, %v392, %v393
  %v410 = vsel %vm401, %v391, %v392
  %v411 = vsel %vm401, %v390, %v391
  %v412 = vsel %vm401, %v389, %v390
  %v413 = vsel %vm401, %v388, %v389
  %v414 = vsel %vm401, %v387, %v388
  %v415 = vsel %vm401, %v386, %v387
  %v416 = vsel %vm401, %v385, %v386
  %v417 = vsel %vm401, %v384, %v385
  %v418 = vsel %vm401, %v383, %v384
  %v419 = vsel %vm401, %v382, %v383
  %v420 = vsel %vm401, %v381, %v382
  %v421 = vsel %vm401, %v380, %v381
  %v422 = vsel %vm401, %v379, %v380
  %v423 = vsel %vm401, %v378, %v379
  %v424 = vsel %vm401, %v377, %v378
  %v425 = vsel %vm401, %v376, %v377
  %v426 = vsel %vm401, %v375, %v376
  %v427 = vsel %vm401, %v374, %v375
  %v428 = vsel %vm401, %v373, %v374
  %v429 = vsel %vm401, %v372, %v373
  %v430 = vsel %vm401, %v371, %v372
  %v431 = vsel %vm401, %v370, %v371
  %v432 = vsel %vm401, %v369, %v370
  %v433 = vsel %vm401, %v400, %v369
  %v434 = vsel %vm304, %v433, 0.0
  %v435 = vsel %vm305, %v432, 0.0
  %v436 = vsel %vm306, %v431, 0.0
  %v437 = vsel %vm307, %v430, 0.0
  %v438 = vsel %vm308, %v429, 0.0
  %v439 = vsel %vm309, %v428, 0.0
  %v440 = vsel %vm310, %v427, 0.0
  %v441 = vsel %vm311, %v426, 0.0
  %v442 = vsel %vm312, %v425, 0.0
  %v443 = vsel %vm313, %v424, 0.0
  %v444 = vsel %vm314, %v423, 0.0
  %v445 = vsel %vm315, %v422, 0.0
  %v446 = vsel %vm316, %v421, 0.0
  %v447 = vsel %vm317, %v420, 0.0
  %v448 = vsel %vm318, %v419, 0.0
  %v449 = vsel %vm319, %v418, 0.0
  %v450 = vsel %vm320, %v417, 0.0
  %v451 = vsel %vm321, %v416, 0.0
  %v452 = vsel %vm322, %v415, 0.0
  %v453 = vsel %vm323, %v414, 0.0
  %v454 = vsel %vm324, %v413, 0.0
  %v455 = vsel %vm325, %v412, 0.0
  %v456 = vsel %vm326, %v411, 0.0
  %v457 = vsel %vm327, %v410, 0.0
  %v458 = vsel %vm328, %v409, 0.0
  %v459 = vsel %vm329, %v408, 0.0
  %v460 = vsel %vm330, %v407, 0.0
  %v461 = vsel %vm331, %v406, 0.0
  %v462 = vsel %vm332, %v405, 0.0
  %v463 = vsel %vm333, %v404, 0.0
  %v464 = vsel %vm334, %v403, 0.0
  %v465 = vsel %vm335, %v402, 0.0
  %v466 = vpack.c.bf16 %v435, %v434
  %v467 = vpack.c.bf16 %v437, %v436
  %v468 = vpack.c.bf16 %v439, %v438
  %v469 = vpack.c.bf16 %v441, %v440
  %v470 = vpack.c.bf16 %v443, %v442
  %v471 = vpack.c.bf16 %v445, %v444
  %v472 = vpack.c.bf16 %v447, %v446
  %v473 = vpack.c.bf16 %v449, %v448
  %v474 = vpack.c.bf16 %v451, %v450
  %v475 = vpack.c.bf16 %v453, %v452
  %v476 = vpack.c.bf16 %v455, %v454
  %v477 = vpack.c.bf16 %v457, %v456
  %v478 = vpack.c.bf16 %v459, %v458
  %v479 = vpack.c.bf16 %v461, %v460
  %v480 = vpack.c.bf16 %v463, %v462
  %v481 = vpack.c.bf16 %v465, %v464
  %v482 = vld [vmem:[%s1] sm:$0xff]
  %v483 = vld [vmem:[%s1 + $0x8] sm:$0xff]
  %v484 = vld [vmem:[%s1 + $0x10] sm:$0xff]
  %v485 = vld [vmem:[%s1 + $0x18] sm:$0xff]
  %v486 = vld [vmem:[%s1 + $0x20] sm:$0xff]
  %v487 = vld [vmem:[%s1 + $0x28] sm:$0xff]
  %v488 = vld [vmem:[%s1 + $0x30] sm:$0xff]
  %v489 = vld [vmem:[%s1 + $0x38] sm:$0xff]
  %v490 = vld [vmem:[%s1 + $0x40] sm:$0xff]
  %v491 = vld [vmem:[%s1 + $0x48] sm:$0xff]
  %v492 = vld [vmem:[%s1 + $0x50] sm:$0xff]
  %v493 = vld [vmem:[%s1 + $0x58] sm:$0xff]
  %v494 = vld [vmem:[%s1 + $0x60] sm:$0xff]
  %v495 = vld [vmem:[%s1 + $0x68] sm:$0xff]
  %v496 = vld [vmem:[%s1 + $0x70] sm:$0xff]
  %v497 = vld [vmem:[%s1 + $0x78] sm:$0xff]
  %v514 = vunpack.c.l.b16 %v482
  %v515 = vunpack.c.h.b16 %v482
  %v516 = vunpack.c.l.b16 %v483
  %v517 = vunpack.c.h.b16 %v483
  %v518 = vunpack.c.l.b16 %v484
  %v519 = vunpack.c.h.b16 %v484
  %v520 = vunpack.c.l.b16 %v485
  %v521 = vunpack.c.h.b16 %v485
  %v522 = vunpack.c.l.b16 %v486
  %v523 = vunpack.c.h.b16 %v486
  %v524 = vunpack.c.l.b16 %v487
  %v525 = vunpack.c.h.b16 %v487
  %v526 = vunpack.c.l.b16 %v488
  %v527 = vunpack.c.h.b16 %v488
  %v528 = vunpack.c.l.b16 %v489
  %v529 = vunpack.c.h.b16 %v489
  %v530 = vunpack.c.l.b16 %v490
  %v531 = vunpack.c.h.b16 %v490
  %v532 = vunpack.c.l.b16 %v491
  %v533 = vunpack.c.h.b16 %v491
  %v534 = vunpack.c.l.b16 %v492
  %v535 = vunpack.c.h.b16 %v492
  %v536 = vunpack.c.l.b16 %v493
  %v537 = vunpack.c.h.b16 %v493
  %v538 = vunpack.c.l.b16 %v494
  %v539 = vunpack.c.h.b16 %v494
  %v540 = vunpack.c.l.b16 %v495
  %v541 = vunpack.c.h.b16 %v495
  %v542 = vunpack.c.l.b16 %v496
  %v543 = vunpack.c.h.b16 %v496
  %v544 = vunpack.c.l.b16 %v497
  %v545 = vunpack.c.h.b16 %v497
  %v546 = vpack.c.b16 %v516, %v514
  %v547 = vpack.c.b16 %v517, %v515
  %v548 = vpack.c.b16 %v520, %v518
  %v549 = vpack.c.b16 %v521, %v519
  %v550 = vpack.c.b16 %v524, %v522
  %v551 = vpack.c.b16 %v525, %v523
  %v552 = vpack.c.b16 %v528, %v526
  %v553 = vpack.c.b16 %v529, %v527
  %v554 = vpack.c.b16 %v532, %v530
  %v555 = vpack.c.b16 %v533, %v531
  %v556 = vpack.c.b16 %v536, %v534
  %v557 = vpack.c.b16 %v537, %v535
  %v558 = vpack.c.b16 %v540, %v538
  %v559 = vpack.c.b16 %v541, %v539
  %v560 = vpack.c.b16 %v544, %v542
  %v561 = vpack.c.b16 %v545, %v543
  %578 = vmatprep.subr.bf16.mxu0 %v561
  %579 = vmatpush1.bf16.msra.mxu0 %v560
  %580 = vmatprep.subr.bf16.mxu0 %v559
  %581 = vmatpush1.bf16.msra.mxu0 %v558
  %582 = vmatprep.subr.bf16.mxu0 %v557
  %583 = vmatpush1.bf16.msra.mxu0 %v556
  %584 = vmatprep.subr.bf16.mxu0 %v555
  %585 = vmatpush1.bf16.msra.mxu0 %v554
  %586 = vmatprep.subr.bf16.mxu0 %v553
  %587 = vmatpush1.bf16.msra.mxu0 %v552
  %588 = vmatprep.subr.bf16.mxu0 %v551
  %589 = vmatpush1.bf16.msra.mxu0 %v550
  %590 = vmatprep.subr.bf16.mxu0 %v549
  %591 = vmatpush1.bf16.msra.mxu0 %v548
  %592 = vmatprep.subr.bf16.mxu0 %v547
  %593 = vmatpush1.bf16.msra.mxu0 %v546
  %594 = vmatprep.subr.bf16.mxu0 0
  %595 = vmatpush2.bf16.msra.mxu0 0
  %596 = vmatprep.subr.bf16.mxu0 0
  %597 = vmatpush2.bf16.msra.mxu0 0
  %598 = vmatprep.subr.bf16.mxu0 0
  %599 = vmatpush2.bf16.msra.mxu0 0
  %600 = vmatprep.subr.bf16.mxu0 0
  %601 = vmatpush2.bf16.msra.mxu0 0
  %602 = vmatprep.subr.bf16.mxu0 0
  %603 = vmatpush2.bf16.msra.mxu0 0
  %604 = vmatprep.subr.bf16.mxu0 0
  %605 = vmatpush2.bf16.msra.mxu0 0
  %606 = vmatprep.subr.bf16.mxu0 0
  %607 = vmatpush2.bf16.msra.mxu0 0
  %608 = vmatprep.subr.bf16.mxu0 0
  %609 = vmatpush2.bf16.msra.mxu0 0
  %610 = vmatprep.mubr.bf16.mxu0 0
  %611 = vmatmul.mubr.bf16.gmra.mxu0 %v466
  %v612 = vpop.f32.mrf.mxu0
  %v613 = vadd.f32 0.0, %v612
  %v614 = vpop.f32.mrf.mxu0
  %v615 = vadd.f32 0.0, %v614
  %v616 = vpop.f32.mrf.mxu0
  %v617 = vadd.f32 0.0, %v616
  %v618 = vpop.f32.mrf.mxu0
  %v619 = vadd.f32 0.0, %v618
  %620 = vmatprep.mubr.bf16.mxu0 0
  %621 = vmatmul.mubr.bf16.gmra.mxu0 %v467
  %v622 = vpop.f32.mrf.mxu0
  %v623 = vadd.f32 0.0, %v622
  %v624 = vpop.f32.mrf.mxu0
  %v625 = vadd.f32 0.0, %v624
  %v626 = vpop.f32.mrf.mxu0
  %v627 = vadd.f32 0.0, %v626
  %v628 = vpop.f32.mrf.mxu0
  %v629 = vadd.f32 0.0, %v628
  %630 = vmatprep.mubr.bf16.mxu0 0
  %631 = vmatmul.mubr.bf16.gmra.mxu0 %v468
  %v632 = vpop.f32.mrf.mxu0
  %v633 = vadd.f32 0.0, %v632
  %v634 = vpop.f32.mrf.mxu0
  %v635 = vadd.f32 0.0, %v634
  %v636 = vpop.f32.mrf.mxu0
  %v637 = vadd.f32 0.0, %v636
  %v638 = vpop.f32.mrf.mxu0
  %v639 = vadd.f32 0.0, %v638
  %640 = vmatprep.mubr.bf16.mxu0 0
  %641 = vmatmul.mubr.bf16.gmra.mxu0 %v469
  %v642 = vpop.f32.mrf.mxu0
  %v643 = vadd.f32 0.0, %v642
  %v644 = vpop.f32.mrf.mxu0
  %v645 = vadd.f32 0.0, %v644
  %v646 = vpop.f32.mrf.mxu0
  %v647 = vadd.f32 0.0, %v646
  %v648 = vpop.f32.mrf.mxu0
  %v649 = vadd.f32 0.0, %v648
  %650 = vmatprep.mubr.bf16.mxu0 0
  %651 = vmatmul.mubr.bf16.gmra.mxu0 %v470
  %v652 = vpop.f32.mrf.mxu0
  %v653 = vadd.f32 0.0, %v652
  %v654 = vpop.f32.mrf.mxu0
  %v655 = vadd.f32 0.0, %v654
  %v656 = vpop.f32.mrf.mxu0
  %v657 = vadd.f32 0.0, %v656
  %v658 = vpop.f32.mrf.mxu0
  %v659 = vadd.f32 0.0, %v658
  %660 = vmatprep.mubr.bf16.mxu0 0
  %661 = vmatmul.mubr.bf16.gmra.mxu0 %v471
  %v662 = vpop.f32.mrf.mxu0
  %v663 = vadd.f32 0.0, %v662
  %v664 = vpop.f32.mrf.mxu0
  %v665 = vadd.f32 0.0, %v664
  %v666 = vpop.f32.mrf.mxu0
  %v667 = vadd.f32 0.0, %v666
  %v668 = vpop.f32.mrf.mxu0
  %v669 = vadd.f32 0.0, %v668
  %670 = vmatprep.mubr.bf16.mxu0 0
  %671 = vmatmul.mubr.bf16.gmra.mxu0 %v472
  %v672 = vpop.f32.mrf.mxu0
  %v673 = vadd.f32 0.0, %v672
  %v674 = vpop.f32.mrf.mxu0
  %v675 = vadd.f32 0.0, %v674
  %v676 = vpop.f32.mrf.mxu0
  %v677 = vadd.f32 0.0, %v676
  %v678 = vpop.f32.mrf.mxu0
  %v679 = vadd.f32 0.0, %v678
  %680 = vmatprep.mubr.bf16.mxu0 0
  %681 = vmatmul.mubr.bf16.gmra.mxu0 %v473
  %v682 = vpop.f32.mrf.mxu0
  %v683 = vadd.f32 0.0, %v682
  %v684 = vpop.f32.mrf.mxu0
  %v685 = vadd.f32 0.0, %v684
  %v686 = vpop.f32.mrf.mxu0
  %v687 = vadd.f32 0.0, %v686
  %v688 = vpop.f32.mrf.mxu0
  %v689 = vadd.f32 0.0, %v688
  %690 = vmatprep.mubr.bf16.mxu0 0
  %691 = vmatmul.mubr.bf16.gmra.mxu0 %v474
  %v692 = vpop.f32.mrf.mxu0
  %v693 = vadd.f32 0.0, %v692
  %v694 = vpop.f32.mrf.mxu0
  %v695 = vadd.f32 0.0, %v694
  %v696 = vpop.f32.mrf.mxu0
  %v697 = vadd.f32 0.0, %v696
  %v698 = vpop.f32.mrf.mxu0
  %v699 = vadd.f32 0.0, %v698
  %700 = vmatprep.mubr.bf16.mxu0 0
  %701 = vmatmul.mubr.bf16.gmra.mxu0 %v475
  %v702 = vpop.f32.mrf.mxu0
  %v703 = vadd.f32 0.0, %v702
  %v704 = vpop.f32.mrf.mxu0
  %v705 = vadd.f32 0.0, %v704
  %v706 = vpop.f32.mrf.mxu0
  %v707 = vadd.f32 0.0, %v706
  %v708 = vpop.f32.mrf.mxu0
  %v709 = vadd.f32 0.0, %v708
  %710 = vmatprep.mubr.bf16.mxu0 0
  %711 = vmatmul.mubr.bf16.gmra.mxu0 %v476
  %v712 = vpop.f32.mrf.mxu0
  %v713 = vadd.f32 0.0, %v712
  %v714 = vpop.f32.mrf.mxu0
  %v715 = vadd.f32 0.0, %v714
  %v716 = vpop.f32.mrf.mxu0
  %v717 = vadd.f32 0.0, %v716
  %v718 = vpop.f32.mrf.mxu0
  %v719 = vadd.f32 0.0, %v718
  %720 = vmatprep.mubr.bf16.mxu0 0
  %721 = vmatmul.mubr.bf16.gmra.mxu0 %v477
  %v722 = vpop.f32.mrf.mxu0
  %v723 = vadd.f32 0.0, %v722
  %v724 = vpop.f32.mrf.mxu0
  %v725 = vadd.f32 0.0, %v724
  %v726 = vpop.f32.mrf.mxu0
  %v727 = vadd.f32 0.0, %v726
  %v728 = vpop.f32.mrf.mxu0
  %v729 = vadd.f32 0.0, %v728
  %730 = vmatprep.mubr.bf16.mxu0 0
  %731 = vmatmul.mubr.bf16.gmra.mxu0 %v478
  %v732 = vpop.f32.mrf.mxu0
  %v733 = vadd.f32 0.0, %v732
  %v734 = vpop.f32.mrf.mxu0
  %v735 = vadd.f32 0.0, %v734
  %v736 = vpop.f32.mrf.mxu0
  %v737 = vadd.f32 0.0, %v736
  %v738 = vpop.f32.mrf.mxu0
  %v739 = vadd.f32 0.0, %v738
  %740 = vmatprep.mubr.bf16.mxu0 0
  %741 = vmatmul.mubr.bf16.gmra.mxu0 %v479
  %v742 = vpop.f32.mrf.mxu0
  %v743 = vadd.f32 0.0, %v742
  %v744 = vpop.f32.mrf.mxu0
  %v745 = vadd.f32 0.0, %v744
  %v746 = vpop.f32.mrf.mxu0
  %v747 = vadd.f32 0.0, %v746
  %v748 = vpop.f32.mrf.mxu0
  %v749 = vadd.f32 0.0, %v748
  %750 = vmatprep.mubr.bf16.mxu0 0
  %751 = vmatmul.mubr.bf16.gmra.mxu0 %v480
  %v752 = vpop.f32.mrf.mxu0
  %v753 = vadd.f32 0.0, %v752
  %v754 = vpop.f32.mrf.mxu0
  %v755 = vadd.f32 0.0, %v754
  %v756 = vpop.f32.mrf.mxu0
  %v757 = vadd.f32 0.0, %v756
  %v758 = vpop.f32.mrf.mxu0
  %v759 = vadd.f32 0.0, %v758
  %760 = vmatprep.mubr.bf16.mxu0 0
  %761 = vmatmul.mubr.bf16.gmra.mxu0 %v481
  %v762 = vpop.f32.mrf.mxu0
  %v763 = vadd.f32 0.0, %v762
  %v764 = vpop.f32.mrf.mxu0
  %v765 = vadd.f32 0.0, %v764
  %v766 = vpop.f32.mrf.mxu0
  %v767 = vadd.f32 0.0, %v766
  %v768 = vpop.f32.mrf.mxu0
  %v769 = vadd.f32 0.0, %v768
  %770 = vdwg.mxu0
  %v772 = vlaneseq
  %v773 = vshrl.u32 %v772, 7
  %v774 = vsub.s32 0, %v773
  %v775 = vrot.slane %v368, %v774
  %v776 = vlaneseq
  %v777 = vshrl.u32 %v776, 7
  %v778 = vsub.s32 1, %v777
  %v779 = vrot.slane %v368, %v778
  %v782 = vadd.f32 %v775, %v613
  %v783 = vadd.f32 %v779, %v615
  %v784 = vadd.f32 %v775, %v617
  %v785 = vadd.f32 %v779, %v619
  %v786 = vadd.f32 %v775, %v623
  %v787 = vadd.f32 %v779, %v625
  %v788 = vadd.f32 %v775, %v627
  %v789 = vadd.f32 %v779, %v629
  %v790 = vadd.f32 %v775, %v633
  %v791 = vadd.f32 %v779, %v635
  %v792 = vadd.f32 %v775, %v637
  %v793 = vadd.f32 %v779, %v639
  %v794 = vadd.f32 %v775, %v643
  %v795 = vadd.f32 %v779, %v645
  %v796 = vadd.f32 %v775, %v647
  %v797 = vadd.f32 %v779, %v649
  %v798 = vadd.f32 %v775, %v653
  %v799 = vadd.f32 %v779, %v655
  %v800 = vadd.f32 %v775, %v657
  %v801 = vadd.f32 %v779, %v659
  %v802 = vadd.f32 %v775, %v663
  %v803 = vadd.f32 %v779, %v665
  %v804 = vadd.f32 %v775, %v667
  %v805 = vadd.f32 %v779, %v669
  %v806 = vadd.f32 %v775, %v673
  %v807 = vadd.f32 %v779, %v675
  %v808 = vadd.f32 %v775, %v677
  %v809 = vadd.f32 %v779, %v679
  %v810 = vadd.f32 %v775, %v683
  %v811 = vadd.f32 %v779, %v685
  %v812 = vadd.f32 %v775, %v687
  %v813 = vadd.f32 %v779, %v689
  %v814 = vadd.f32 %v775, %v693
  %v815 = vadd.f32 %v779, %v695
  %v816 = vadd.f32 %v775, %v697
  %v817 = vadd.f32 %v779, %v699
  %v818 = vadd.f32 %v775, %v703
  %v819 = vadd.f32 %v779, %v705
  %v820 = vadd.f32 %v775, %v707
  %v821 = vadd.f32 %v779, %v709
  %v822 = vadd.f32 %v775, %v713
  %v823 = vadd.f32 %v779, %v715
  %v824 = vadd.f32 %v775, %v717
  %v825 = vadd.f32 %v779, %v719
  %v826 = vadd.f32 %v775, %v723
  %v827 = vadd.f32 %v779, %v725
  %v828 = vadd.f32 %v775, %v727
  %v829 = vadd.f32 %v779, %v729
  %v830 = vadd.f32 %v775, %v733
  %v831 = vadd.f32 %v779, %v735
  %v832 = vadd.f32 %v775, %v737
  %v833 = vadd.f32 %v779, %v739
  %v834 = vadd.f32 %v775, %v743
  %v835 = vadd.f32 %v779, %v745
  %v836 = vadd.f32 %v775, %v747
  %v837 = vadd.f32 %v779, %v749
  %v838 = vadd.f32 %v775, %v753
  %v839 = vadd.f32 %v779, %v755
  %v840 = vadd.f32 %v775, %v757
  %v841 = vadd.f32 %v779, %v759
  %v842 = vadd.f32 %v775, %v763
  %v843 = vadd.f32 %v779, %v765
  %v844 = vadd.f32 %v775, %v767
  %v845 = vadd.f32 %v779, %v769
  %v846 = vpack.c.bf16 %v16, %v15
  %v847 = vpack.c.bf16 %v18, %v17
  %v848 = vpack.c.bf16 %v20, %v19
  %v849 = vpack.c.bf16 %v22, %v21
  %v850 = vpack.c.bf16 %v24, %v23
  %v851 = vpack.c.bf16 %v26, %v25
  %v852 = vpack.c.bf16 %v28, %v27
  %v853 = vpack.c.bf16 %v30, %v29
  %v854 = vpack.c.bf16 %v32, %v31
  %v855 = vpack.c.bf16 %v34, %v33
  %v856 = vpack.c.bf16 %v36, %v35
  %v857 = vpack.c.bf16 %v38, %v37
  %v858 = vpack.c.bf16 %v40, %v39
  %v859 = vpack.c.bf16 %v42, %v41
  %v860 = vpack.c.bf16 %v44, %v43
  %v861 = vpack.c.bf16 %v46, %v45
  %s862 = scalar_lea.vmem %s1, 128
  %v863 = vld [vmem:[%s862] sm:$0xff]
  %v864 = vld [vmem:[%s862 + $0x8] sm:$0xff]
  %v865 = vld [vmem:[%s862 + $0x10] sm:$0xff]
  %v866 = vld [vmem:[%s862 + $0x18] sm:$0xff]
  %v867 = vld [vmem:[%s862 + $0x20] sm:$0xff]
  %v868 = vld [vmem:[%s862 + $0x28] sm:$0xff]
  %v869 = vld [vmem:[%s862 + $0x30] sm:$0xff]
  %v870 = vld [vmem:[%s862 + $0x38] sm:$0xff]
  %v871 = vld [vmem:[%s862 + $0x40] sm:$0xff]
  %v872 = vld [vmem:[%s862 + $0x48] sm:$0xff]
  %v873 = vld [vmem:[%s862 + $0x50] sm:$0xff]
  %v874 = vld [vmem:[%s862 + $0x58] sm:$0xff]
  %v875 = vld [vmem:[%s862 + $0x60] sm:$0xff]
  %v876 = vld [vmem:[%s862 + $0x68] sm:$0xff]
  %v877 = vld [vmem:[%s862 + $0x70] sm:$0xff]
  %v878 = vld [vmem:[%s862 + $0x78] sm:$0xff]
  %v895 = vunpack.c.l.b16 %v863
  %v896 = vunpack.c.h.b16 %v863
  %v897 = vunpack.c.l.b16 %v864
  %v898 = vunpack.c.h.b16 %v864
  %v899 = vunpack.c.l.b16 %v865
  %v900 = vunpack.c.h.b16 %v865
  %v901 = vunpack.c.l.b16 %v866
  %v902 = vunpack.c.h.b16 %v866
  %v903 = vunpack.c.l.b16 %v867
  %v904 = vunpack.c.h.b16 %v867
  %v905 = vunpack.c.l.b16 %v868
  %v906 = vunpack.c.h.b16 %v868
  %v907 = vunpack.c.l.b16 %v869
  %v908 = vunpack.c.h.b16 %v869
  %v909 = vunpack.c.l.b16 %v870
  %v910 = vunpack.c.h.b16 %v870
  %v911 = vunpack.c.l.b16 %v871
  %v912 = vunpack.c.h.b16 %v871
  %v913 = vunpack.c.l.b16 %v872
  %v914 = vunpack.c.h.b16 %v872
  %v915 = vunpack.c.l.b16 %v873
  %v916 = vunpack.c.h.b16 %v873
  %v917 = vunpack.c.l.b16 %v874
  %v918 = vunpack.c.h.b16 %v874
  %v919 = vunpack.c.l.b16 %v875
  %v920 = vunpack.c.h.b16 %v875
  %v921 = vunpack.c.l.b16 %v876
  %v922 = vunpack.c.h.b16 %v876
  %v923 = vunpack.c.l.b16 %v877
  %v924 = vunpack.c.h.b16 %v877
  %v925 = vunpack.c.l.b16 %v878
  %v926 = vunpack.c.h.b16 %v878
  %v927 = vpack.c.b16 %v897, %v895
  %v928 = vpack.c.b16 %v898, %v896
  %v929 = vpack.c.b16 %v901, %v899
  %v930 = vpack.c.b16 %v902, %v900
  %v931 = vpack.c.b16 %v905, %v903
  %v932 = vpack.c.b16 %v906, %v904
  %v933 = vpack.c.b16 %v909, %v907
  %v934 = vpack.c.b16 %v910, %v908
  %v935 = vpack.c.b16 %v913, %v911
  %v936 = vpack.c.b16 %v914, %v912
  %v937 = vpack.c.b16 %v917, %v915
  %v938 = vpack.c.b16 %v918, %v916
  %v939 = vpack.c.b16 %v921, %v919
  %v940 = vpack.c.b16 %v922, %v920
  %v941 = vpack.c.b16 %v925, %v923
  %v942 = vpack.c.b16 %v926, %v924
  %959 = vmatprep.subr.bf16.mxu0 %v942
  %960 = vmatpush1.bf16.msra.mxu0 %v941
  %961 = vmatprep.subr.bf16.mxu0 %v940
  %962 = vmatpush1.bf16.msra.mxu0 %v939
  %963 = vmatprep.subr.bf16.mxu0 %v938
  %964 = vmatpush1.bf16.msra.mxu0 %v937
  %965 = vmatprep.subr.bf16.mxu0 %v936
  %966 = vmatpush1.bf16.msra.mxu0 %v935
  %967 = vmatprep.subr.bf16.mxu0 %v934
  %968 = vmatpush1.bf16.msra.mxu0 %v933
  %969 = vmatprep.subr.bf16.mxu0 %v932
  %970 = vmatpush1.bf16.msra.mxu0 %v931
  %971 = vmatprep.subr.bf16.mxu0 %v930
  %972 = vmatpush1.bf16.msra.mxu0 %v929
  %973 = vmatprep.subr.bf16.mxu0 %v928
  %974 = vmatpush1.bf16.msra.mxu0 %v927
  %975 = vmatprep.subr.bf16.mxu0 0
  %976 = vmatpush2.bf16.msra.mxu0 0
  %977 = vmatprep.subr.bf16.mxu0 0
  %978 = vmatpush2.bf16.msra.mxu0 0
  %979 = vmatprep.subr.bf16.mxu0 0
  %980 = vmatpush2.bf16.msra.mxu0 0
  %981 = vmatprep.subr.bf16.mxu0 0
  %982 = vmatpush2.bf16.msra.mxu0 0
  %983 = vmatprep.subr.bf16.mxu0 0
  %984 = vmatpush2.bf16.msra.mxu0 0
  %985 = vmatprep.subr.bf16.mxu0 0
  %986 = vmatpush2.bf16.msra.mxu0 0
  %987 = vmatprep.subr.bf16.mxu0 0
  %988 = vmatpush2.bf16.msra.mxu0 0
  %989 = vmatprep.subr.bf16.mxu0 0
  %990 = vmatpush2.bf16.msra.mxu0 0
  %991 = vmatprep.mubr.bf16.mxu0 0
  %992 = vmatmul.mubr.bf16.gmra.mxu0 %v846
  %v993 = vpop.f32.mrf.mxu0
  %v994 = vadd.f32 0.0, %v993
  %v995 = vpop.f32.mrf.mxu0
  %v996 = vadd.f32 0.0, %v995
  %v997 = vpop.f32.mrf.mxu0
  %v998 = vadd.f32 0.0, %v997
  %v999 = vpop.f32.mrf.mxu0
  %v1000 = vadd.f32 0.0, %v999
  %1001 = vmatprep.mubr.bf16.mxu0 0
  %1002 = vmatmul.mubr.bf16.gmra.mxu0 %v847
  %v1003 = vpop.f32.mrf.mxu0
  %v1004 = vadd.f32 0.0, %v1003
  %v1005 = vpop.f32.mrf.mxu0
  %v1006 = vadd.f32 0.0, %v1005
  %v1007 = vpop.f32.mrf.mxu0
  %v1008 = vadd.f32 0.0, %v1007
  %v1009 = vpop.f32.mrf.mxu0
  %v1010 = vadd.f32 0.0, %v1009
  %1011 = vmatprep.mubr.bf16.mxu0 0
  %1012 = vmatmul.mubr.bf16.gmra.mxu0 %v848
  %v1013 = vpop.f32.mrf.mxu0
  %v1014 = vadd.f32 0.0, %v1013
  %v1015 = vpop.f32.mrf.mxu0
  %v1016 = vadd.f32 0.0, %v1015
  %v1017 = vpop.f32.mrf.mxu0
  %v1018 = vadd.f32 0.0, %v1017
  %v1019 = vpop.f32.mrf.mxu0
  %v1020 = vadd.f32 0.0, %v1019
  %1021 = vmatprep.mubr.bf16.mxu0 0
  %1022 = vmatmul.mubr.bf16.gmra.mxu0 %v849
  %v1023 = vpop.f32.mrf.mxu0
  %v1024 = vadd.f32 0.0, %v1023
  %v1025 = vpop.f32.mrf.mxu0
  %v1026 = vadd.f32 0.0, %v1025
  %v1027 = vpop.f32.mrf.mxu0
  %v1028 = vadd.f32 0.0, %v1027
  %v1029 = vpop.f32.mrf.mxu0
  %v1030 = vadd.f32 0.0, %v1029
  %1031 = vmatprep.mubr.bf16.mxu0 0
  %1032 = vmatmul.mubr.bf16.gmra.mxu0 %v850
  %v1033 = vpop.f32.mrf.mxu0
  %v1034 = vadd.f32 0.0, %v1033
  %v1035 = vpop.f32.mrf.mxu0
  %v1036 = vadd.f32 0.0, %v1035
  %v1037 = vpop.f32.mrf.mxu0
  %v1038 = vadd.f32 0.0, %v1037
  %v1039 = vpop.f32.mrf.mxu0
  %v1040 = vadd.f32 0.0, %v1039
  %1041 = vmatprep.mubr.bf16.mxu0 0
  %1042 = vmatmul.mubr.bf16.gmra.mxu0 %v851
  %v1043 = vpop.f32.mrf.mxu0
  %v1044 = vadd.f32 0.0, %v1043
  %v1045 = vpop.f32.mrf.mxu0
  %v1046 = vadd.f32 0.0, %v1045
  %v1047 = vpop.f32.mrf.mxu0
  %v1048 = vadd.f32 0.0, %v1047
  %v1049 = vpop.f32.mrf.mxu0
  %v1050 = vadd.f32 0.0, %v1049
  %1051 = vmatprep.mubr.bf16.mxu0 0
  %1052 = vmatmul.mubr.bf16.gmra.mxu0 %v852
  %v1053 = vpop.f32.mrf.mxu0
  %v1054 = vadd.f32 0.0, %v1053
  %v1055 = vpop.f32.mrf.mxu0
  %v1056 = vadd.f32 0.0, %v1055
  %v1057 = vpop.f32.mrf.mxu0
  %v1058 = vadd.f32 0.0, %v1057
  %v1059 = vpop.f32.mrf.mxu0
  %v1060 = vadd.f32 0.0, %v1059
  %1061 = vmatprep.mubr.bf16.mxu0 0
  %1062 = vmatmul.mubr.bf16.gmra.mxu0 %v853
  %v1063 = vpop.f32.mrf.mxu0
  %v1064 = vadd.f32 0.0, %v1063
  %v1065 = vpop.f32.mrf.mxu0
  %v1066 = vadd.f32 0.0, %v1065
  %v1067 = vpop.f32.mrf.mxu0
  %v1068 = vadd.f32 0.0, %v1067
  %v1069 = vpop.f32.mrf.mxu0
  %v1070 = vadd.f32 0.0, %v1069
  %1071 = vmatprep.mubr.bf16.mxu0 0
  %1072 = vmatmul.mubr.bf16.gmra.mxu0 %v854
  %v1073 = vpop.f32.mrf.mxu0
  %v1074 = vadd.f32 0.0, %v1073
  %v1075 = vpop.f32.mrf.mxu0
  %v1076 = vadd.f32 0.0, %v1075
  %v1077 = vpop.f32.mrf.mxu0
  %v1078 = vadd.f32 0.0, %v1077
  %v1079 = vpop.f32.mrf.mxu0
  %v1080 = vadd.f32 0.0, %v1079
  %1081 = vmatprep.mubr.bf16.mxu0 0
  %1082 = vmatmul.mubr.bf16.gmra.mxu0 %v855
  %v1083 = vpop.f32.mrf.mxu0
  %v1084 = vadd.f32 0.0, %v1083
  %v1085 = vpop.f32.mrf.mxu0
  %v1086 = vadd.f32 0.0, %v1085
  %v1087 = vpop.f32.mrf.mxu0
  %v1088 = vadd.f32 0.0, %v1087
  %v1089 = vpop.f32.mrf.mxu0
  %v1090 = vadd.f32 0.0, %v1089
  %1091 = vmatprep.mubr.bf16.mxu0 0
  %1092 = vmatmul.mubr.bf16.gmra.mxu0 %v856
  %v1093 = vpop.f32.mrf.mxu0
  %v1094 = vadd.f32 0.0, %v1093
  %v1095 = vpop.f32.mrf.mxu0
  %v1096 = vadd.f32 0.0, %v1095
  %v1097 = vpop.f32.mrf.mxu0
  %v1098 = vadd.f32 0.0, %v1097
  %v1099 = vpop.f32.mrf.mxu0
  %v1100 = vadd.f32 0.0, %v1099
  %1101 = vmatprep.mubr.bf16.mxu0 0
  %1102 = vmatmul.mubr.bf16.gmra.mxu0 %v857
  %v1103 = vpop.f32.mrf.mxu0
  %v1104 = vadd.f32 0.0, %v1103
  %v1105 = vpop.f32.mrf.mxu0
  %v1106 = vadd.f32 0.0, %v1105
  %v1107 = vpop.f32.mrf.mxu0
  %v1108 = vadd.f32 0.0, %v1107
  %v1109 = vpop.f32.mrf.mxu0
  %v1110 = vadd.f32 0.0, %v1109
  %1111 = vmatprep.mubr.bf16.mxu0 0
  %1112 = vmatmul.mubr.bf16.gmra.mxu0 %v858
  %v1113 = vpop.f32.mrf.mxu0
  %v1114 = vadd.f32 0.0, %v1113
  %v1115 = vpop.f32.mrf.mxu0
  %v1116 = vadd.f32 0.0, %v1115
  %v1117 = vpop.f32.mrf.mxu0
  %v1118 = vadd.f32 0.0, %v1117
  %v1119 = vpop.f32.mrf.mxu0
  %v1120 = vadd.f32 0.0, %v1119
  %1121 = vmatprep.mubr.bf16.mxu0 0
  %1122 = vmatmul.mubr.bf16.gmra.mxu0 %v859
  %v1123 = vpop.f32.mrf.mxu0
  %v1124 = vadd.f32 0.0, %v1123
  %v1125 = vpop.f32.mrf.mxu0
  %v1126 = vadd.f32 0.0, %v1125
  %v1127 = vpop.f32.mrf.mxu0
  %v1128 = vadd.f32 0.0, %v1127
  %v1129 = vpop.f32.mrf.mxu0
  %v1130 = vadd.f32 0.0, %v1129
  %1131 = vmatprep.mubr.bf16.mxu0 0
  %1132 = vmatmul.mubr.bf16.gmra.mxu0 %v860
  %v1133 = vpop.f32.mrf.mxu0
  %v1134 = vadd.f32 0.0, %v1133
  %v1135 = vpop.f32.mrf.mxu0
  %v1136 = vadd.f32 0.0, %v1135
  %v1137 = vpop.f32.mrf.mxu0
  %v1138 = vadd.f32 0.0, %v1137
  %v1139 = vpop.f32.mrf.mxu0
  %v1140 = vadd.f32 0.0, %v1139
  %1141 = vmatprep.mubr.bf16.mxu0 0
  %1142 = vmatmul.mubr.bf16.gmra.mxu0 %v861
  %v1143 = vpop.f32.mrf.mxu0
  %v1144 = vadd.f32 0.0, %v1143
  %v1145 = vpop.f32.mrf.mxu0
  %v1146 = vadd.f32 0.0, %v1145
  %v1147 = vpop.f32.mrf.mxu0
  %v1148 = vadd.f32 0.0, %v1147
  %v1149 = vpop.f32.mrf.mxu0
  %v1150 = vadd.f32 0.0, %v1149
  %1151 = vdwg.mxu0
  %v1152 = vadd.f32 %v782, %v994
  %v1153 = vadd.f32 %v783, %v996
  %v1154 = vadd.f32 %v784, %v998
  %v1155 = vadd.f32 %v785, %v1000
  %v1156 = vadd.f32 %v786, %v1004
  %v1157 = vadd.f32 %v787, %v1006
  %v1158 = vadd.f32 %v788, %v1008
  %v1159 = vadd.f32 %v789, %v1010
  %v1160 = vadd.f32 %v790, %v1014
  %v1161 = vadd.f32 %v791, %v1016
  %v1162 = vadd.f32 %v792, %v1018
  %v1163 = vadd.f32 %v793, %v1020
  %v1164 = vadd.f32 %v794, %v1024
  %v1165 = vadd.f32 %v795, %v1026
  %v1166 = vadd.f32 %v796, %v1028
  %v1167 = vadd.f32 %v797, %v1030
  %v1168 = vadd.f32 %v798, %v1034
  %v1169 = vadd.f32 %v799, %v1036
  %v1170 = vadd.f32 %v800, %v1038
  %v1171 = vadd.f32 %v801, %v1040
  %v1172 = vadd.f32 %v802, %v1044
  %v1173 = vadd.f32 %v803, %v1046
  %v1174 = vadd.f32 %v804, %v1048
  %v1175 = vadd.f32 %v805, %v1050
  %v1176 = vadd.f32 %v806, %v1054
  %v1177 = vadd.f32 %v807, %v1056
  %v1178 = vadd.f32 %v808, %v1058
  %v1179 = vadd.f32 %v809, %v1060
  %v1180 = vadd.f32 %v810, %v1064
  %v1181 = vadd.f32 %v811, %v1066
  %v1182 = vadd.f32 %v812, %v1068
  %v1183 = vadd.f32 %v813, %v1070
  %v1184 = vadd.f32 %v814, %v1074
  %v1185 = vadd.f32 %v815, %v1076
  %v1186 = vadd.f32 %v816, %v1078
  %v1187 = vadd.f32 %v817, %v1080
  %v1188 = vadd.f32 %v818, %v1084
  %v1189 = vadd.f32 %v819, %v1086
  %v1190 = vadd.f32 %v820, %v1088
  %v1191 = vadd.f32 %v821, %v1090
  %v1192 = vadd.f32 %v822, %v1094
  %v1193 = vadd.f32 %v823, %v1096
  %v1194 = vadd.f32 %v824, %v1098
  %v1195 = vadd.f32 %v825, %v1100
  %v1196 = vadd.f32 %v826, %v1104
  %v1197 = vadd.f32 %v827, %v1106
  %v1198 = vadd.f32 %v828, %v1108
  %v1199 = vadd.f32 %v829, %v1110
  %v1200 = vadd.f32 %v830, %v1114
  %v1201 = vadd.f32 %v831, %v1116
  %v1202 = vadd.f32 %v832, %v1118
  %v1203 = vadd.f32 %v833, %v1120
  %v1204 = vadd.f32 %v834, %v1124
  %v1205 = vadd.f32 %v835, %v1126
  %v1206 = vadd.f32 %v836, %v1128
  %v1207 = vadd.f32 %v837, %v1130
  %v1208 = vadd.f32 %v838, %v1134
  %v1209 = vadd.f32 %v839, %v1136
  %v1210 = vadd.f32 %v840, %v1138
  %v1211 = vadd.f32 %v841, %v1140
  %v1212 = vadd.f32 %v842, %v1144
  %v1213 = vadd.f32 %v843, %v1146
  %v1214 = vadd.f32 %v844, %v1148
  %v1215 = vadd.f32 %v845, %v1150
  %v1216 = vrot.slane %v15, 1
  %v1217 = vrot.slane %v16, 1
  %v1218 = vrot.slane %v17, 1
  %v1219 = vrot.slane %v18, 1
  %v1220 = vrot.slane %v19, 1
  %v1221 = vrot.slane %v20, 1
  %v1222 = vrot.slane %v21, 1
  %v1223 = vrot.slane %v22, 1
  %v1224 = vrot.slane %v23, 1
  %v1225 = vrot.slane %v24, 1
  %v1226 = vrot.slane %v25, 1
  %v1227 = vrot.slane %v26, 1
  %v1228 = vrot.slane %v27, 1
  %v1229 = vrot.slane %v28, 1
  %v1230 = vrot.slane %v29, 1
  %v1231 = vrot.slane %v30, 1
  %v1232 = vrot.slane %v31, 1
  %v1233 = vrot.slane %v32, 1
  %v1234 = vrot.slane %v33, 1
  %v1235 = vrot.slane %v34, 1
  %v1236 = vrot.slane %v35, 1
  %v1237 = vrot.slane %v36, 1
  %v1238 = vrot.slane %v37, 1
  %v1239 = vrot.slane %v38, 1
  %v1240 = vrot.slane %v39, 1
  %v1241 = vrot.slane %v40, 1
  %v1242 = vrot.slane %v41, 1
  %v1243 = vrot.slane %v42, 1
  %v1244 = vrot.slane %v43, 1
  %v1245 = vrot.slane %v44, 1
  %v1246 = vrot.slane %v45, 1
  %v1247 = vrot.slane %v46, 1
  %vm1248 = vcmp.lt.s32.totalorder %v48, 7
  %v1249 = vsel %vm1248, %v1246, %v1247
  %v1250 = vsel %vm1248, %v1245, %v1246
  %v1251 = vsel %vm1248, %v1244, %v1245
  %v1252 = vsel %vm1248, %v1243, %v1244
  %v1253 = vsel %vm1248, %v1242, %v1243
  %v1254 = vsel %vm1248, %v1241, %v1242
  %v1255 = vsel %vm1248, %v1240, %v1241
  %v1256 = vsel %vm1248, %v1239, %v1240
  %v1257 = vsel %vm1248, %v1238, %v1239
  %v1258 = vsel %vm1248, %v1237, %v1238
  %v1259 = vsel %vm1248, %v1236, %v1237
  %v1260 = vsel %vm1248, %v1235, %v1236
  %v1261 = vsel %vm1248, %v1234, %v1235
  %v1262 = vsel %vm1248, %v1233, %v1234
  %v1263 = vsel %vm1248, %v1232, %v1233
  %v1264 = vsel %vm1248, %v1231, %v1232
  %v1265 = vsel %vm1248, %v1230, %v1231
  %v1266 = vsel %vm1248, %v1229, %v1230
  %v1267 = vsel %vm1248, %v1228, %v1229
  %v1268 = vsel %vm1248, %v1227, %v1228
  %v1269 = vsel %vm1248, %v1226, %v1227
  %v1270 = vsel %vm1248, %v1225, %v1226
  %v1271 = vsel %vm1248, %v1224, %v1225
  %v1272 = vsel %vm1248, %v1223, %v1224
  %v1273 = vsel %vm1248, %v1222, %v1223
  %v1274 = vsel %vm1248, %v1221, %v1222
  %v1275 = vsel %vm1248, %v1220, %v1221
  %v1276 = vsel %vm1248, %v1219, %v1220
  %v1277 = vsel %vm1248, %v1218, %v1219
  %v1278 = vsel %vm1248, %v1217, %v1218
  %v1279 = vsel %vm1248, %v1216, %v1217
  %v1280 = vsel %vm1248, %v1247, %v1216
  %v1281 = vsel %vm336, %v1279, 0.0
  %v1282 = vsel %vm337, %v1278, 0.0
  %v1283 = vsel %vm338, %v1277, 0.0
  %v1284 = vsel %vm339, %v1276, 0.0
  %v1285 = vsel %vm340, %v1275, 0.0
  %v1286 = vsel %vm341, %v1274, 0.0
  %v1287 = vsel %vm342, %v1273, 0.0
  %v1288 = vsel %vm343, %v1272, 0.0
  %v1289 = vsel %vm344, %v1271, 0.0
  %v1290 = vsel %vm345, %v1270, 0.0
  %v1291 = vsel %vm346, %v1269, 0.0
  %v1292 = vsel %vm347, %v1268, 0.0
  %v1293 = vsel %vm348, %v1267, 0.0
  %v1294 = vsel %vm349, %v1266, 0.0
  %v1295 = vsel %vm350, %v1265, 0.0
  %v1296 = vsel %vm351, %v1264, 0.0
  %v1297 = vsel %vm352, %v1263, 0.0
  %v1298 = vsel %vm353, %v1262, 0.0
  %v1299 = vsel %vm354, %v1261, 0.0
  %v1300 = vsel %vm355, %v1260, 0.0
  %v1301 = vsel %vm356, %v1259, 0.0
  %v1302 = vsel %vm357, %v1258, 0.0
  %v1303 = vsel %vm358, %v1257, 0.0
  %v1304 = vsel %vm359, %v1256, 0.0
  %v1305 = vsel %vm360, %v1255, 0.0
  %v1306 = vsel %vm361, %v1254, 0.0
  %v1307 = vsel %vm362, %v1253, 0.0
  %v1308 = vsel %vm363, %v1252, 0.0
  %v1309 = vsel %vm364, %v1251, 0.0
  %v1310 = vsel %vm365, %v1250, 0.0
  %v1311 = vsel %vm366, %v1249, 0.0
  %v1312 = vsel %vm367, %v1280, 0.0
  %v1313 = vpack.c.bf16 %v1282, %v1281
  %v1314 = vpack.c.bf16 %v1284, %v1283
  %v1315 = vpack.c.bf16 %v1286, %v1285
  %v1316 = vpack.c.bf16 %v1288, %v1287
  %v1317 = vpack.c.bf16 %v1290, %v1289
  %v1318 = vpack.c.bf16 %v1292, %v1291
  %v1319 = vpack.c.bf16 %v1294, %v1293
  %v1320 = vpack.c.bf16 %v1296, %v1295
  %v1321 = vpack.c.bf16 %v1298, %v1297
  %v1322 = vpack.c.bf16 %v1300, %v1299
  %v1323 = vpack.c.bf16 %v1302, %v1301
  %v1324 = vpack.c.bf16 %v1304, %v1303
  %v1325 = vpack.c.bf16 %v1306, %v1305
  %v1326 = vpack.c.bf16 %v1308, %v1307
  %v1327 = vpack.c.bf16 %v1310, %v1309
  %v1328 = vpack.c.bf16 %v1312, %v1311
  %s1329 = scalar_lea.vmem %s1, 256
  %v1330 = vld [vmem:[%s1329] sm:$0xff]
  %v1331 = vld [vmem:[%s1329 + $0x8] sm:$0xff]
  %v1332 = vld [vmem:[%s1329 + $0x10] sm:$0xff]
  %v1333 = vld [vmem:[%s1329 + $0x18] sm:$0xff]
  %v1334 = vld [vmem:[%s1329 + $0x20] sm:$0xff]
  %v1335 = vld [vmem:[%s1329 + $0x28] sm:$0xff]
  %v1336 = vld [vmem:[%s1329 + $0x30] sm:$0xff]
  %v1337 = vld [vmem:[%s1329 + $0x38] sm:$0xff]
  %v1338 = vld [vmem:[%s1329 + $0x40] sm:$0xff]
  %v1339 = vld [vmem:[%s1329 + $0x48] sm:$0xff]
  %v1340 = vld [vmem:[%s1329 + $0x50] sm:$0xff]
  %v1341 = vld [vmem:[%s1329 + $0x58] sm:$0xff]
  %v1342 = vld [vmem:[%s1329 + $0x60] sm:$0xff]
  %v1343 = vld [vmem:[%s1329 + $0x68] sm:$0xff]
  %v1344 = vld [vmem:[%s1329 + $0x70] sm:$0xff]
  %v1345 = vld [vmem:[%s1329 + $0x78] sm:$0xff]
  %v1362 = vunpack.c.l.b16 %v1330
  %v1363 = vunpack.c.h.b16 %v1330
  %v1364 = vunpack.c.l.b16 %v1331
  %v1365 = vunpack.c.h.b16 %v1331
  %v1366 = vunpack.c.l.b16 %v1332
  %v1367 = vunpack.c.h.b16 %v1332
  %v1368 = vunpack.c.l.b16 %v1333
  %v1369 = vunpack.c.h.b16 %v1333
  %v1370 = vunpack.c.l.b16 %v1334
  %v1371 = vunpack.c.h.b16 %v1334
  %v1372 = vunpack.c.l.b16 %v1335
  %v1373 = vunpack.c.h.b16 %v1335
  %v1374 = vunpack.c.l.b16 %v1336
  %v1375 = vunpack.c.h.b16 %v1336
  %v1376 = vunpack.c.l.b16 %v1337
  %v1377 = vunpack.c.h.b16 %v1337
  %v1378 = vunpack.c.l.b16 %v1338
  %v1379 = vunpack.c.h.b16 %v1338
  %v1380 = vunpack.c.l.b16 %v1339
  %v1381 = vunpack.c.h.b16 %v1339
  %v1382 = vunpack.c.l.b16 %v1340
  %v1383 = vunpack.c.h.b16 %v1340
  %v1384 = vunpack.c.l.b16 %v1341
  %v1385 = vunpack.c.h.b16 %v1341
  %v1386 = vunpack.c.l.b16 %v1342
  %v1387 = vunpack.c.h.b16 %v1342
  %v1388 = vunpack.c.l.b16 %v1343
  %v1389 = vunpack.c.h.b16 %v1343
  %v1390 = vunpack.c.l.b16 %v1344
  %v1391 = vunpack.c.h.b16 %v1344
  %v1392 = vunpack.c.l.b16 %v1345
  %v1393 = vunpack.c.h.b16 %v1345
  %v1394 = vpack.c.b16 %v1364, %v1362
  %v1395 = vpack.c.b16 %v1365, %v1363
  %v1396 = vpack.c.b16 %v1368, %v1366
  %v1397 = vpack.c.b16 %v1369, %v1367
  %v1398 = vpack.c.b16 %v1372, %v1370
  %v1399 = vpack.c.b16 %v1373, %v1371
  %v1400 = vpack.c.b16 %v1376, %v1374
  %v1401 = vpack.c.b16 %v1377, %v1375
  %v1402 = vpack.c.b16 %v1380, %v1378
  %v1403 = vpack.c.b16 %v1381, %v1379
  %v1404 = vpack.c.b16 %v1384, %v1382
  %v1405 = vpack.c.b16 %v1385, %v1383
  %v1406 = vpack.c.b16 %v1388, %v1386
  %v1407 = vpack.c.b16 %v1389, %v1387
  %v1408 = vpack.c.b16 %v1392, %v1390
  %v1409 = vpack.c.b16 %v1393, %v1391
  %1426 = vmatprep.subr.bf16.mxu0 %v1409
  %1427 = vmatpush1.bf16.msra.mxu0 %v1408
  %1428 = vmatprep.subr.bf16.mxu0 %v1407
  %1429 = vmatpush1.bf16.msra.mxu0 %v1406
  %1430 = vmatprep.subr.bf16.mxu0 %v1405
  %1431 = vmatpush1.bf16.msra.mxu0 %v1404
  %1432 = vmatprep.subr.bf16.mxu0 %v1403
  %1433 = vmatpush1.bf16.msra.mxu0 %v1402
  %1434 = vmatprep.subr.bf16.mxu0 %v1401
  %1435 = vmatpush1.bf16.msra.mxu0 %v1400
  %1436 = vmatprep.subr.bf16.mxu0 %v1399
  %1437 = vmatpush1.bf16.msra.mxu0 %v1398
  %1438 = vmatprep.subr.bf16.mxu0 %v1397
  %1439 = vmatpush1.bf16.msra.mxu0 %v1396
  %1440 = vmatprep.subr.bf16.mxu0 %v1395
  %1441 = vmatpush1.bf16.msra.mxu0 %v1394
  %1442 = vmatprep.subr.bf16.mxu0 0
  %1443 = vmatpush2.bf16.msra.mxu0 0
  %1444 = vmatprep.subr.bf16.mxu0 0
  %1445 = vmatpush2.bf16.msra.mxu0 0
  %1446 = vmatprep.subr.bf16.mxu0 0
  %1447 = vmatpush2.bf16.msra.mxu0 0
  %1448 = vmatprep.subr.bf16.mxu0 0
  %1449 = vmatpush2.bf16.msra.mxu0 0
  %1450 = vmatprep.subr.bf16.mxu0 0
  %1451 = vmatpush2.bf16.msra.mxu0 0
  %1452 = vmatprep.subr.bf16.mxu0 0
  %1453 = vmatpush2.bf16.msra.mxu0 0
  %1454 = vmatprep.subr.bf16.mxu0 0
  %1455 = vmatpush2.bf16.msra.mxu0 0
  %1456 = vmatprep.subr.bf16.mxu0 0
  %1457 = vmatpush2.bf16.msra.mxu0 0
  %1458 = vmatprep.mubr.bf16.mxu0 0
  %1459 = vmatmul.mubr.bf16.gmra.mxu0 %v1313
  %v1460 = vpop.f32.mrf.mxu0
  %v1461 = vadd.f32 0.0, %v1460
  %v1462 = vpop.f32.mrf.mxu0
  %v1463 = vadd.f32 0.0, %v1462
  %v1464 = vpop.f32.mrf.mxu0
  %v1465 = vadd.f32 0.0, %v1464
  %v1466 = vpop.f32.mrf.mxu0
  %v1467 = vadd.f32 0.0, %v1466
  %1468 = vmatprep.mubr.bf16.mxu0 0
  %1469 = vmatmul.mubr.bf16.gmra.mxu0 %v1314
  %v1470 = vpop.f32.mrf.mxu0
  %v1471 = vadd.f32 0.0, %v1470
  %v1472 = vpop.f32.mrf.mxu0
  %v1473 = vadd.f32 0.0, %v1472
  %v1474 = vpop.f32.mrf.mxu0
  %v1475 = vadd.f32 0.0, %v1474
  %v1476 = vpop.f32.mrf.mxu0
  %v1477 = vadd.f32 0.0, %v1476
  %1478 = vmatprep.mubr.bf16.mxu0 0
  %1479 = vmatmul.mubr.bf16.gmra.mxu0 %v1315
  %v1480 = vpop.f32.mrf.mxu0
  %v1481 = vadd.f32 0.0, %v1480
  %v1482 = vpop.f32.mrf.mxu0
  %v1483 = vadd.f32 0.0, %v1482
  %v1484 = vpop.f32.mrf.mxu0
  %v1485 = vadd.f32 0.0, %v1484
  %v1486 = vpop.f32.mrf.mxu0
  %v1487 = vadd.f32 0.0, %v1486
  %1488 = vmatprep.mubr.bf16.mxu0 0
  %1489 = vmatmul.mubr.bf16.gmra.mxu0 %v1316
  %v1490 = vpop.f32.mrf.mxu0
  %v1491 = vadd.f32 0.0, %v1490
  %v1492 = vpop.f32.mrf.mxu0
  %v1493 = vadd.f32 0.0, %v1492
  %v1494 = vpop.f32.mrf.mxu0
  %v1495 = vadd.f32 0.0, %v1494
  %v1496 = vpop.f32.mrf.mxu0
  %v1497 = vadd.f32 0.0, %v1496
  %1498 = vmatprep.mubr.bf16.mxu0 0
  %1499 = vmatmul.mubr.bf16.gmra.mxu0 %v1317
  %v1500 = vpop.f32.mrf.mxu0
  %v1501 = vadd.f32 0.0, %v1500
  %v1502 = vpop.f32.mrf.mxu0
  %v1503 = vadd.f32 0.0, %v1502
  %v1504 = vpop.f32.mrf.mxu0
  %v1505 = vadd.f32 0.0, %v1504
  %v1506 = vpop.f32.mrf.mxu0
  %v1507 = vadd.f32 0.0, %v1506
  %1508 = vmatprep.mubr.bf16.mxu0 0
  %1509 = vmatmul.mubr.bf16.gmra.mxu0 %v1318
  %v1510 = vpop.f32.mrf.mxu0
  %v1511 = vadd.f32 0.0, %v1510
  %v1512 = vpop.f32.mrf.mxu0
  %v1513 = vadd.f32 0.0, %v1512
  %v1514 = vpop.f32.mrf.mxu0
  %v1515 = vadd.f32 0.0, %v1514
  %v1516 = vpop.f32.mrf.mxu0
  %v1517 = vadd.f32 0.0, %v1516
  %1518 = vmatprep.mubr.bf16.mxu0 0
  %1519 = vmatmul.mubr.bf16.gmra.mxu0 %v1319
  %v1520 = vpop.f32.mrf.mxu0
  %v1521 = vadd.f32 0.0, %v1520
  %v1522 = vpop.f32.mrf.mxu0
  %v1523 = vadd.f32 0.0, %v1522
  %v1524 = vpop.f32.mrf.mxu0
  %v1525 = vadd.f32 0.0, %v1524
  %v1526 = vpop.f32.mrf.mxu0
  %v1527 = vadd.f32 0.0, %v1526
  %1528 = vmatprep.mubr.bf16.mxu0 0
  %1529 = vmatmul.mubr.bf16.gmra.mxu0 %v1320
  %v1530 = vpop.f32.mrf.mxu0
  %v1531 = vadd.f32 0.0, %v1530
  %v1532 = vpop.f32.mrf.mxu0
  %v1533 = vadd.f32 0.0, %v1532
  %v1534 = vpop.f32.mrf.mxu0
  %v1535 = vadd.f32 0.0, %v1534
  %v1536 = vpop.f32.mrf.mxu0
  %v1537 = vadd.f32 0.0, %v1536
  %1538 = vmatprep.mubr.bf16.mxu0 0
  %1539 = vmatmul.mubr.bf16.gmra.mxu0 %v1321
  %v1540 = vpop.f32.mrf.mxu0
  %v1541 = vadd.f32 0.0, %v1540
  %v1542 = vpop.f32.mrf.mxu0
  %v1543 = vadd.f32 0.0, %v1542
  %v1544 = vpop.f32.mrf.mxu0
  %v1545 = vadd.f32 0.0, %v1544
  %v1546 = vpop.f32.mrf.mxu0
  %v1547 = vadd.f32 0.0, %v1546
  %1548 = vmatprep.mubr.bf16.mxu0 0
  %1549 = vmatmul.mubr.bf16.gmra.mxu0 %v1322
  %v1550 = vpop.f32.mrf.mxu0
  %v1551 = vadd.f32 0.0, %v1550
  %v1552 = vpop.f32.mrf.mxu0
  %v1553 = vadd.f32 0.0, %v1552
  %v1554 = vpop.f32.mrf.mxu0
  %v1555 = vadd.f32 0.0, %v1554
  %v1556 = vpop.f32.mrf.mxu0
  %v1557 = vadd.f32 0.0, %v1556
  %1558 = vmatprep.mubr.bf16.mxu0 0
  %1559 = vmatmul.mubr.bf16.gmra.mxu0 %v1323
  %v1560 = vpop.f32.mrf.mxu0
  %v1561 = vadd.f32 0.0, %v1560
  %v1562 = vpop.f32.mrf.mxu0
  %v1563 = vadd.f32 0.0, %v1562
  %v1564 = vpop.f32.mrf.mxu0
  %v1565 = vadd.f32 0.0, %v1564
  %v1566 = vpop.f32.mrf.mxu0
  %v1567 = vadd.f32 0.0, %v1566
  %1568 = vmatprep.mubr.bf16.mxu0 0
  %1569 = vmatmul.mubr.bf16.gmra.mxu0 %v1324
  %v1570 = vpop.f32.mrf.mxu0
  %v1571 = vadd.f32 0.0, %v1570
  %v1572 = vpop.f32.mrf.mxu0
  %v1573 = vadd.f32 0.0, %v1572
  %v1574 = vpop.f32.mrf.mxu0
  %v1575 = vadd.f32 0.0, %v1574
  %v1576 = vpop.f32.mrf.mxu0
  %v1577 = vadd.f32 0.0, %v1576
  %1578 = vmatprep.mubr.bf16.mxu0 0
  %1579 = vmatmul.mubr.bf16.gmra.mxu0 %v1325
  %v1580 = vpop.f32.mrf.mxu0
  %v1581 = vadd.f32 0.0, %v1580
  %v1582 = vpop.f32.mrf.mxu0
  %v1583 = vadd.f32 0.0, %v1582
  %v1584 = vpop.f32.mrf.mxu0
  %v1585 = vadd.f32 0.0, %v1584
  %v1586 = vpop.f32.mrf.mxu0
  %v1587 = vadd.f32 0.0, %v1586
  %1588 = vmatprep.mubr.bf16.mxu0 0
  %1589 = vmatmul.mubr.bf16.gmra.mxu0 %v1326
  %v1590 = vpop.f32.mrf.mxu0
  %v1591 = vadd.f32 0.0, %v1590
  %v1592 = vpop.f32.mrf.mxu0
  %v1593 = vadd.f32 0.0, %v1592
  %v1594 = vpop.f32.mrf.mxu0
  %v1595 = vadd.f32 0.0, %v1594
  %v1596 = vpop.f32.mrf.mxu0
  %v1597 = vadd.f32 0.0, %v1596
  %1598 = vmatprep.mubr.bf16.mxu0 0
  %1599 = vmatmul.mubr.bf16.gmra.mxu0 %v1327
  %v1600 = vpop.f32.mrf.mxu0
  %v1601 = vadd.f32 0.0, %v1600
  %v1602 = vpop.f32.mrf.mxu0
  %v1603 = vadd.f32 0.0, %v1602
  %v1604 = vpop.f32.mrf.mxu0
  %v1605 = vadd.f32 0.0, %v1604
  %v1606 = vpop.f32.mrf.mxu0
  %v1607 = vadd.f32 0.0, %v1606
  %1608 = vmatprep.mubr.bf16.mxu0 0
  %1609 = vmatmul.mubr.bf16.gmra.mxu0 %v1328
  %v1610 = vpop.f32.mrf.mxu0
  %v1611 = vadd.f32 0.0, %v1610
  %v1612 = vpop.f32.mrf.mxu0
  %v1613 = vadd.f32 0.0, %v1612
  %v1614 = vpop.f32.mrf.mxu0
  %v1615 = vadd.f32 0.0, %v1614
  %v1616 = vpop.f32.mrf.mxu0
  %v1617 = vadd.f32 0.0, %v1616
  %1618 = vdwg.mxu0
  %v1619 = vadd.f32 %v1152, %v1461
  %v1620 = vadd.f32 %v1153, %v1463
  %v1621 = vadd.f32 %v1154, %v1465
  %v1622 = vadd.f32 %v1155, %v1467
  %v1623 = vadd.f32 %v1156, %v1471
  %v1624 = vadd.f32 %v1157, %v1473
  %v1625 = vadd.f32 %v1158, %v1475
  %v1626 = vadd.f32 %v1159, %v1477
  %v1627 = vadd.f32 %v1160, %v1481
  %v1628 = vadd.f32 %v1161, %v1483
  %v1629 = vadd.f32 %v1162, %v1485
  %v1630 = vadd.f32 %v1163, %v1487
  %v1631 = vadd.f32 %v1164, %v1491
  %v1632 = vadd.f32 %v1165, %v1493
  %v1633 = vadd.f32 %v1166, %v1495
  %v1634 = vadd.f32 %v1167, %v1497
  %v1635 = vadd.f32 %v1168, %v1501
  %v1636 = vadd.f32 %v1169, %v1503
  %v1637 = vadd.f32 %v1170, %v1505
  %v1638 = vadd.f32 %v1171, %v1507
  %v1639 = vadd.f32 %v1172, %v1511
  %v1640 = vadd.f32 %v1173, %v1513
  %v1641 = vadd.f32 %v1174, %v1515
  %v1642 = vadd.f32 %v1175, %v1517
  %v1643 = vadd.f32 %v1176, %v1521
  %v1644 = vadd.f32 %v1177, %v1523
  %v1645 = vadd.f32 %v1178, %v1525
  %v1646 = vadd.f32 %v1179, %v1527
  %v1647 = vadd.f32 %v1180, %v1531
  %v1648 = vadd.f32 %v1181, %v1533
  %v1649 = vadd.f32 %v1182, %v1535
  %v1650 = vadd.f32 %v1183, %v1537
  %v1651 = vadd.f32 %v1184, %v1541
  %v1652 = vadd.f32 %v1185, %v1543
  %v1653 = vadd.f32 %v1186, %v1545
  %v1654 = vadd.f32 %v1187, %v1547
  %v1655 = vadd.f32 %v1188, %v1551
  %v1656 = vadd.f32 %v1189, %v1553
  %v1657 = vadd.f32 %v1190, %v1555
  %v1658 = vadd.f32 %v1191, %v1557
  %v1659 = vadd.f32 %v1192, %v1561
  %v1660 = vadd.f32 %v1193, %v1563
  %v1661 = vadd.f32 %v1194, %v1565
  %v1662 = vadd.f32 %v1195, %v1567
  %v1663 = vadd.f32 %v1196, %v1571
  %v1664 = vadd.f32 %v1197, %v1573
  %v1665 = vadd.f32 %v1198, %v1575
  %v1666 = vadd.f32 %v1199, %v1577
  %v1667 = vadd.f32 %v1200, %v1581
  %v1668 = vadd.f32 %v1201, %v1583
  %v1669 = vadd.f32 %v1202, %v1585
  %v1670 = vadd.f32 %v1203, %v1587
  %v1671 = vadd.f32 %v1204, %v1591
  %v1672 = vadd.f32 %v1205, %v1593
  %v1673 = vadd.f32 %v1206, %v1595
  %v1674 = vadd.f32 %v1207, %v1597
  %v1675 = vadd.f32 %v1208, %v1601
  %v1676 = vadd.f32 %v1209, %v1603
  %v1677 = vadd.f32 %v1210, %v1605
  %v1678 = vadd.f32 %v1211, %v1607
  %v1679 = vadd.f32 %v1212, %v1611
  %v1680 = vadd.f32 %v1213, %v1613
  %v1681 = vadd.f32 %v1214, %v1615
  %v1682 = vadd.f32 %v1215, %v1617
  %v1683 = vxor.u32 %v1620, 2147483648
  %v1684 = vxor.u32 %v1622, 2147483648
  %v1685 = vxor.u32 %v1624, 2147483648
  %v1686 = vxor.u32 %v1626, 2147483648
  %v1687 = vxor.u32 %v1628, 2147483648
  %v1688 = vxor.u32 %v1630, 2147483648
  %v1689 = vxor.u32 %v1632, 2147483648
  %v1690 = vxor.u32 %v1634, 2147483648
  %v1691 = vxor.u32 %v1636, 2147483648
  %v1692 = vxor.u32 %v1638, 2147483648
  %v1693 = vxor.u32 %v1640, 2147483648
  %v1694 = vxor.u32 %v1642, 2147483648
  %v1695 = vxor.u32 %v1644, 2147483648
  %v1696 = vxor.u32 %v1646, 2147483648
  %v1697 = vxor.u32 %v1648, 2147483648
  %v1698 = vxor.u32 %v1650, 2147483648
  %v1699 = vxor.u32 %v1652, 2147483648
  %v1700 = vxor.u32 %v1654, 2147483648
  %v1701 = vxor.u32 %v1656, 2147483648
  %v1702 = vxor.u32 %v1658, 2147483648
  %v1703 = vxor.u32 %v1660, 2147483648
  %v1704 = vxor.u32 %v1662, 2147483648
  %v1705 = vxor.u32 %v1664, 2147483648
  %v1706 = vxor.u32 %v1666, 2147483648
  %v1707 = vxor.u32 %v1668, 2147483648
  %v1708 = vxor.u32 %v1670, 2147483648
  %v1709 = vxor.u32 %v1672, 2147483648
  %v1710 = vxor.u32 %v1674, 2147483648
  %v1711 = vxor.u32 %v1676, 2147483648
  %v1712 = vxor.u32 %v1678, 2147483648
  %v1713 = vxor.u32 %v1680, 2147483648
  %v1714 = vxor.u32 %v1682, 2147483648
  %v1715 = vmul.f32 %v1683, 1.442695
  %v1716 = vpow.pop %v1715
  %v1717 = vmul.f32 %v1684, 1.442695
  %v1718 = vpow.pop %v1717
  %v1719 = vmul.f32 %v1685, 1.442695
  %v1720 = vpow.pop %v1719
  %v1721 = vmul.f32 %v1686, 1.442695
  %v1722 = vpow.pop %v1721
  %v1723 = vmul.f32 %v1687, 1.442695
  %v1724 = vpow.pop %v1723
  %v1725 = vmul.f32 %v1688, 1.442695
  %v1726 = vpow.pop %v1725
  %v1727 = vmul.f32 %v1689, 1.442695
  %v1728 = vpow.pop %v1727
  %v1729 = vmul.f32 %v1690, 1.442695
  %v1730 = vpow.pop %v1729
  %v1731 = vmul.f32 %v1691, 1.442695
  %v1732 = vpow.pop %v1731
  %v1733 = vmul.f32 %v1692, 1.442695
  %v1734 = vpow.pop %v1733
  %v1735 = vmul.f32 %v1693, 1.442695
  %v1736 = vpow.pop %v1735
  %v1737 = vmul.f32 %v1694, 1.442695
  %v1738 = vpow.pop %v1737
  %v1739 = vmul.f32 %v1695, 1.442695
  %v1740 = vpow.pop %v1739
  %v1741 = vmul.f32 %v1696, 1.442695
  %v1742 = vpow.pop %v1741
  %v1743 = vmul.f32 %v1697, 1.442695
  %v1744 = vpow.pop %v1743
  %v1745 = vmul.f32 %v1698, 1.442695
  %v1746 = vpow.pop %v1745
  %v1747 = vmul.f32 %v1699, 1.442695
  %v1748 = vpow.pop %v1747
  %v1749 = vmul.f32 %v1700, 1.442695
  %v1750 = vpow.pop %v1749
  %v1751 = vmul.f32 %v1701, 1.442695
  %v1752 = vpow.pop %v1751
  %v1753 = vmul.f32 %v1702, 1.442695
  %v1754 = vpow.pop %v1753
  %v1755 = vmul.f32 %v1703, 1.442695
  %v1756 = vpow.pop %v1755
  %v1757 = vmul.f32 %v1704, 1.442695
  %v1758 = vpow.pop %v1757
  %v1759 = vmul.f32 %v1705, 1.442695
  %v1760 = vpow.pop %v1759
  %v1761 = vmul.f32 %v1706, 1.442695
  %v1762 = vpow.pop %v1761
  %v1763 = vmul.f32 %v1707, 1.442695
  %v1764 = vpow.pop %v1763
  %v1765 = vmul.f32 %v1708, 1.442695
  %v1766 = vpow.pop %v1765
  %v1767 = vmul.f32 %v1709, 1.442695
  %v1768 = vpow.pop %v1767
  %v1769 = vmul.f32 %v1710, 1.442695
  %v1770 = vpow.pop %v1769
  %v1771 = vmul.f32 %v1711, 1.442695
  %v1772 = vpow.pop %v1771
  %v1773 = vmul.f32 %v1712, 1.442695
  %v1774 = vpow.pop %v1773
  %v1775 = vmul.f32 %v1713, 1.442695
  %v1776 = vpow.pop %v1775
  %v1777 = vmul.f32 %v1714, 1.442695
  %v1778 = vpow.pop %v1777
  %v1779 = vadd.f32 %v1716, 1.0
  %v1780 = vadd.f32 %v1718, 1.0
  %v1781 = vadd.f32 %v1720, 1.0
  %v1782 = vadd.f32 %v1722, 1.0
  %v1783 = vadd.f32 %v1724, 1.0
  %v1784 = vadd.f32 %v1726, 1.0
  %v1785 = vadd.f32 %v1728, 1.0
  %v1786 = vadd.f32 %v1730, 1.0
  %v1787 = vadd.f32 %v1732, 1.0
  %v1788 = vadd.f32 %v1734, 1.0
  %v1789 = vadd.f32 %v1736, 1.0
  %v1790 = vadd.f32 %v1738, 1.0
  %v1791 = vadd.f32 %v1740, 1.0
  %v1792 = vadd.f32 %v1742, 1.0
  %v1793 = vadd.f32 %v1744, 1.0
  %v1794 = vadd.f32 %v1746, 1.0
  %v1795 = vadd.f32 %v1748, 1.0
  %v1796 = vadd.f32 %v1750, 1.0
  %v1797 = vadd.f32 %v1752, 1.0
  %v1798 = vadd.f32 %v1754, 1.0
  %v1799 = vadd.f32 %v1756, 1.0
  %v1800 = vadd.f32 %v1758, 1.0
  %v1801 = vadd.f32 %v1760, 1.0
  %v1802 = vadd.f32 %v1762, 1.0
  %v1803 = vadd.f32 %v1764, 1.0
  %v1804 = vadd.f32 %v1766, 1.0
  %v1805 = vadd.f32 %v1768, 1.0
  %v1806 = vadd.f32 %v1770, 1.0
  %v1807 = vadd.f32 %v1772, 1.0
  %v1808 = vadd.f32 %v1774, 1.0
  %v1809 = vadd.f32 %v1776, 1.0
  %v1810 = vadd.f32 %v1778, 1.0
  %v1811 = vrcp.pop %v1779
  %v1812 = vmul.f32 1.0, %v1811
  %v1813 = vrcp.pop %v1780
  %v1814 = vmul.f32 1.0, %v1813
  %v1815 = vrcp.pop %v1781
  %v1816 = vmul.f32 1.0, %v1815
  %v1817 = vrcp.pop %v1782
  %v1818 = vmul.f32 1.0, %v1817
  %v1819 = vrcp.pop %v1783
  %v1820 = vmul.f32 1.0, %v1819
  %v1821 = vrcp.pop %v1784
  %v1822 = vmul.f32 1.0, %v1821
  %v1823 = vrcp.pop %v1785
  %v1824 = vmul.f32 1.0, %v1823
  %v1825 = vrcp.pop %v1786
  %v1826 = vmul.f32 1.0, %v1825
  %v1827 = vrcp.pop %v1787
  %v1828 = vmul.f32 1.0, %v1827
  %v1829 = vrcp.pop %v1788
  %v1830 = vmul.f32 1.0, %v1829
  %v1831 = vrcp.pop %v1789
  %v1832 = vmul.f32 1.0, %v1831
  %v1833 = vrcp.pop %v1790
  %v1834 = vmul.f32 1.0, %v1833
  %v1835 = vrcp.pop %v1791
  %v1836 = vmul.f32 1.0, %v1835
  %v1837 = vrcp.pop %v1792
  %v1838 = vmul.f32 1.0, %v1837
  %v1839 = vrcp.pop %v1793
  %v1840 = vmul.f32 1.0, %v1839
  %v1841 = vrcp.pop %v1794
  %v1842 = vmul.f32 1.0, %v1841
  %v1843 = vrcp.pop %v1795
  %v1844 = vmul.f32 1.0, %v1843
  %v1845 = vrcp.pop %v1796
  %v1846 = vmul.f32 1.0, %v1845
  %v1847 = vrcp.pop %v1797
  %v1848 = vmul.f32 1.0, %v1847
  %v1849 = vrcp.pop %v1798
  %v1850 = vmul.f32 1.0, %v1849
  %v1851 = vrcp.pop %v1799
  %v1852 = vmul.f32 1.0, %v1851
  %v1853 = vrcp.pop %v1800
  %v1854 = vmul.f32 1.0, %v1853
  %v1855 = vrcp.pop %v1801
  %v1856 = vmul.f32 1.0, %v1855
  %v1857 = vrcp.pop %v1802
  %v1858 = vmul.f32 1.0, %v1857
  %v1859 = vrcp.pop %v1803
  %v1860 = vmul.f32 1.0, %v1859
  %v1861 = vrcp.pop %v1804
  %v1862 = vmul.f32 1.0, %v1861
  %v1863 = vrcp.pop %v1805
  %v1864 = vmul.f32 1.0, %v1863
  %v1865 = vrcp.pop %v1806
  %v1866 = vmul.f32 1.0, %v1865
  %v1867 = vrcp.pop %v1807
  %v1868 = vmul.f32 1.0, %v1867
  %v1869 = vrcp.pop %v1808
  %v1870 = vmul.f32 1.0, %v1869
  %v1871 = vrcp.pop %v1809
  %v1872 = vmul.f32 1.0, %v1871
  %v1873 = vrcp.pop %v1810
  %v1874 = vmul.f32 1.0, %v1873
  %v1875 = vmul.f32 %v1619, %v1812
  %v1876 = vmul.f32 %v1621, %v1814
  %v1877 = vmul.f32 %v1623, %v1816
  %v1878 = vmul.f32 %v1625, %v1818
  %v1879 = vmul.f32 %v1627, %v1820
  %v1880 = vmul.f32 %v1629, %v1822
  %v1881 = vmul.f32 %v1631, %v1824
  %v1882 = vmul.f32 %v1633, %v1826
  %v1883 = vmul.f32 %v1635, %v1828
  %v1884 = vmul.f32 %v1637, %v1830
  %v1885 = vmul.f32 %v1639, %v1832
  %v1886 = vmul.f32 %v1641, %v1834
  %v1887 = vmul.f32 %v1643, %v1836
  %v1888 = vmul.f32 %v1645, %v1838
  %v1889 = vmul.f32 %v1647, %v1840
  %v1890 = vmul.f32 %v1649, %v1842
  %v1891 = vmul.f32 %v1651, %v1844
  %v1892 = vmul.f32 %v1653, %v1846
  %v1893 = vmul.f32 %v1655, %v1848
  %v1894 = vmul.f32 %v1657, %v1850
  %v1895 = vmul.f32 %v1659, %v1852
  %v1896 = vmul.f32 %v1661, %v1854
  %v1897 = vmul.f32 %v1663, %v1856
  %v1898 = vmul.f32 %v1665, %v1858
  %v1899 = vmul.f32 %v1667, %v1860
  %v1900 = vmul.f32 %v1669, %v1862
  %v1901 = vmul.f32 %v1671, %v1864
  %v1902 = vmul.f32 %v1673, %v1866
  %v1903 = vmul.f32 %v1675, %v1868
  %v1904 = vmul.f32 %v1677, %v1870
  %v1905 = vmul.f32 %v1679, %v1872
  %v1906 = vmul.f32 %v1681, %v1874
  %v1907 = vadd.f32 %v15, %v1875
  %v1908 = vadd.f32 %v16, %v1876
  %v1909 = vadd.f32 %v17, %v1877
  %v1910 = vadd.f32 %v18, %v1878
  %v1911 = vadd.f32 %v19, %v1879
  %v1912 = vadd.f32 %v20, %v1880
  %v1913 = vadd.f32 %v21, %v1881
  %v1914 = vadd.f32 %v22, %v1882
  %v1915 = vadd.f32 %v23, %v1883
  %v1916 = vadd.f32 %v24, %v1884
  %v1917 = vadd.f32 %v25, %v1885
  %v1918 = vadd.f32 %v26, %v1886
  %v1919 = vadd.f32 %v27, %v1887
  %v1920 = vadd.f32 %v28, %v1888
  %v1921 = vadd.f32 %v29, %v1889
  %v1922 = vadd.f32 %v30, %v1890
  %v1923 = vadd.f32 %v31, %v1891
  %v1924 = vadd.f32 %v32, %v1892
  %v1925 = vadd.f32 %v33, %v1893
  %v1926 = vadd.f32 %v34, %v1894
  %v1927 = vadd.f32 %v35, %v1895
  %v1928 = vadd.f32 %v36, %v1896
  %v1929 = vadd.f32 %v37, %v1897
  %v1930 = vadd.f32 %v38, %v1898
  %v1931 = vadd.f32 %v39, %v1899
  %v1932 = vadd.f32 %v40, %v1900
  %v1933 = vadd.f32 %v41, %v1901
  %v1934 = vadd.f32 %v42, %v1902
  %v1935 = vadd.f32 %v43, %v1903
  %v1936 = vadd.f32 %v44, %v1904
  %v1937 = vadd.f32 %v45, %v1905
  %v1938 = vadd.f32 %v46, %v1906
  %s1939 = scalar_lea.vmem %s2, 2
  %v1940 = vld [vmem:[%s1939] sm:$0x3]
  %v1941 = vrot.slane %v1907, 7
  %v1942 = vrot.slane %v1908, 7
  %v1943 = vrot.slane %v1909, 7
  %v1944 = vrot.slane %v1910, 7
  %v1945 = vrot.slane %v1911, 7
  %v1946 = vrot.slane %v1912, 7
  %v1947 = vrot.slane %v1913, 7
  %v1948 = vrot.slane %v1914, 7
  %v1949 = vrot.slane %v1915, 7
  %v1950 = vrot.slane %v1916, 7
  %v1951 = vrot.slane %v1917, 7
  %v1952 = vrot.slane %v1918, 7
  %v1953 = vrot.slane %v1919, 7
  %v1954 = vrot.slane %v1920, 7
  %v1955 = vrot.slane %v1921, 7
  %v1956 = vrot.slane %v1922, 7
  %v1957 = vrot.slane %v1923, 7
  %v1958 = vrot.slane %v1924, 7
  %v1959 = vrot.slane %v1925, 7
  %v1960 = vrot.slane %v1926, 7
  %v1961 = vrot.slane %v1927, 7
  %v1962 = vrot.slane %v1928, 7
  %v1963 = vrot.slane %v1929, 7
  %v1964 = vrot.slane %v1930, 7
  %v1965 = vrot.slane %v1931, 7
  %v1966 = vrot.slane %v1932, 7
  %v1967 = vrot.slane %v1933, 7
  %v1968 = vrot.slane %v1934, 7
  %v1969 = vrot.slane %v1935, 7
  %v1970 = vrot.slane %v1936, 7
  %v1971 = vrot.slane %v1937, 7
  %v1972 = vrot.slane %v1938, 7
  %v1973 = vsel %vm401, %v1971, %v1972
  %v1974 = vsel %vm401, %v1970, %v1971
  %v1975 = vsel %vm401, %v1969, %v1970
  %v1976 = vsel %vm401, %v1968, %v1969
  %v1977 = vsel %vm401, %v1967, %v1968
  %v1978 = vsel %vm401, %v1966, %v1967
  %v1979 = vsel %vm401, %v1965, %v1966
  %v1980 = vsel %vm401, %v1964, %v1965
  %v1981 = vsel %vm401, %v1963, %v1964
  %v1982 = vsel %vm401, %v1962, %v1963
  %v1983 = vsel %vm401, %v1961, %v1962
  %v1984 = vsel %vm401, %v1960, %v1961
  %v1985 = vsel %vm401, %v1959, %v1960
  %v1986 = vsel %vm401, %v1958, %v1959
  %v1987 = vsel %vm401, %v1957, %v1958
  %v1988 = vsel %vm401, %v1956, %v1957
  %v1989 = vsel %vm401, %v1955, %v1956
  %v1990 = vsel %vm401, %v1954, %v1955
  %v1991 = vsel %vm401, %v1953, %v1954
  %v1992 = vsel %vm401, %v1952, %v1953
  %v1993 = vsel %vm401, %v1951, %v1952
  %v1994 = vsel %vm401, %v1950, %v1951
  %v1995 = vsel %vm401, %v1949, %v1950
  %v1996 = vsel %vm401, %v1948, %v1949
  %v1997 = vsel %vm401, %v1947, %v1948
  %v1998 = vsel %vm401, %v1946, %v1947
  %v1999 = vsel %vm401, %v1945, %v1946
  %v2000 = vsel %vm401, %v1944, %v1945
  %v2001 = vsel %vm401, %v1943, %v1944
  %v2002 = vsel %vm401, %v1942, %v1943
  %v2003 = vsel %vm401, %v1941, %v1942
  %v2004 = vsel %vm401, %v1972, %v1941
  %v2005 = vsel %vm304, %v2004, 0.0
  %v2006 = vsel %vm305, %v2003, 0.0
  %v2007 = vsel %vm306, %v2002, 0.0
  %v2008 = vsel %vm307, %v2001, 0.0
  %v2009 = vsel %vm308, %v2000, 0.0
  %v2010 = vsel %vm309, %v1999, 0.0
  %v2011 = vsel %vm310, %v1998, 0.0
  %v2012 = vsel %vm311, %v1997, 0.0
  %v2013 = vsel %vm312, %v1996, 0.0
  %v2014 = vsel %vm313, %v1995, 0.0
  %v2015 = vsel %vm314, %v1994, 0.0
  %v2016 = vsel %vm315, %v1993, 0.0
  %v2017 = vsel %vm316, %v1992, 0.0
  %v2018 = vsel %vm317, %v1991, 0.0
  %v2019 = vsel %vm318, %v1990, 0.0
  %v2020 = vsel %vm319, %v1989, 0.0
  %v2021 = vsel %vm320, %v1988, 0.0
  %v2022 = vsel %vm321, %v1987, 0.0
  %v2023 = vsel %vm322, %v1986, 0.0
  %v2024 = vsel %vm323, %v1985, 0.0
  %v2025 = vsel %vm324, %v1984, 0.0
  %v2026 = vsel %vm325, %v1983, 0.0
  %v2027 = vsel %vm326, %v1982, 0.0
  %v2028 = vsel %vm327, %v1981, 0.0
  %v2029 = vsel %vm328, %v1980, 0.0
  %v2030 = vsel %vm329, %v1979, 0.0
  %v2031 = vsel %vm330, %v1978, 0.0
  %v2032 = vsel %vm331, %v1977, 0.0
  %v2033 = vsel %vm332, %v1976, 0.0
  %v2034 = vsel %vm333, %v1975, 0.0
  %v2035 = vsel %vm334, %v1974, 0.0
  %v2036 = vsel %vm335, %v1973, 0.0
  %v2037 = vpack.c.bf16 %v2006, %v2005
  %v2038 = vpack.c.bf16 %v2008, %v2007
  %v2039 = vpack.c.bf16 %v2010, %v2009
  %v2040 = vpack.c.bf16 %v2012, %v2011
  %v2041 = vpack.c.bf16 %v2014, %v2013
  %v2042 = vpack.c.bf16 %v2016, %v2015
  %v2043 = vpack.c.bf16 %v2018, %v2017
  %v2044 = vpack.c.bf16 %v2020, %v2019
  %v2045 = vpack.c.bf16 %v2022, %v2021
  %v2046 = vpack.c.bf16 %v2024, %v2023
  %v2047 = vpack.c.bf16 %v2026, %v2025
  %v2048 = vpack.c.bf16 %v2028, %v2027
  %v2049 = vpack.c.bf16 %v2030, %v2029
  %v2050 = vpack.c.bf16 %v2032, %v2031
  %v2051 = vpack.c.bf16 %v2034, %v2033
  %v2052 = vpack.c.bf16 %v2036, %v2035
  %s2053 = scalar_lea.vmem %s1, 384
  %v2054 = vld [vmem:[%s2053] sm:$0xff]
  %v2055 = vld [vmem:[%s2053 + $0x8] sm:$0xff]
  %v2056 = vld [vmem:[%s2053 + $0x10] sm:$0xff]
  %v2057 = vld [vmem:[%s2053 + $0x18] sm:$0xff]
  %v2058 = vld [vmem:[%s2053 + $0x20] sm:$0xff]
  %v2059 = vld [vmem:[%s2053 + $0x28] sm:$0xff]
  %v2060 = vld [vmem:[%s2053 + $0x30] sm:$0xff]
  %v2061 = vld [vmem:[%s2053 + $0x38] sm:$0xff]
  %v2062 = vld [vmem:[%s2053 + $0x40] sm:$0xff]
  %v2063 = vld [vmem:[%s2053 + $0x48] sm:$0xff]
  %v2064 = vld [vmem:[%s2053 + $0x50] sm:$0xff]
  %v2065 = vld [vmem:[%s2053 + $0x58] sm:$0xff]
  %v2066 = vld [vmem:[%s2053 + $0x60] sm:$0xff]
  %v2067 = vld [vmem:[%s2053 + $0x68] sm:$0xff]
  %v2068 = vld [vmem:[%s2053 + $0x70] sm:$0xff]
  %v2069 = vld [vmem:[%s2053 + $0x78] sm:$0xff]
  %v2086 = vunpack.c.l.b16 %v2054
  %v2087 = vunpack.c.h.b16 %v2054
  %v2088 = vunpack.c.l.b16 %v2055
  %v2089 = vunpack.c.h.b16 %v2055
  %v2090 = vunpack.c.l.b16 %v2056
  %v2091 = vunpack.c.h.b16 %v2056
  %v2092 = vunpack.c.l.b16 %v2057
  %v2093 = vunpack.c.h.b16 %v2057
  %v2094 = vunpack.c.l.b16 %v2058
  %v2095 = vunpack.c.h.b16 %v2058
  %v2096 = vunpack.c.l.b16 %v2059
  %v2097 = vunpack.c.h.b16 %v2059
  %v2098 = vunpack.c.l.b16 %v2060
  %v2099 = vunpack.c.h.b16 %v2060
  %v2100 = vunpack.c.l.b16 %v2061
  %v2101 = vunpack.c.h.b16 %v2061
  %v2102 = vunpack.c.l.b16 %v2062
  %v2103 = vunpack.c.h.b16 %v2062
  %v2104 = vunpack.c.l.b16 %v2063
  %v2105 = vunpack.c.h.b16 %v2063
  %v2106 = vunpack.c.l.b16 %v2064
  %v2107 = vunpack.c.h.b16 %v2064
  %v2108 = vunpack.c.l.b16 %v2065
  %v2109 = vunpack.c.h.b16 %v2065
  %v2110 = vunpack.c.l.b16 %v2066
  %v2111 = vunpack.c.h.b16 %v2066
  %v2112 = vunpack.c.l.b16 %v2067
  %v2113 = vunpack.c.h.b16 %v2067
  %v2114 = vunpack.c.l.b16 %v2068
  %v2115 = vunpack.c.h.b16 %v2068
  %v2116 = vunpack.c.l.b16 %v2069
  %v2117 = vunpack.c.h.b16 %v2069
  %v2118 = vpack.c.b16 %v2088, %v2086
  %v2119 = vpack.c.b16 %v2089, %v2087
  %v2120 = vpack.c.b16 %v2092, %v2090
  %v2121 = vpack.c.b16 %v2093, %v2091
  %v2122 = vpack.c.b16 %v2096, %v2094
  %v2123 = vpack.c.b16 %v2097, %v2095
  %v2124 = vpack.c.b16 %v2100, %v2098
  %v2125 = vpack.c.b16 %v2101, %v2099
  %v2126 = vpack.c.b16 %v2104, %v2102
  %v2127 = vpack.c.b16 %v2105, %v2103
  %v2128 = vpack.c.b16 %v2108, %v2106
  %v2129 = vpack.c.b16 %v2109, %v2107
  %v2130 = vpack.c.b16 %v2112, %v2110
  %v2131 = vpack.c.b16 %v2113, %v2111
  %v2132 = vpack.c.b16 %v2116, %v2114
  %v2133 = vpack.c.b16 %v2117, %v2115
  %2150 = vmatprep.subr.bf16.mxu0 %v2133
  %2151 = vmatpush1.bf16.msra.mxu0 %v2132
  %2152 = vmatprep.subr.bf16.mxu0 %v2131
  %2153 = vmatpush1.bf16.msra.mxu0 %v2130
  %2154 = vmatprep.subr.bf16.mxu0 %v2129
  %2155 = vmatpush1.bf16.msra.mxu0 %v2128
  %2156 = vmatprep.subr.bf16.mxu0 %v2127
  %2157 = vmatpush1.bf16.msra.mxu0 %v2126
  %2158 = vmatprep.subr.bf16.mxu0 %v2125
  %2159 = vmatpush1.bf16.msra.mxu0 %v2124
  %2160 = vmatprep.subr.bf16.mxu0 %v2123
  %2161 = vmatpush1.bf16.msra.mxu0 %v2122
  %2162 = vmatprep.subr.bf16.mxu0 %v2121
  %2163 = vmatpush1.bf16.msra.mxu0 %v2120
  %2164 = vmatprep.subr.bf16.mxu0 %v2119
  %2165 = vmatpush1.bf16.msra.mxu0 %v2118
  %2166 = vmatprep.subr.bf16.mxu0 0
  %2167 = vmatpush2.bf16.msra.mxu0 0
  %2168 = vmatprep.subr.bf16.mxu0 0
  %2169 = vmatpush2.bf16.msra.mxu0 0
  %2170 = vmatprep.subr.bf16.mxu0 0
  %2171 = vmatpush2.bf16.msra.mxu0 0
  %2172 = vmatprep.subr.bf16.mxu0 0
  %2173 = vmatpush2.bf16.msra.mxu0 0
  %2174 = vmatprep.subr.bf16.mxu0 0
  %2175 = vmatpush2.bf16.msra.mxu0 0
  %2176 = vmatprep.subr.bf16.mxu0 0
  %2177 = vmatpush2.bf16.msra.mxu0 0
  %2178 = vmatprep.subr.bf16.mxu0 0
  %2179 = vmatpush2.bf16.msra.mxu0 0
  %2180 = vmatprep.subr.bf16.mxu0 0
  %2181 = vmatpush2.bf16.msra.mxu0 0
  %2182 = vmatprep.mubr.bf16.mxu0 0
  %2183 = vmatmul.mubr.bf16.gmra.mxu0 %v2037
  %v2184 = vpop.f32.mrf.mxu0
  %v2185 = vadd.f32 0.0, %v2184
  %v2186 = vpop.f32.mrf.mxu0
  %v2187 = vadd.f32 0.0, %v2186
  %v2188 = vpop.f32.mrf.mxu0
  %v2189 = vadd.f32 0.0, %v2188
  %v2190 = vpop.f32.mrf.mxu0
  %v2191 = vadd.f32 0.0, %v2190
  %2192 = vmatprep.mubr.bf16.mxu0 0
  %2193 = vmatmul.mubr.bf16.gmra.mxu0 %v2038
  %v2194 = vpop.f32.mrf.mxu0
  %v2195 = vadd.f32 0.0, %v2194
  %v2196 = vpop.f32.mrf.mxu0
  %v2197 = vadd.f32 0.0, %v2196
  %v2198 = vpop.f32.mrf.mxu0
  %v2199 = vadd.f32 0.0, %v2198
  %v2200 = vpop.f32.mrf.mxu0
  %v2201 = vadd.f32 0.0, %v2200
  %2202 = vmatprep.mubr.bf16.mxu0 0
  %2203 = vmatmul.mubr.bf16.gmra.mxu0 %v2039
  %v2204 = vpop.f32.mrf.mxu0
  %v2205 = vadd.f32 0.0, %v2204
  %v2206 = vpop.f32.mrf.mxu0
  %v2207 = vadd.f32 0.0, %v2206
  %v2208 = vpop.f32.mrf.mxu0
  %v2209 = vadd.f32 0.0, %v2208
  %v2210 = vpop.f32.mrf.mxu0
  %v2211 = vadd.f32 0.0, %v2210
  %2212 = vmatprep.mubr.bf16.mxu0 0
  %2213 = vmatmul.mubr.bf16.gmra.mxu0 %v2040
  %v2214 = vpop.f32.mrf.mxu0
  %v2215 = vadd.f32 0.0, %v2214
  %v2216 = vpop.f32.mrf.mxu0
  %v2217 = vadd.f32 0.0, %v2216
  %v2218 = vpop.f32.mrf.mxu0
  %v2219 = vadd.f32 0.0, %v2218
  %v2220 = vpop.f32.mrf.mxu0
  %v2221 = vadd.f32 0.0, %v2220
  %2222 = vmatprep.mubr.bf16.mxu0 0
  %2223 = vmatmul.mubr.bf16.gmra.mxu0 %v2041
  %v2224 = vpop.f32.mrf.mxu0
  %v2225 = vadd.f32 0.0, %v2224
  %v2226 = vpop.f32.mrf.mxu0
  %v2227 = vadd.f32 0.0, %v2226
  %v2228 = vpop.f32.mrf.mxu0
  %v2229 = vadd.f32 0.0, %v2228
  %v2230 = vpop.f32.mrf.mxu0
  %v2231 = vadd.f32 0.0, %v2230
  %2232 = vmatprep.mubr.bf16.mxu0 0
  %2233 = vmatmul.mubr.bf16.gmra.mxu0 %v2042
  %v2234 = vpop.f32.mrf.mxu0
  %v2235 = vadd.f32 0.0, %v2234
  %v2236 = vpop.f32.mrf.mxu0
  %v2237 = vadd.f32 0.0, %v2236
  %v2238 = vpop.f32.mrf.mxu0
  %v2239 = vadd.f32 0.0, %v2238
  %v2240 = vpop.f32.mrf.mxu0
  %v2241 = vadd.f32 0.0, %v2240
  %2242 = vmatprep.mubr.bf16.mxu0 0
  %2243 = vmatmul.mubr.bf16.gmra.mxu0 %v2043
  %v2244 = vpop.f32.mrf.mxu0
  %v2245 = vadd.f32 0.0, %v2244
  %v2246 = vpop.f32.mrf.mxu0
  %v2247 = vadd.f32 0.0, %v2246
  %v2248 = vpop.f32.mrf.mxu0
  %v2249 = vadd.f32 0.0, %v2248
  %v2250 = vpop.f32.mrf.mxu0
  %v2251 = vadd.f32 0.0, %v2250
  %2252 = vmatprep.mubr.bf16.mxu0 0
  %2253 = vmatmul.mubr.bf16.gmra.mxu0 %v2044
  %v2254 = vpop.f32.mrf.mxu0
  %v2255 = vadd.f32 0.0, %v2254
  %v2256 = vpop.f32.mrf.mxu0
  %v2257 = vadd.f32 0.0, %v2256
  %v2258 = vpop.f32.mrf.mxu0
  %v2259 = vadd.f32 0.0, %v2258
  %v2260 = vpop.f32.mrf.mxu0
  %v2261 = vadd.f32 0.0, %v2260
  %2262 = vmatprep.mubr.bf16.mxu0 0
  %2263 = vmatmul.mubr.bf16.gmra.mxu0 %v2045
  %v2264 = vpop.f32.mrf.mxu0
  %v2265 = vadd.f32 0.0, %v2264
  %v2266 = vpop.f32.mrf.mxu0
  %v2267 = vadd.f32 0.0, %v2266
  %v2268 = vpop.f32.mrf.mxu0
  %v2269 = vadd.f32 0.0, %v2268
  %v2270 = vpop.f32.mrf.mxu0
  %v2271 = vadd.f32 0.0, %v2270
  %2272 = vmatprep.mubr.bf16.mxu0 0
  %2273 = vmatmul.mubr.bf16.gmra.mxu0 %v2046
  %v2274 = vpop.f32.mrf.mxu0
  %v2275 = vadd.f32 0.0, %v2274
  %v2276 = vpop.f32.mrf.mxu0
  %v2277 = vadd.f32 0.0, %v2276
  %v2278 = vpop.f32.mrf.mxu0
  %v2279 = vadd.f32 0.0, %v2278
  %v2280 = vpop.f32.mrf.mxu0
  %v2281 = vadd.f32 0.0, %v2280
  %2282 = vmatprep.mubr.bf16.mxu0 0
  %2283 = vmatmul.mubr.bf16.gmra.mxu0 %v2047
  %v2284 = vpop.f32.mrf.mxu0
  %v2285 = vadd.f32 0.0, %v2284
  %v2286 = vpop.f32.mrf.mxu0
  %v2287 = vadd.f32 0.0, %v2286
  %v2288 = vpop.f32.mrf.mxu0
  %v2289 = vadd.f32 0.0, %v2288
  %v2290 = vpop.f32.mrf.mxu0
  %v2291 = vadd.f32 0.0, %v2290
  %2292 = vmatprep.mubr.bf16.mxu0 0
  %2293 = vmatmul.mubr.bf16.gmra.mxu0 %v2048
  %v2294 = vpop.f32.mrf.mxu0
  %v2295 = vadd.f32 0.0, %v2294
  %v2296 = vpop.f32.mrf.mxu0
  %v2297 = vadd.f32 0.0, %v2296
  %v2298 = vpop.f32.mrf.mxu0
  %v2299 = vadd.f32 0.0, %v2298
  %v2300 = vpop.f32.mrf.mxu0
  %v2301 = vadd.f32 0.0, %v2300
  %2302 = vmatprep.mubr.bf16.mxu0 0
  %2303 = vmatmul.mubr.bf16.gmra.mxu0 %v2049
  %v2304 = vpop.f32.mrf.mxu0
  %v2305 = vadd.f32 0.0, %v2304
  %v2306 = vpop.f32.mrf.mxu0
  %v2307 = vadd.f32 0.0, %v2306
  %v2308 = vpop.f32.mrf.mxu0
  %v2309 = vadd.f32 0.0, %v2308
  %v2310 = vpop.f32.mrf.mxu0
  %v2311 = vadd.f32 0.0, %v2310
  %2312 = vmatprep.mubr.bf16.mxu0 0
  %2313 = vmatmul.mubr.bf16.gmra.mxu0 %v2050
  %v2314 = vpop.f32.mrf.mxu0
  %v2315 = vadd.f32 0.0, %v2314
  %v2316 = vpop.f32.mrf.mxu0
  %v2317 = vadd.f32 0.0, %v2316
  %v2318 = vpop.f32.mrf.mxu0
  %v2319 = vadd.f32 0.0, %v2318
  %v2320 = vpop.f32.mrf.mxu0
  %v2321 = vadd.f32 0.0, %v2320
  %2322 = vmatprep.mubr.bf16.mxu0 0
  %2323 = vmatmul.mubr.bf16.gmra.mxu0 %v2051
  %v2324 = vpop.f32.mrf.mxu0
  %v2325 = vadd.f32 0.0, %v2324
  %v2326 = vpop.f32.mrf.mxu0
  %v2327 = vadd.f32 0.0, %v2326
  %v2328 = vpop.f32.mrf.mxu0
  %v2329 = vadd.f32 0.0, %v2328
  %v2330 = vpop.f32.mrf.mxu0
  %v2331 = vadd.f32 0.0, %v2330
  %2332 = vmatprep.mubr.bf16.mxu0 0
  %2333 = vmatmul.mubr.bf16.gmra.mxu0 %v2052
  %v2334 = vpop.f32.mrf.mxu0
  %v2335 = vadd.f32 0.0, %v2334
  %v2336 = vpop.f32.mrf.mxu0
  %v2337 = vadd.f32 0.0, %v2336
  %v2338 = vpop.f32.mrf.mxu0
  %v2339 = vadd.f32 0.0, %v2338
  %v2340 = vpop.f32.mrf.mxu0
  %v2341 = vadd.f32 0.0, %v2340
  %2342 = vdwg.mxu0
  %v2344 = vlaneseq
  %v2345 = vshrl.u32 %v2344, 7
  %v2346 = vsub.s32 0, %v2345
  %v2347 = vrot.slane %v1940, %v2346
  %v2348 = vlaneseq
  %v2349 = vshrl.u32 %v2348, 7
  %v2350 = vsub.s32 1, %v2349
  %v2351 = vrot.slane %v1940, %v2350
  %v2354 = vadd.f32 %v2347, %v2185
  %v2355 = vadd.f32 %v2351, %v2187
  %v2356 = vadd.f32 %v2347, %v2189
  %v2357 = vadd.f32 %v2351, %v2191
  %v2358 = vadd.f32 %v2347, %v2195
  %v2359 = vadd.f32 %v2351, %v2197
  %v2360 = vadd.f32 %v2347, %v2199
  %v2361 = vadd.f32 %v2351, %v2201
  %v2362 = vadd.f32 %v2347, %v2205
  %v2363 = vadd.f32 %v2351, %v2207
  %v2364 = vadd.f32 %v2347, %v2209
  %v2365 = vadd.f32 %v2351, %v2211
  %v2366 = vadd.f32 %v2347, %v2215
  %v2367 = vadd.f32 %v2351, %v2217
  %v2368 = vadd.f32 %v2347, %v2219
  %v2369 = vadd.f32 %v2351, %v2221
  %v2370 = vadd.f32 %v2347, %v2225
  %v2371 = vadd.f32 %v2351, %v2227
  %v2372 = vadd.f32 %v2347, %v2229
  %v2373 = vadd.f32 %v2351, %v2231
  %v2374 = vadd.f32 %v2347, %v2235
  %v2375 = vadd.f32 %v2351, %v2237
  %v2376 = vadd.f32 %v2347, %v2239
  %v2377 = vadd.f32 %v2351, %v2241
  %v2378 = vadd.f32 %v2347, %v2245
  %v2379 = vadd.f32 %v2351, %v2247
  %v2380 = vadd.f32 %v2347, %v2249
  %v2381 = vadd.f32 %v2351, %v2251
  %v2382 = vadd.f32 %v2347, %v2255
  %v2383 = vadd.f32 %v2351, %v2257
  %v2384 = vadd.f32 %v2347, %v2259
  %v2385 = vadd.f32 %v2351, %v2261
  %v2386 = vadd.f32 %v2347, %v2265
  %v2387 = vadd.f32 %v2351, %v2267
  %v2388 = vadd.f32 %v2347, %v2269
  %v2389 = vadd.f32 %v2351, %v2271
  %v2390 = vadd.f32 %v2347, %v2275
  %v2391 = vadd.f32 %v2351, %v2277
  %v2392 = vadd.f32 %v2347, %v2279
  %v2393 = vadd.f32 %v2351, %v2281
  %v2394 = vadd.f32 %v2347, %v2285
  %v2395 = vadd.f32 %v2351, %v2287
  %v2396 = vadd.f32 %v2347, %v2289
  %v2397 = vadd.f32 %v2351, %v2291
  %v2398 = vadd.f32 %v2347, %v2295
  %v2399 = vadd.f32 %v2351, %v2297
  %v2400 = vadd.f32 %v2347, %v2299
  %v2401 = vadd.f32 %v2351, %v2301
  %v2402 = vadd.f32 %v2347, %v2305
  %v2403 = vadd.f32 %v2351, %v2307
  %v2404 = vadd.f32 %v2347, %v2309
  %v2405 = vadd.f32 %v2351, %v2311
  %v2406 = vadd.f32 %v2347, %v2315
  %v2407 = vadd.f32 %v2351, %v2317
  %v2408 = vadd.f32 %v2347, %v2319
  %v2409 = vadd.f32 %v2351, %v2321
  %v2410 = vadd.f32 %v2347, %v2325
  %v2411 = vadd.f32 %v2351, %v2327
  %v2412 = vadd.f32 %v2347, %v2329
  %v2413 = vadd.f32 %v2351, %v2331
  %v2414 = vadd.f32 %v2347, %v2335
  %v2415 = vadd.f32 %v2351, %v2337
  %v2416 = vadd.f32 %v2347, %v2339
  %v2417 = vadd.f32 %v2351, %v2341
  %v2418 = vpack.c.bf16 %v1908, %v1907
  %v2419 = vpack.c.bf16 %v1910, %v1909
  %v2420 = vpack.c.bf16 %v1912, %v1911
  %v2421 = vpack.c.bf16 %v1914, %v1913
  %v2422 = vpack.c.bf16 %v1916, %v1915
  %v2423 = vpack.c.bf16 %v1918, %v1917
  %v2424 = vpack.c.bf16 %v1920, %v1919
  %v2425 = vpack.c.bf16 %v1922, %v1921
  %v2426 = vpack.c.bf16 %v1924, %v1923
  %v2427 = vpack.c.bf16 %v1926, %v1925
  %v2428 = vpack.c.bf16 %v1928, %v1927
  %v2429 = vpack.c.bf16 %v1930, %v1929
  %v2430 = vpack.c.bf16 %v1932, %v1931
  %v2431 = vpack.c.bf16 %v1934, %v1933
  %v2432 = vpack.c.bf16 %v1936, %v1935
  %v2433 = vpack.c.bf16 %v1938, %v1937
  %s2434 = scalar_lea.vmem %s1, 512
  %v2435 = vld [vmem:[%s2434] sm:$0xff]
  %v2436 = vld [vmem:[%s2434 + $0x8] sm:$0xff]
  %v2437 = vld [vmem:[%s2434 + $0x10] sm:$0xff]
  %v2438 = vld [vmem:[%s2434 + $0x18] sm:$0xff]
  %v2439 = vld [vmem:[%s2434 + $0x20] sm:$0xff]
  %v2440 = vld [vmem:[%s2434 + $0x28] sm:$0xff]
  %v2441 = vld [vmem:[%s2434 + $0x30] sm:$0xff]
  %v2442 = vld [vmem:[%s2434 + $0x38] sm:$0xff]
  %v2443 = vld [vmem:[%s2434 + $0x40] sm:$0xff]
  %v2444 = vld [vmem:[%s2434 + $0x48] sm:$0xff]
  %v2445 = vld [vmem:[%s2434 + $0x50] sm:$0xff]
  %v2446 = vld [vmem:[%s2434 + $0x58] sm:$0xff]
  %v2447 = vld [vmem:[%s2434 + $0x60] sm:$0xff]
  %v2448 = vld [vmem:[%s2434 + $0x68] sm:$0xff]
  %v2449 = vld [vmem:[%s2434 + $0x70] sm:$0xff]
  %v2450 = vld [vmem:[%s2434 + $0x78] sm:$0xff]
  %v2467 = vunpack.c.l.b16 %v2435
  %v2468 = vunpack.c.h.b16 %v2435
  %v2469 = vunpack.c.l.b16 %v2436
  %v2470 = vunpack.c.h.b16 %v2436
  %v2471 = vunpack.c.l.b16 %v2437
  %v2472 = vunpack.c.h.b16 %v2437
  %v2473 = vunpack.c.l.b16 %v2438
  %v2474 = vunpack.c.h.b16 %v2438
  %v2475 = vunpack.c.l.b16 %v2439
  %v2476 = vunpack.c.h.b16 %v2439
  %v2477 = vunpack.c.l.b16 %v2440
  %v2478 = vunpack.c.h.b16 %v2440
  %v2479 = vunpack.c.l.b16 %v2441
  %v2480 = vunpack.c.h.b16 %v2441
  %v2481 = vunpack.c.l.b16 %v2442
  %v2482 = vunpack.c.h.b16 %v2442
  %v2483 = vunpack.c.l.b16 %v2443
  %v2484 = vunpack.c.h.b16 %v2443
  %v2485 = vunpack.c.l.b16 %v2444
  %v2486 = vunpack.c.h.b16 %v2444
  %v2487 = vunpack.c.l.b16 %v2445
  %v2488 = vunpack.c.h.b16 %v2445
  %v2489 = vunpack.c.l.b16 %v2446
  %v2490 = vunpack.c.h.b16 %v2446
  %v2491 = vunpack.c.l.b16 %v2447
  %v2492 = vunpack.c.h.b16 %v2447
  %v2493 = vunpack.c.l.b16 %v2448
  %v2494 = vunpack.c.h.b16 %v2448
  %v2495 = vunpack.c.l.b16 %v2449
  %v2496 = vunpack.c.h.b16 %v2449
  %v2497 = vunpack.c.l.b16 %v2450
  %v2498 = vunpack.c.h.b16 %v2450
  %v2499 = vpack.c.b16 %v2469, %v2467
  %v2500 = vpack.c.b16 %v2470, %v2468
  %v2501 = vpack.c.b16 %v2473, %v2471
  %v2502 = vpack.c.b16 %v2474, %v2472
  %v2503 = vpack.c.b16 %v2477, %v2475
  %v2504 = vpack.c.b16 %v2478, %v2476
  %v2505 = vpack.c.b16 %v2481, %v2479
  %v2506 = vpack.c.b16 %v2482, %v2480
  %v2507 = vpack.c.b16 %v2485, %v2483
  %v2508 = vpack.c.b16 %v2486, %v2484
  %v2509 = vpack.c.b16 %v2489, %v2487
  %v2510 = vpack.c.b16 %v2490, %v2488
  %v2511 = vpack.c.b16 %v2493, %v2491
  %v2512 = vpack.c.b16 %v2494, %v2492
  %v2513 = vpack.c.b16 %v2497, %v2495
  %v2514 = vpack.c.b16 %v2498, %v2496
  %2531 = vmatprep.subr.bf16.mxu0 %v2514
  %2532 = vmatpush1.bf16.msra.mxu0 %v2513
  %2533 = vmatprep.subr.bf16.mxu0 %v2512
  %2534 = vmatpush1.bf16.msra.mxu0 %v2511
  %2535 = vmatprep.subr.bf16.mxu0 %v2510
  %2536 = vmatpush1.bf16.msra.mxu0 %v2509
  %2537 = vmatprep.subr.bf16.mxu0 %v2508
  %2538 = vmatpush1.bf16.msra.mxu0 %v2507
  %2539 = vmatprep.subr.bf16.mxu0 %v2506
  %2540 = vmatpush1.bf16.msra.mxu0 %v2505
  %2541 = vmatprep.subr.bf16.mxu0 %v2504
  %2542 = vmatpush1.bf16.msra.mxu0 %v2503
  %2543 = vmatprep.subr.bf16.mxu0 %v2502
  %2544 = vmatpush1.bf16.msra.mxu0 %v2501
  %2545 = vmatprep.subr.bf16.mxu0 %v2500
  %2546 = vmatpush1.bf16.msra.mxu0 %v2499
  %2547 = vmatprep.subr.bf16.mxu0 0
  %2548 = vmatpush2.bf16.msra.mxu0 0
  %2549 = vmatprep.subr.bf16.mxu0 0
  %2550 = vmatpush2.bf16.msra.mxu0 0
  %2551 = vmatprep.subr.bf16.mxu0 0
  %2552 = vmatpush2.bf16.msra.mxu0 0
  %2553 = vmatprep.subr.bf16.mxu0 0
  %2554 = vmatpush2.bf16.msra.mxu0 0
  %2555 = vmatprep.subr.bf16.mxu0 0
  %2556 = vmatpush2.bf16.msra.mxu0 0
  %2557 = vmatprep.subr.bf16.mxu0 0
  %2558 = vmatpush2.bf16.msra.mxu0 0
  %2559 = vmatprep.subr.bf16.mxu0 0
  %2560 = vmatpush2.bf16.msra.mxu0 0
  %2561 = vmatprep.subr.bf16.mxu0 0
  %2562 = vmatpush2.bf16.msra.mxu0 0
  %2563 = vmatprep.mubr.bf16.mxu0 0
  %2564 = vmatmul.mubr.bf16.gmra.mxu0 %v2418
  %v2565 = vpop.f32.mrf.mxu0
  %v2566 = vadd.f32 0.0, %v2565
  %v2567 = vpop.f32.mrf.mxu0
  %v2568 = vadd.f32 0.0, %v2567
  %v2569 = vpop.f32.mrf.mxu0
  %v2570 = vadd.f32 0.0, %v2569
  %v2571 = vpop.f32.mrf.mxu0
  %v2572 = vadd.f32 0.0, %v2571
  %2573 = vmatprep.mubr.bf16.mxu0 0
  %2574 = vmatmul.mubr.bf16.gmra.mxu0 %v2419
  %v2575 = vpop.f32.mrf.mxu0
  %v2576 = vadd.f32 0.0, %v2575
  %v2577 = vpop.f32.mrf.mxu0
  %v2578 = vadd.f32 0.0, %v2577
  %v2579 = vpop.f32.mrf.mxu0
  %v2580 = vadd.f32 0.0, %v2579
  %v2581 = vpop.f32.mrf.mxu0
  %v2582 = vadd.f32 0.0, %v2581
  %2583 = vmatprep.mubr.bf16.mxu0 0
  %2584 = vmatmul.mubr.bf16.gmra.mxu0 %v2420
  %v2585 = vpop.f32.mrf.mxu0
  %v2586 = vadd.f32 0.0, %v2585
  %v2587 = vpop.f32.mrf.mxu0
  %v2588 = vadd.f32 0.0, %v2587
  %v2589 = vpop.f32.mrf.mxu0
  %v2590 = vadd.f32 0.0, %v2589
  %v2591 = vpop.f32.mrf.mxu0
  %v2592 = vadd.f32 0.0, %v2591
  %2593 = vmatprep.mubr.bf16.mxu0 0
  %2594 = vmatmul.mubr.bf16.gmra.mxu0 %v2421
  %v2595 = vpop.f32.mrf.mxu0
  %v2596 = vadd.f32 0.0, %v2595
  %v2597 = vpop.f32.mrf.mxu0
  %v2598 = vadd.f32 0.0, %v2597
  %v2599 = vpop.f32.mrf.mxu0
  %v2600 = vadd.f32 0.0, %v2599
  %v2601 = vpop.f32.mrf.mxu0
  %v2602 = vadd.f32 0.0, %v2601
  %2603 = vmatprep.mubr.bf16.mxu0 0
  %2604 = vmatmul.mubr.bf16.gmra.mxu0 %v2422
  %v2605 = vpop.f32.mrf.mxu0
  %v2606 = vadd.f32 0.0, %v2605
  %v2607 = vpop.f32.mrf.mxu0
  %v2608 = vadd.f32 0.0, %v2607
  %v2609 = vpop.f32.mrf.mxu0
  %v2610 = vadd.f32 0.0, %v2609
  %v2611 = vpop.f32.mrf.mxu0
  %v2612 = vadd.f32 0.0, %v2611
  %2613 = vmatprep.mubr.bf16.mxu0 0
  %2614 = vmatmul.mubr.bf16.gmra.mxu0 %v2423
  %v2615 = vpop.f32.mrf.mxu0
  %v2616 = vadd.f32 0.0, %v2615
  %v2617 = vpop.f32.mrf.mxu0
  %v2618 = vadd.f32 0.0, %v2617
  %v2619 = vpop.f32.mrf.mxu0
  %v2620 = vadd.f32 0.0, %v2619
  %v2621 = vpop.f32.mrf.mxu0
  %v2622 = vadd.f32 0.0, %v2621
  %2623 = vmatprep.mubr.bf16.mxu0 0
  %2624 = vmatmul.mubr.bf16.gmra.mxu0 %v2424
  %v2625 = vpop.f32.mrf.mxu0
  %v2626 = vadd.f32 0.0, %v2625
  %v2627 = vpop.f32.mrf.mxu0
  %v2628 = vadd.f32 0.0, %v2627
  %v2629 = vpop.f32.mrf.mxu0
  %v2630 = vadd.f32 0.0, %v2629
  %v2631 = vpop.f32.mrf.mxu0
  %v2632 = vadd.f32 0.0, %v2631
  %2633 = vmatprep.mubr.bf16.mxu0 0
  %2634 = vmatmul.mubr.bf16.gmra.mxu0 %v2425
  %v2635 = vpop.f32.mrf.mxu0
  %v2636 = vadd.f32 0.0, %v2635
  %v2637 = vpop.f32.mrf.mxu0
  %v2638 = vadd.f32 0.0, %v2637
  %v2639 = vpop.f32.mrf.mxu0
  %v2640 = vadd.f32 0.0, %v2639
  %v2641 = vpop.f32.mrf.mxu0
  %v2642 = vadd.f32 0.0, %v2641
  %2643 = vmatprep.mubr.bf16.mxu0 0
  %2644 = vmatmul.mubr.bf16.gmra.mxu0 %v2426
  %v2645 = vpop.f32.mrf.mxu0
  %v2646 = vadd.f32 0.0, %v2645
  %v2647 = vpop.f32.mrf.mxu0
  %v2648 = vadd.f32 0.0, %v2647
  %v2649 = vpop.f32.mrf.mxu0
  %v2650 = vadd.f32 0.0, %v2649
  %v2651 = vpop.f32.mrf.mxu0
  %v2652 = vadd.f32 0.0, %v2651
  %2653 = vmatprep.mubr.bf16.mxu0 0
  %2654 = vmatmul.mubr.bf16.gmra.mxu0 %v2427
  %v2655 = vpop.f32.mrf.mxu0
  %v2656 = vadd.f32 0.0, %v2655
  %v2657 = vpop.f32.mrf.mxu0
  %v2658 = vadd.f32 0.0, %v2657
  %v2659 = vpop.f32.mrf.mxu0
  %v2660 = vadd.f32 0.0, %v2659
  %v2661 = vpop.f32.mrf.mxu0
  %v2662 = vadd.f32 0.0, %v2661
  %2663 = vmatprep.mubr.bf16.mxu0 0
  %2664 = vmatmul.mubr.bf16.gmra.mxu0 %v2428
  %v2665 = vpop.f32.mrf.mxu0
  %v2666 = vadd.f32 0.0, %v2665
  %v2667 = vpop.f32.mrf.mxu0
  %v2668 = vadd.f32 0.0, %v2667
  %v2669 = vpop.f32.mrf.mxu0
  %v2670 = vadd.f32 0.0, %v2669
  %v2671 = vpop.f32.mrf.mxu0
  %v2672 = vadd.f32 0.0, %v2671
  %2673 = vmatprep.mubr.bf16.mxu0 0
  %2674 = vmatmul.mubr.bf16.gmra.mxu0 %v2429
  %v2675 = vpop.f32.mrf.mxu0
  %v2676 = vadd.f32 0.0, %v2675
  %v2677 = vpop.f32.mrf.mxu0
  %v2678 = vadd.f32 0.0, %v2677
  %v2679 = vpop.f32.mrf.mxu0
  %v2680 = vadd.f32 0.0, %v2679
  %v2681 = vpop.f32.mrf.mxu0
  %v2682 = vadd.f32 0.0, %v2681
  %2683 = vmatprep.mubr.bf16.mxu0 0
  %2684 = vmatmul.mubr.bf16.gmra.mxu0 %v2430
  %v2685 = vpop.f32.mrf.mxu0
  %v2686 = vadd.f32 0.0, %v2685
  %v2687 = vpop.f32.mrf.mxu0
  %v2688 = vadd.f32 0.0, %v2687
  %v2689 = vpop.f32.mrf.mxu0
  %v2690 = vadd.f32 0.0, %v2689
  %v2691 = vpop.f32.mrf.mxu0
  %v2692 = vadd.f32 0.0, %v2691
  %2693 = vmatprep.mubr.bf16.mxu0 0
  %2694 = vmatmul.mubr.bf16.gmra.mxu0 %v2431
  %v2695 = vpop.f32.mrf.mxu0
  %v2696 = vadd.f32 0.0, %v2695
  %v2697 = vpop.f32.mrf.mxu0
  %v2698 = vadd.f32 0.0, %v2697
  %v2699 = vpop.f32.mrf.mxu0
  %v2700 = vadd.f32 0.0, %v2699
  %v2701 = vpop.f32.mrf.mxu0
  %v2702 = vadd.f32 0.0, %v2701
  %2703 = vmatprep.mubr.bf16.mxu0 0
  %2704 = vmatmul.mubr.bf16.gmra.mxu0 %v2432
  %v2705 = vpop.f32.mrf.mxu0
  %v2706 = vadd.f32 0.0, %v2705
  %v2707 = vpop.f32.mrf.mxu0
  %v2708 = vadd.f32 0.0, %v2707
  %v2709 = vpop.f32.mrf.mxu0
  %v2710 = vadd.f32 0.0, %v2709
  %v2711 = vpop.f32.mrf.mxu0
  %v2712 = vadd.f32 0.0, %v2711
  %2713 = vmatprep.mubr.bf16.mxu0 0
  %2714 = vmatmul.mubr.bf16.gmra.mxu0 %v2433
  %v2715 = vpop.f32.mrf.mxu0
  %v2716 = vadd.f32 0.0, %v2715
  %v2717 = vpop.f32.mrf.mxu0
  %v2718 = vadd.f32 0.0, %v2717
  %v2719 = vpop.f32.mrf.mxu0
  %v2720 = vadd.f32 0.0, %v2719
  %v2721 = vpop.f32.mrf.mxu0
  %v2722 = vadd.f32 0.0, %v2721
  %2723 = vdwg.mxu0
  %v2724 = vadd.f32 %v2354, %v2566
  %v2725 = vadd.f32 %v2355, %v2568
  %v2726 = vadd.f32 %v2356, %v2570
  %v2727 = vadd.f32 %v2357, %v2572
  %v2728 = vadd.f32 %v2358, %v2576
  %v2729 = vadd.f32 %v2359, %v2578
  %v2730 = vadd.f32 %v2360, %v2580
  %v2731 = vadd.f32 %v2361, %v2582
  %v2732 = vadd.f32 %v2362, %v2586
  %v2733 = vadd.f32 %v2363, %v2588
  %v2734 = vadd.f32 %v2364, %v2590
  %v2735 = vadd.f32 %v2365, %v2592
  %v2736 = vadd.f32 %v2366, %v2596
  %v2737 = vadd.f32 %v2367, %v2598
  %v2738 = vadd.f32 %v2368, %v2600
  %v2739 = vadd.f32 %v2369, %v2602
  %v2740 = vadd.f32 %v2370, %v2606
  %v2741 = vadd.f32 %v2371, %v2608
  %v2742 = vadd.f32 %v2372, %v2610
  %v2743 = vadd.f32 %v2373, %v2612
  %v2744 = vadd.f32 %v2374, %v2616
  %v2745 = vadd.f32 %v2375, %v2618
  %v2746 = vadd.f32 %v2376, %v2620
  %v2747 = vadd.f32 %v2377, %v2622
  %v2748 = vadd.f32 %v2378, %v2626
  %v2749 = vadd.f32 %v2379, %v2628
  %v2750 = vadd.f32 %v2380, %v2630
  %v2751 = vadd.f32 %v2381, %v2632
  %v2752 = vadd.f32 %v2382, %v2636
  %v2753 = vadd.f32 %v2383, %v2638
  %v2754 = vadd.f32 %v2384, %v2640
  %v2755 = vadd.f32 %v2385, %v2642
  %v2756 = vadd.f32 %v2386, %v2646
  %v2757 = vadd.f32 %v2387, %v2648
  %v2758 = vadd.f32 %v2388, %v2650
  %v2759 = vadd.f32 %v2389, %v2652
  %v2760 = vadd.f32 %v2390, %v2656
  %v2761 = vadd.f32 %v2391, %v2658
  %v2762 = vadd.f32 %v2392, %v2660
  %v2763 = vadd.f32 %v2393, %v2662
  %v2764 = vadd.f32 %v2394, %v2666
  %v2765 = vadd.f32 %v2395, %v2668
  %v2766 = vadd.f32 %v2396, %v2670
  %v2767 = vadd.f32 %v2397, %v2672
  %v2768 = vadd.f32 %v2398, %v2676
  %v2769 = vadd.f32 %v2399, %v2678
  %v2770 = vadd.f32 %v2400, %v2680
  %v2771 = vadd.f32 %v2401, %v2682
  %v2772 = vadd.f32 %v2402, %v2686
  %v2773 = vadd.f32 %v2403, %v2688
  %v2774 = vadd.f32 %v2404, %v2690
  %v2775 = vadd.f32 %v2405, %v2692
  %v2776 = vadd.f32 %v2406, %v2696
  %v2777 = vadd.f32 %v2407, %v2698
  %v2778 = vadd.f32 %v2408, %v2700
  %v2779 = vadd.f32 %v2409, %v2702
  %v2780 = vadd.f32 %v2410, %v2706
  %v2781 = vadd.f32 %v2411, %v2708
  %v2782 = vadd.f32 %v2412, %v2710
  %v2783 = vadd.f32 %v2413, %v2712
  %v2784 = vadd.f32 %v2414, %v2716
  %v2785 = vadd.f32 %v2415, %v2718
  %v2786 = vadd.f32 %v2416, %v2720
  %v2787 = vadd.f32 %v2417, %v2722
  %v2788 = vrot.slane %v1907, 1
  %v2789 = vrot.slane %v1908, 1
  %v2790 = vrot.slane %v1909, 1
  %v2791 = vrot.slane %v1910, 1
  %v2792 = vrot.slane %v1911, 1
  %v2793 = vrot.slane %v1912, 1
  %v2794 = vrot.slane %v1913, 1
  %v2795 = vrot.slane %v1914, 1
  %v2796 = vrot.slane %v1915, 1
  %v2797 = vrot.slane %v1916, 1
  %v2798 = vrot.slane %v1917, 1
  %v2799 = vrot.slane %v1918, 1
  %v2800 = vrot.slane %v1919, 1
  %v2801 = vrot.slane %v1920, 1
  %v2802 = vrot.slane %v1921, 1
  %v2803 = vrot.slane %v1922, 1
  %v2804 = vrot.slane %v1923, 1
  %v2805 = vrot.slane %v1924, 1
  %v2806 = vrot.slane %v1925, 1
  %v2807 = vrot.slane %v1926, 1
  %v2808 = vrot.slane %v1927, 1
  %v2809 = vrot.slane %v1928, 1
  %v2810 = vrot.slane %v1929, 1
  %v2811 = vrot.slane %v1930, 1
  %v2812 = vrot.slane %v1931, 1
  %v2813 = vrot.slane %v1932, 1
  %v2814 = vrot.slane %v1933, 1
  %v2815 = vrot.slane %v1934, 1
  %v2816 = vrot.slane %v1935, 1
  %v2817 = vrot.slane %v1936, 1
  %v2818 = vrot.slane %v1937, 1
  %v2819 = vrot.slane %v1938, 1
  %v2820 = vsel %vm1248, %v2818, %v2819
  %v2821 = vsel %vm1248, %v2817, %v2818
  %v2822 = vsel %vm1248, %v2816, %v2817
  %v2823 = vsel %vm1248, %v2815, %v2816
  %v2824 = vsel %vm1248, %v2814, %v2815
  %v2825 = vsel %vm1248, %v2813, %v2814
  %v2826 = vsel %vm1248, %v2812, %v2813
  %v2827 = vsel %vm1248, %v2811, %v2812
  %v2828 = vsel %vm1248, %v2810, %v2811
  %v2829 = vsel %vm1248, %v2809, %v2810
  %v2830 = vsel %vm1248, %v2808, %v2809
  %v2831 = vsel %vm1248, %v2807, %v2808
  %v2832 = vsel %vm1248, %v2806, %v2807
  %v2833 = vsel %vm1248, %v2805, %v2806
  %v2834 = vsel %vm1248, %v2804, %v2805
  %v2835 = vsel %vm1248, %v2803, %v2804
  %v2836 = vsel %vm1248, %v2802, %v2803
  %v2837 = vsel %vm1248, %v2801, %v2802
  %v2838 = vsel %vm1248, %v2800, %v2801
  %v2839 = vsel %vm1248, %v2799, %v2800
  %v2840 = vsel %vm1248, %v2798, %v2799
  %v2841 = vsel %vm1248, %v2797, %v2798
  %v2842 = vsel %vm1248, %v2796, %v2797
  %v2843 = vsel %vm1248, %v2795, %v2796
  %v2844 = vsel %vm1248, %v2794, %v2795
  %v2845 = vsel %vm1248, %v2793, %v2794
  %v2846 = vsel %vm1248, %v2792, %v2793
  %v2847 = vsel %vm1248, %v2791, %v2792
  %v2848 = vsel %vm1248, %v2790, %v2791
  %v2849 = vsel %vm1248, %v2789, %v2790
  %v2850 = vsel %vm1248, %v2788, %v2789
  %v2851 = vsel %vm1248, %v2819, %v2788
  %v2852 = vsel %vm336, %v2850, 0.0
  %v2853 = vsel %vm337, %v2849, 0.0
  %v2854 = vsel %vm338, %v2848, 0.0
  %v2855 = vsel %vm339, %v2847, 0.0
  %v2856 = vsel %vm340, %v2846, 0.0
  %v2857 = vsel %vm341, %v2845, 0.0
  %v2858 = vsel %vm342, %v2844, 0.0
  %v2859 = vsel %vm343, %v2843, 0.0
  %v2860 = vsel %vm344, %v2842, 0.0
  %v2861 = vsel %vm345, %v2841, 0.0
  %v2862 = vsel %vm346, %v2840, 0.0
  %v2863 = vsel %vm347, %v2839, 0.0
  %v2864 = vsel %vm348, %v2838, 0.0
  %v2865 = vsel %vm349, %v2837, 0.0
  %v2866 = vsel %vm350, %v2836, 0.0
  %v2867 = vsel %vm351, %v2835, 0.0
  %v2868 = vsel %vm352, %v2834, 0.0
  %v2869 = vsel %vm353, %v2833, 0.0
  %v2870 = vsel %vm354, %v2832, 0.0
  %v2871 = vsel %vm355, %v2831, 0.0
  %v2872 = vsel %vm356, %v2830, 0.0
  %v2873 = vsel %vm357, %v2829, 0.0
  %v2874 = vsel %vm358, %v2828, 0.0
  %v2875 = vsel %vm359, %v2827, 0.0
  %v2876 = vsel %vm360, %v2826, 0.0
  %v2877 = vsel %vm361, %v2825, 0.0
  %v2878 = vsel %vm362, %v2824, 0.0
  %v2879 = vsel %vm363, %v2823, 0.0
  %v2880 = vsel %vm364, %v2822, 0.0
  %v2881 = vsel %vm365, %v2821, 0.0
  %v2882 = vsel %vm366, %v2820, 0.0
  %v2883 = vsel %vm367, %v2851, 0.0
  %v2884 = vpack.c.bf16 %v2853, %v2852
  %v2885 = vpack.c.bf16 %v2855, %v2854
  %v2886 = vpack.c.bf16 %v2857, %v2856
  %v2887 = vpack.c.bf16 %v2859, %v2858
  %v2888 = vpack.c.bf16 %v2861, %v2860
  %v2889 = vpack.c.bf16 %v2863, %v2862
  %v2890 = vpack.c.bf16 %v2865, %v2864
  %v2891 = vpack.c.bf16 %v2867, %v2866
  %v2892 = vpack.c.bf16 %v2869, %v2868
  %v2893 = vpack.c.bf16 %v2871, %v2870
  %v2894 = vpack.c.bf16 %v2873, %v2872
  %v2895 = vpack.c.bf16 %v2875, %v2874
  %v2896 = vpack.c.bf16 %v2877, %v2876
  %v2897 = vpack.c.bf16 %v2879, %v2878
  %v2898 = vpack.c.bf16 %v2881, %v2880
  %v2899 = vpack.c.bf16 %v2883, %v2882
  %s2900 = scalar_lea.vmem %s1, 640
  %v2901 = vld [vmem:[%s2900] sm:$0xff]
  %v2902 = vld [vmem:[%s2900 + $0x8] sm:$0xff]
  %v2903 = vld [vmem:[%s2900 + $0x10] sm:$0xff]
  %v2904 = vld [vmem:[%s2900 + $0x18] sm:$0xff]
  %v2905 = vld [vmem:[%s2900 + $0x20] sm:$0xff]
  %v2906 = vld [vmem:[%s2900 + $0x28] sm:$0xff]
  %v2907 = vld [vmem:[%s2900 + $0x30] sm:$0xff]
  %v2908 = vld [vmem:[%s2900 + $0x38] sm:$0xff]
  %v2909 = vld [vmem:[%s2900 + $0x40] sm:$0xff]
  %v2910 = vld [vmem:[%s2900 + $0x48] sm:$0xff]
  %v2911 = vld [vmem:[%s2900 + $0x50] sm:$0xff]
  %v2912 = vld [vmem:[%s2900 + $0x58] sm:$0xff]
  %v2913 = vld [vmem:[%s2900 + $0x60] sm:$0xff]
  %v2914 = vld [vmem:[%s2900 + $0x68] sm:$0xff]
  %v2915 = vld [vmem:[%s2900 + $0x70] sm:$0xff]
  %v2916 = vld [vmem:[%s2900 + $0x78] sm:$0xff]
  %v2933 = vunpack.c.l.b16 %v2901
  %v2934 = vunpack.c.h.b16 %v2901
  %v2935 = vunpack.c.l.b16 %v2902
  %v2936 = vunpack.c.h.b16 %v2902
  %v2937 = vunpack.c.l.b16 %v2903
  %v2938 = vunpack.c.h.b16 %v2903
  %v2939 = vunpack.c.l.b16 %v2904
  %v2940 = vunpack.c.h.b16 %v2904
  %v2941 = vunpack.c.l.b16 %v2905
  %v2942 = vunpack.c.h.b16 %v2905
  %v2943 = vunpack.c.l.b16 %v2906
  %v2944 = vunpack.c.h.b16 %v2906
  %v2945 = vunpack.c.l.b16 %v2907
  %v2946 = vunpack.c.h.b16 %v2907
  %v2947 = vunpack.c.l.b16 %v2908
  %v2948 = vunpack.c.h.b16 %v2908
  %v2949 = vunpack.c.l.b16 %v2909
  %v2950 = vunpack.c.h.b16 %v2909
  %v2951 = vunpack.c.l.b16 %v2910
  %v2952 = vunpack.c.h.b16 %v2910
  %v2953 = vunpack.c.l.b16 %v2911
  %v2954 = vunpack.c.h.b16 %v2911
  %v2955 = vunpack.c.l.b16 %v2912
  %v2956 = vunpack.c.h.b16 %v2912
  %v2957 = vunpack.c.l.b16 %v2913
  %v2958 = vunpack.c.h.b16 %v2913
  %v2959 = vunpack.c.l.b16 %v2914
  %v2960 = vunpack.c.h.b16 %v2914
  %v2961 = vunpack.c.l.b16 %v2915
  %v2962 = vunpack.c.h.b16 %v2915
  %v2963 = vunpack.c.l.b16 %v2916
  %v2964 = vunpack.c.h.b16 %v2916
  %v2965 = vpack.c.b16 %v2935, %v2933
  %v2966 = vpack.c.b16 %v2936, %v2934
  %v2967 = vpack.c.b16 %v2939, %v2937
  %v2968 = vpack.c.b16 %v2940, %v2938
  %v2969 = vpack.c.b16 %v2943, %v2941
  %v2970 = vpack.c.b16 %v2944, %v2942
  %v2971 = vpack.c.b16 %v2947, %v2945
  %v2972 = vpack.c.b16 %v2948, %v2946
  %v2973 = vpack.c.b16 %v2951, %v2949
  %v2974 = vpack.c.b16 %v2952, %v2950
  %v2975 = vpack.c.b16 %v2955, %v2953
  %v2976 = vpack.c.b16 %v2956, %v2954
  %v2977 = vpack.c.b16 %v2959, %v2957
  %v2978 = vpack.c.b16 %v2960, %v2958
  %v2979 = vpack.c.b16 %v2963, %v2961
  %v2980 = vpack.c.b16 %v2964, %v2962
  %2997 = vmatprep.subr.bf16.mxu0 %v2980
  %2998 = vmatpush1.bf16.msra.mxu0 %v2979
  %2999 = vmatprep.subr.bf16.mxu0 %v2978
  %3000 = vmatpush1.bf16.msra.mxu0 %v2977
  %3001 = vmatprep.subr.bf16.mxu0 %v2976
  %3002 = vmatpush1.bf16.msra.mxu0 %v2975
  %3003 = vmatprep.subr.bf16.mxu0 %v2974
  %3004 = vmatpush1.bf16.msra.mxu0 %v2973
  %3005 = vmatprep.subr.bf16.mxu0 %v2972
  %3006 = vmatpush1.bf16.msra.mxu0 %v2971
  %3007 = vmatprep.subr.bf16.mxu0 %v2970
  %3008 = vmatpush1.bf16.msra.mxu0 %v2969
  %3009 = vmatprep.subr.bf16.mxu0 %v2968
  %3010 = vmatpush1.bf16.msra.mxu0 %v2967
  %3011 = vmatprep.subr.bf16.mxu0 %v2966
  %3012 = vmatpush1.bf16.msra.mxu0 %v2965
  %3013 = vmatprep.subr.bf16.mxu0 0
  %3014 = vmatpush2.bf16.msra.mxu0 0
  %3015 = vmatprep.subr.bf16.mxu0 0
  %3016 = vmatpush2.bf16.msra.mxu0 0
  %3017 = vmatprep.subr.bf16.mxu0 0
  %3018 = vmatpush2.bf16.msra.mxu0 0
  %3019 = vmatprep.subr.bf16.mxu0 0
  %3020 = vmatpush2.bf16.msra.mxu0 0
  %3021 = vmatprep.subr.bf16.mxu0 0
  %3022 = vmatpush2.bf16.msra.mxu0 0
  %3023 = vmatprep.subr.bf16.mxu0 0
  %3024 = vmatpush2.bf16.msra.mxu0 0
  %3025 = vmatprep.subr.bf16.mxu0 0
  %3026 = vmatpush2.bf16.msra.mxu0 0
  %3027 = vmatprep.subr.bf16.mxu0 0
  %3028 = vmatpush2.bf16.msra.mxu0 0
  %3029 = vmatprep.mubr.bf16.mxu0 0
  %3030 = vmatmul.mubr.bf16.gmra.mxu0 %v2884
  %v3031 = vpop.f32.mrf.mxu0
  %v3032 = vadd.f32 0.0, %v3031
  %v3033 = vpop.f32.mrf.mxu0
  %v3034 = vadd.f32 0.0, %v3033
  %v3035 = vpop.f32.mrf.mxu0
  %v3036 = vadd.f32 0.0, %v3035
  %v3037 = vpop.f32.mrf.mxu0
  %v3038 = vadd.f32 0.0, %v3037
  %3039 = vmatprep.mubr.bf16.mxu0 0
  %3040 = vmatmul.mubr.bf16.gmra.mxu0 %v2885
  %v3041 = vpop.f32.mrf.mxu0
  %v3042 = vadd.f32 0.0, %v3041
  %v3043 = vpop.f32.mrf.mxu0
  %v3044 = vadd.f32 0.0, %v3043
  %v3045 = vpop.f32.mrf.mxu0
  %v3046 = vadd.f32 0.0, %v3045
  %v3047 = vpop.f32.mrf.mxu0
  %v3048 = vadd.f32 0.0, %v3047
  %3049 = vmatprep.mubr.bf16.mxu0 0
  %3050 = vmatmul.mubr.bf16.gmra.mxu0 %v2886
  %v3051 = vpop.f32.mrf.mxu0
  %v3052 = vadd.f32 0.0, %v3051
  %v3053 = vpop.f32.mrf.mxu0
  %v3054 = vadd.f32 0.0, %v3053
  %v3055 = vpop.f32.mrf.mxu0
  %v3056 = vadd.f32 0.0, %v3055
  %v3057 = vpop.f32.mrf.mxu0
  %v3058 = vadd.f32 0.0, %v3057
  %3059 = vmatprep.mubr.bf16.mxu0 0
  %3060 = vmatmul.mubr.bf16.gmra.mxu0 %v2887
  %v3061 = vpop.f32.mrf.mxu0
  %v3062 = vadd.f32 0.0, %v3061
  %v3063 = vpop.f32.mrf.mxu0
  %v3064 = vadd.f32 0.0, %v3063
  %v3065 = vpop.f32.mrf.mxu0
  %v3066 = vadd.f32 0.0, %v3065
  %v3067 = vpop.f32.mrf.mxu0
  %v3068 = vadd.f32 0.0, %v3067
  %3069 = vmatprep.mubr.bf16.mxu0 0
  %3070 = vmatmul.mubr.bf16.gmra.mxu0 %v2888
  %v3071 = vpop.f32.mrf.mxu0
  %v3072 = vadd.f32 0.0, %v3071
  %v3073 = vpop.f32.mrf.mxu0
  %v3074 = vadd.f32 0.0, %v3073
  %v3075 = vpop.f32.mrf.mxu0
  %v3076 = vadd.f32 0.0, %v3075
  %v3077 = vpop.f32.mrf.mxu0
  %v3078 = vadd.f32 0.0, %v3077
  %3079 = vmatprep.mubr.bf16.mxu0 0
  %3080 = vmatmul.mubr.bf16.gmra.mxu0 %v2889
  %v3081 = vpop.f32.mrf.mxu0
  %v3082 = vadd.f32 0.0, %v3081
  %v3083 = vpop.f32.mrf.mxu0
  %v3084 = vadd.f32 0.0, %v3083
  %v3085 = vpop.f32.mrf.mxu0
  %v3086 = vadd.f32 0.0, %v3085
  %v3087 = vpop.f32.mrf.mxu0
  %v3088 = vadd.f32 0.0, %v3087
  %3089 = vmatprep.mubr.bf16.mxu0 0
  %3090 = vmatmul.mubr.bf16.gmra.mxu0 %v2890
  %v3091 = vpop.f32.mrf.mxu0
  %v3092 = vadd.f32 0.0, %v3091
  %v3093 = vpop.f32.mrf.mxu0
  %v3094 = vadd.f32 0.0, %v3093
  %v3095 = vpop.f32.mrf.mxu0
  %v3096 = vadd.f32 0.0, %v3095
  %v3097 = vpop.f32.mrf.mxu0
  %v3098 = vadd.f32 0.0, %v3097
  %3099 = vmatprep.mubr.bf16.mxu0 0
  %3100 = vmatmul.mubr.bf16.gmra.mxu0 %v2891
  %v3101 = vpop.f32.mrf.mxu0
  %v3102 = vadd.f32 0.0, %v3101
  %v3103 = vpop.f32.mrf.mxu0
  %v3104 = vadd.f32 0.0, %v3103
  %v3105 = vpop.f32.mrf.mxu0
  %v3106 = vadd.f32 0.0, %v3105
  %v3107 = vpop.f32.mrf.mxu0
  %v3108 = vadd.f32 0.0, %v3107
  %3109 = vmatprep.mubr.bf16.mxu0 0
  %3110 = vmatmul.mubr.bf16.gmra.mxu0 %v2892
  %v3111 = vpop.f32.mrf.mxu0
  %v3112 = vadd.f32 0.0, %v3111
  %v3113 = vpop.f32.mrf.mxu0
  %v3114 = vadd.f32 0.0, %v3113
  %v3115 = vpop.f32.mrf.mxu0
  %v3116 = vadd.f32 0.0, %v3115
  %v3117 = vpop.f32.mrf.mxu0
  %v3118 = vadd.f32 0.0, %v3117
  %3119 = vmatprep.mubr.bf16.mxu0 0
  %3120 = vmatmul.mubr.bf16.gmra.mxu0 %v2893
  %v3121 = vpop.f32.mrf.mxu0
  %v3122 = vadd.f32 0.0, %v3121
  %v3123 = vpop.f32.mrf.mxu0
  %v3124 = vadd.f32 0.0, %v3123
  %v3125 = vpop.f32.mrf.mxu0
  %v3126 = vadd.f32 0.0, %v3125
  %v3127 = vpop.f32.mrf.mxu0
  %v3128 = vadd.f32 0.0, %v3127
  %3129 = vmatprep.mubr.bf16.mxu0 0
  %3130 = vmatmul.mubr.bf16.gmra.mxu0 %v2894
  %v3131 = vpop.f32.mrf.mxu0
  %v3132 = vadd.f32 0.0, %v3131
  %v3133 = vpop.f32.mrf.mxu0
  %v3134 = vadd.f32 0.0, %v3133
  %v3135 = vpop.f32.mrf.mxu0
  %v3136 = vadd.f32 0.0, %v3135
  %v3137 = vpop.f32.mrf.mxu0
  %v3138 = vadd.f32 0.0, %v3137
  %3139 = vmatprep.mubr.bf16.mxu0 0
  %3140 = vmatmul.mubr.bf16.gmra.mxu0 %v2895
  %v3141 = vpop.f32.mrf.mxu0
  %v3142 = vadd.f32 0.0, %v3141
  %v3143 = vpop.f32.mrf.mxu0
  %v3144 = vadd.f32 0.0, %v3143
  %v3145 = vpop.f32.mrf.mxu0
  %v3146 = vadd.f32 0.0, %v3145
  %v3147 = vpop.f32.mrf.mxu0
  %v3148 = vadd.f32 0.0, %v3147
  %3149 = vmatprep.mubr.bf16.mxu0 0
  %3150 = vmatmul.mubr.bf16.gmra.mxu0 %v2896
  %v3151 = vpop.f32.mrf.mxu0
  %v3152 = vadd.f32 0.0, %v3151
  %v3153 = vpop.f32.mrf.mxu0
  %v3154 = vadd.f32 0.0, %v3153
  %v3155 = vpop.f32.mrf.mxu0
  %v3156 = vadd.f32 0.0, %v3155
  %v3157 = vpop.f32.mrf.mxu0
  %v3158 = vadd.f32 0.0, %v3157
  %3159 = vmatprep.mubr.bf16.mxu0 0
  %3160 = vmatmul.mubr.bf16.gmra.mxu0 %v2897
  %v3161 = vpop.f32.mrf.mxu0
  %v3162 = vadd.f32 0.0, %v3161
  %v3163 = vpop.f32.mrf.mxu0
  %v3164 = vadd.f32 0.0, %v3163
  %v3165 = vpop.f32.mrf.mxu0
  %v3166 = vadd.f32 0.0, %v3165
  %v3167 = vpop.f32.mrf.mxu0
  %v3168 = vadd.f32 0.0, %v3167
  %3169 = vmatprep.mubr.bf16.mxu0 0
  %3170 = vmatmul.mubr.bf16.gmra.mxu0 %v2898
  %v3171 = vpop.f32.mrf.mxu0
  %v3172 = vadd.f32 0.0, %v3171
  %v3173 = vpop.f32.mrf.mxu0
  %v3174 = vadd.f32 0.0, %v3173
  %v3175 = vpop.f32.mrf.mxu0
  %v3176 = vadd.f32 0.0, %v3175
  %v3177 = vpop.f32.mrf.mxu0
  %v3178 = vadd.f32 0.0, %v3177
  %3179 = vmatprep.mubr.bf16.mxu0 0
  %3180 = vmatmul.mubr.bf16.gmra.mxu0 %v2899
  %v3181 = vpop.f32.mrf.mxu0
  %v3182 = vadd.f32 0.0, %v3181
  %v3183 = vpop.f32.mrf.mxu0
  %v3184 = vadd.f32 0.0, %v3183
  %v3185 = vpop.f32.mrf.mxu0
  %v3186 = vadd.f32 0.0, %v3185
  %v3187 = vpop.f32.mrf.mxu0
  %v3188 = vadd.f32 0.0, %v3187
  %3189 = vdwg.mxu0
  %v3190 = vadd.f32 %v2724, %v3032
  %v3191 = vadd.f32 %v2725, %v3034
  %v3192 = vadd.f32 %v2726, %v3036
  %v3193 = vadd.f32 %v2727, %v3038
  %v3194 = vadd.f32 %v2728, %v3042
  %v3195 = vadd.f32 %v2729, %v3044
  %v3196 = vadd.f32 %v2730, %v3046
  %v3197 = vadd.f32 %v2731, %v3048
  %v3198 = vadd.f32 %v2732, %v3052
  %v3199 = vadd.f32 %v2733, %v3054
  %v3200 = vadd.f32 %v2734, %v3056
  %v3201 = vadd.f32 %v2735, %v3058
  %v3202 = vadd.f32 %v2736, %v3062
  %v3203 = vadd.f32 %v2737, %v3064
  %v3204 = vadd.f32 %v2738, %v3066
  %v3205 = vadd.f32 %v2739, %v3068
  %v3206 = vadd.f32 %v2740, %v3072
  %v3207 = vadd.f32 %v2741, %v3074
  %v3208 = vadd.f32 %v2742, %v3076
  %v3209 = vadd.f32 %v2743, %v3078
  %v3210 = vadd.f32 %v2744, %v3082
  %v3211 = vadd.f32 %v2745, %v3084
  %v3212 = vadd.f32 %v2746, %v3086
  %v3213 = vadd.f32 %v2747, %v3088
  %v3214 = vadd.f32 %v2748, %v3092
  %v3215 = vadd.f32 %v2749, %v3094
  %v3216 = vadd.f32 %v2750, %v3096
  %v3217 = vadd.f32 %v2751, %v3098
  %v3218 = vadd.f32 %v2752, %v3102
  %v3219 = vadd.f32 %v2753, %v3104
  %v3220 = vadd.f32 %v2754, %v3106
  %v3221 = vadd.f32 %v2755, %v3108
  %v3222 = vadd.f32 %v2756, %v3112
  %v3223 = vadd.f32 %v2757, %v3114
  %v3224 = vadd.f32 %v2758, %v3116
  %v3225 = vadd.f32 %v2759, %v3118
  %v3226 = vadd.f32 %v2760, %v3122
  %v3227 = vadd.f32 %v2761, %v3124
  %v3228 = vadd.f32 %v2762, %v3126
  %v3229 = vadd.f32 %v2763, %v3128
  %v3230 = vadd.f32 %v2764, %v3132
  %v3231 = vadd.f32 %v2765, %v3134
  %v3232 = vadd.f32 %v2766, %v3136
  %v3233 = vadd.f32 %v2767, %v3138
  %v3234 = vadd.f32 %v2768, %v3142
  %v3235 = vadd.f32 %v2769, %v3144
  %v3236 = vadd.f32 %v2770, %v3146
  %v3237 = vadd.f32 %v2771, %v3148
  %v3238 = vadd.f32 %v2772, %v3152
  %v3239 = vadd.f32 %v2773, %v3154
  %v3240 = vadd.f32 %v2774, %v3156
  %v3241 = vadd.f32 %v2775, %v3158
  %v3242 = vadd.f32 %v2776, %v3162
  %v3243 = vadd.f32 %v2777, %v3164
  %v3244 = vadd.f32 %v2778, %v3166
  %v3245 = vadd.f32 %v2779, %v3168
  %v3246 = vadd.f32 %v2780, %v3172
  %v3247 = vadd.f32 %v2781, %v3174
  %v3248 = vadd.f32 %v2782, %v3176
  %v3249 = vadd.f32 %v2783, %v3178
  %v3250 = vadd.f32 %v2784, %v3182
  %v3251 = vadd.f32 %v2785, %v3184
  %v3252 = vadd.f32 %v2786, %v3186
  %v3253 = vadd.f32 %v2787, %v3188
  %v3254 = vxor.u32 %v3191, 2147483648
  %v3255 = vxor.u32 %v3193, 2147483648
  %v3256 = vxor.u32 %v3195, 2147483648
  %v3257 = vxor.u32 %v3197, 2147483648
  %v3258 = vxor.u32 %v3199, 2147483648
  %v3259 = vxor.u32 %v3201, 2147483648
  %v3260 = vxor.u32 %v3203, 2147483648
  %v3261 = vxor.u32 %v3205, 2147483648
  %v3262 = vxor.u32 %v3207, 2147483648
  %v3263 = vxor.u32 %v3209, 2147483648
  %v3264 = vxor.u32 %v3211, 2147483648
  %v3265 = vxor.u32 %v3213, 2147483648
  %v3266 = vxor.u32 %v3215, 2147483648
  %v3267 = vxor.u32 %v3217, 2147483648
  %v3268 = vxor.u32 %v3219, 2147483648
  %v3269 = vxor.u32 %v3221, 2147483648
  %v3270 = vxor.u32 %v3223, 2147483648
  %v3271 = vxor.u32 %v3225, 2147483648
  %v3272 = vxor.u32 %v3227, 2147483648
  %v3273 = vxor.u32 %v3229, 2147483648
  %v3274 = vxor.u32 %v3231, 2147483648
  %v3275 = vxor.u32 %v3233, 2147483648
  %v3276 = vxor.u32 %v3235, 2147483648
  %v3277 = vxor.u32 %v3237, 2147483648
  %v3278 = vxor.u32 %v3239, 2147483648
  %v3279 = vxor.u32 %v3241, 2147483648
  %v3280 = vxor.u32 %v3243, 2147483648
  %v3281 = vxor.u32 %v3245, 2147483648
  %v3282 = vxor.u32 %v3247, 2147483648
  %v3283 = vxor.u32 %v3249, 2147483648
  %v3284 = vxor.u32 %v3251, 2147483648
  %v3285 = vxor.u32 %v3253, 2147483648
  %v3286 = vmul.f32 %v3254, 1.442695
  %v3287 = vpow.pop %v3286
  %v3288 = vmul.f32 %v3255, 1.442695
  %v3289 = vpow.pop %v3288
  %v3290 = vmul.f32 %v3256, 1.442695
  %v3291 = vpow.pop %v3290
  %v3292 = vmul.f32 %v3257, 1.442695
  %v3293 = vpow.pop %v3292
  %v3294 = vmul.f32 %v3258, 1.442695
  %v3295 = vpow.pop %v3294
  %v3296 = vmul.f32 %v3259, 1.442695
  %v3297 = vpow.pop %v3296
  %v3298 = vmul.f32 %v3260, 1.442695
  %v3299 = vpow.pop %v3298
  %v3300 = vmul.f32 %v3261, 1.442695
  %v3301 = vpow.pop %v3300
  %v3302 = vmul.f32 %v3262, 1.442695
  %v3303 = vpow.pop %v3302
  %v3304 = vmul.f32 %v3263, 1.442695
  %v3305 = vpow.pop %v3304
  %v3306 = vmul.f32 %v3264, 1.442695
  %v3307 = vpow.pop %v3306
  %v3308 = vmul.f32 %v3265, 1.442695
  %v3309 = vpow.pop %v3308
  %v3310 = vmul.f32 %v3266, 1.442695
  %v3311 = vpow.pop %v3310
  %v3312 = vmul.f32 %v3267, 1.442695
  %v3313 = vpow.pop %v3312
  %v3314 = vmul.f32 %v3268, 1.442695
  %v3315 = vpow.pop %v3314
  %v3316 = vmul.f32 %v3269, 1.442695
  %v3317 = vpow.pop %v3316
  %v3318 = vmul.f32 %v3270, 1.442695
  %v3319 = vpow.pop %v3318
  %v3320 = vmul.f32 %v3271, 1.442695
  %v3321 = vpow.pop %v3320
  %v3322 = vmul.f32 %v3272, 1.442695
  %v3323 = vpow.pop %v3322
  %v3324 = vmul.f32 %v3273, 1.442695
  %v3325 = vpow.pop %v3324
  %v3326 = vmul.f32 %v3274, 1.442695
  %v3327 = vpow.pop %v3326
  %v3328 = vmul.f32 %v3275, 1.442695
  %v3329 = vpow.pop %v3328
  %v3330 = vmul.f32 %v3276, 1.442695
  %v3331 = vpow.pop %v3330
  %v3332 = vmul.f32 %v3277, 1.442695
  %v3333 = vpow.pop %v3332
  %v3334 = vmul.f32 %v3278, 1.442695
  %v3335 = vpow.pop %v3334
  %v3336 = vmul.f32 %v3279, 1.442695
  %v3337 = vpow.pop %v3336
  %v3338 = vmul.f32 %v3280, 1.442695
  %v3339 = vpow.pop %v3338
  %v3340 = vmul.f32 %v3281, 1.442695
  %v3341 = vpow.pop %v3340
  %v3342 = vmul.f32 %v3282, 1.442695
  %v3343 = vpow.pop %v3342
  %v3344 = vmul.f32 %v3283, 1.442695
  %v3345 = vpow.pop %v3344
  %v3346 = vmul.f32 %v3284, 1.442695
  %v3347 = vpow.pop %v3346
  %v3348 = vmul.f32 %v3285, 1.442695
  %v3349 = vpow.pop %v3348
  %v3350 = vadd.f32 %v3287, 1.0
  %v3351 = vadd.f32 %v3289, 1.0
  %v3352 = vadd.f32 %v3291, 1.0
  %v3353 = vadd.f32 %v3293, 1.0
  %v3354 = vadd.f32 %v3295, 1.0
  %v3355 = vadd.f32 %v3297, 1.0
  %v3356 = vadd.f32 %v3299, 1.0
  %v3357 = vadd.f32 %v3301, 1.0
  %v3358 = vadd.f32 %v3303, 1.0
  %v3359 = vadd.f32 %v3305, 1.0
  %v3360 = vadd.f32 %v3307, 1.0
  %v3361 = vadd.f32 %v3309, 1.0
  %v3362 = vadd.f32 %v3311, 1.0
  %v3363 = vadd.f32 %v3313, 1.0
  %v3364 = vadd.f32 %v3315, 1.0
  %v3365 = vadd.f32 %v3317, 1.0
  %v3366 = vadd.f32 %v3319, 1.0
  %v3367 = vadd.f32 %v3321, 1.0
  %v3368 = vadd.f32 %v3323, 1.0
  %v3369 = vadd.f32 %v3325, 1.0
  %v3370 = vadd.f32 %v3327, 1.0
  %v3371 = vadd.f32 %v3329, 1.0
  %v3372 = vadd.f32 %v3331, 1.0
  %v3373 = vadd.f32 %v3333, 1.0
  %v3374 = vadd.f32 %v3335, 1.0
  %v3375 = vadd.f32 %v3337, 1.0
  %v3376 = vadd.f32 %v3339, 1.0
  %v3377 = vadd.f32 %v3341, 1.0
  %v3378 = vadd.f32 %v3343, 1.0
  %v3379 = vadd.f32 %v3345, 1.0
  %v3380 = vadd.f32 %v3347, 1.0
  %v3381 = vadd.f32 %v3349, 1.0
  %v3382 = vrcp.pop %v3350
  %v3383 = vmul.f32 1.0, %v3382
  %v3384 = vrcp.pop %v3351
  %v3385 = vmul.f32 1.0, %v3384
  %v3386 = vrcp.pop %v3352
  %v3387 = vmul.f32 1.0, %v3386
  %v3388 = vrcp.pop %v3353
  %v3389 = vmul.f32 1.0, %v3388
  %v3390 = vrcp.pop %v3354
  %v3391 = vmul.f32 1.0, %v3390
  %v3392 = vrcp.pop %v3355
  %v3393 = vmul.f32 1.0, %v3392
  %v3394 = vrcp.pop %v3356
  %v3395 = vmul.f32 1.0, %v3394
  %v3396 = vrcp.pop %v3357
  %v3397 = vmul.f32 1.0, %v3396
  %v3398 = vrcp.pop %v3358
  %v3399 = vmul.f32 1.0, %v3398
  %v3400 = vrcp.pop %v3359
  %v3401 = vmul.f32 1.0, %v3400
  %v3402 = vrcp.pop %v3360
  %v3403 = vmul.f32 1.0, %v3402
  %v3404 = vrcp.pop %v3361
  %v3405 = vmul.f32 1.0, %v3404
  %v3406 = vrcp.pop %v3362
  %v3407 = vmul.f32 1.0, %v3406
  %v3408 = vrcp.pop %v3363
  %v3409 = vmul.f32 1.0, %v3408
  %v3410 = vrcp.pop %v3364
  %v3411 = vmul.f32 1.0, %v3410
  %v3412 = vrcp.pop %v3365
  %v3413 = vmul.f32 1.0, %v3412
  %v3414 = vrcp.pop %v3366
  %v3415 = vmul.f32 1.0, %v3414
  %v3416 = vrcp.pop %v3367
  %v3417 = vmul.f32 1.0, %v3416
  %v3418 = vrcp.pop %v3368
  %v3419 = vmul.f32 1.0, %v3418
  %v3420 = vrcp.pop %v3369
  %v3421 = vmul.f32 1.0, %v3420
  %v3422 = vrcp.pop %v3370
  %v3423 = vmul.f32 1.0, %v3422
  %v3424 = vrcp.pop %v3371
  %v3425 = vmul.f32 1.0, %v3424
  %v3426 = vrcp.pop %v3372
  %v3427 = vmul.f32 1.0, %v3426
  %v3428 = vrcp.pop %v3373
  %v3429 = vmul.f32 1.0, %v3428
  %v3430 = vrcp.pop %v3374
  %v3431 = vmul.f32 1.0, %v3430
  %v3432 = vrcp.pop %v3375
  %v3433 = vmul.f32 1.0, %v3432
  %v3434 = vrcp.pop %v3376
  %v3435 = vmul.f32 1.0, %v3434
  %v3436 = vrcp.pop %v3377
  %v3437 = vmul.f32 1.0, %v3436
  %v3438 = vrcp.pop %v3378
  %v3439 = vmul.f32 1.0, %v3438
  %v3440 = vrcp.pop %v3379
  %v3441 = vmul.f32 1.0, %v3440
  %v3442 = vrcp.pop %v3380
  %v3443 = vmul.f32 1.0, %v3442
  %v3444 = vrcp.pop %v3381
  %v3445 = vmul.f32 1.0, %v3444
  %v3446 = vmul.f32 %v3190, %v3383
  %v3447 = vmul.f32 %v3192, %v3385
  %v3448 = vmul.f32 %v3194, %v3387
  %v3449 = vmul.f32 %v3196, %v3389
  %v3450 = vmul.f32 %v3198, %v3391
  %v3451 = vmul.f32 %v3200, %v3393
  %v3452 = vmul.f32 %v3202, %v3395
  %v3453 = vmul.f32 %v3204, %v3397
  %v3454 = vmul.f32 %v3206, %v3399
  %v3455 = vmul.f32 %v3208, %v3401
  %v3456 = vmul.f32 %v3210, %v3403
  %v3457 = vmul.f32 %v3212, %v3405
  %v3458 = vmul.f32 %v3214, %v3407
  %v3459 = vmul.f32 %v3216, %v3409
  %v3460 = vmul.f32 %v3218, %v3411
  %v3461 = vmul.f32 %v3220, %v3413
  %v3462 = vmul.f32 %v3222, %v3415
  %v3463 = vmul.f32 %v3224, %v3417
  %v3464 = vmul.f32 %v3226, %v3419
  %v3465 = vmul.f32 %v3228, %v3421
  %v3466 = vmul.f32 %v3230, %v3423
  %v3467 = vmul.f32 %v3232, %v3425
  %v3468 = vmul.f32 %v3234, %v3427
  %v3469 = vmul.f32 %v3236, %v3429
  %v3470 = vmul.f32 %v3238, %v3431
  %v3471 = vmul.f32 %v3240, %v3433
  %v3472 = vmul.f32 %v3242, %v3435
  %v3473 = vmul.f32 %v3244, %v3437
  %v3474 = vmul.f32 %v3246, %v3439
  %v3475 = vmul.f32 %v3248, %v3441
  %v3476 = vmul.f32 %v3250, %v3443
  %v3477 = vmul.f32 %v3252, %v3445
  %v3478 = vadd.f32 %v1907, %v3446
  %v3479 = vadd.f32 %v1908, %v3447
  %v3480 = vadd.f32 %v1909, %v3448
  %v3481 = vadd.f32 %v1910, %v3449
  %v3482 = vadd.f32 %v1911, %v3450
  %v3483 = vadd.f32 %v1912, %v3451
  %v3484 = vadd.f32 %v1913, %v3452
  %v3485 = vadd.f32 %v1914, %v3453
  %v3486 = vadd.f32 %v1915, %v3454
  %v3487 = vadd.f32 %v1916, %v3455
  %v3488 = vadd.f32 %v1917, %v3456
  %v3489 = vadd.f32 %v1918, %v3457
  %v3490 = vadd.f32 %v1919, %v3458
  %v3491 = vadd.f32 %v1920, %v3459
  %v3492 = vadd.f32 %v1921, %v3460
  %v3493 = vadd.f32 %v1922, %v3461
  %v3494 = vadd.f32 %v1923, %v3462
  %v3495 = vadd.f32 %v1924, %v3463
  %v3496 = vadd.f32 %v1925, %v3464
  %v3497 = vadd.f32 %v1926, %v3465
  %v3498 = vadd.f32 %v1927, %v3466
  %v3499 = vadd.f32 %v1928, %v3467
  %v3500 = vadd.f32 %v1929, %v3468
  %v3501 = vadd.f32 %v1930, %v3469
  %v3502 = vadd.f32 %v1931, %v3470
  %v3503 = vadd.f32 %v1932, %v3471
  %v3504 = vadd.f32 %v1933, %v3472
  %v3505 = vadd.f32 %v1934, %v3473
  %v3506 = vadd.f32 %v1935, %v3474
  %v3507 = vadd.f32 %v1936, %v3475
  %v3508 = vadd.f32 %v1937, %v3476
  %v3509 = vadd.f32 %v1938, %v3477
  %s3510 = scalar_lea.vmem %s2, 4
  %v3511 = vld [vmem:[%s3510] sm:$0x3]
  %v3512 = vrot.slane %v3478, 7
  %v3513 = vrot.slane %v3479, 7
  %v3514 = vrot.slane %v3480, 7
  %v3515 = vrot.slane %v3481, 7
  %v3516 = vrot.slane %v3482, 7
  %v3517 = vrot.slane %v3483, 7
  %v3518 = vrot.slane %v3484, 7
  %v3519 = vrot.slane %v3485, 7
  %v3520 = vrot.slane %v3486, 7
  %v3521 = vrot.slane %v3487, 7
  %v3522 = vrot.slane %v3488, 7
  %v3523 = vrot.slane %v3489, 7
  %v3524 = vrot.slane %v3490, 7
  %v3525 = vrot.slane %v3491, 7
  %v3526 = vrot.slane %v3492, 7
  %v3527 = vrot.slane %v3493, 7
  %v3528 = vrot.slane %v3494, 7
  %v3529 = vrot.slane %v3495, 7
  %v3530 = vrot.slane %v3496, 7
  %v3531 = vrot.slane %v3497, 7
  %v3532 = vrot.slane %v3498, 7
  %v3533 = vrot.slane %v3499, 7
  %v3534 = vrot.slane %v3500, 7
  %v3535 = vrot.slane %v3501, 7
  %v3536 = vrot.slane %v3502, 7
  %v3537 = vrot.slane %v3503, 7
  %v3538 = vrot.slane %v3504, 7
  %v3539 = vrot.slane %v3505, 7
  %v3540 = vrot.slane %v3506, 7
  %v3541 = vrot.slane %v3507, 7
  %v3542 = vrot.slane %v3508, 7
  %v3543 = vrot.slane %v3509, 7
  %v3544 = vsel %vm401, %v3542, %v3543
  %v3545 = vsel %vm401, %v3541, %v3542
  %v3546 = vsel %vm401, %v3540, %v3541
  %v3547 = vsel %vm401, %v3539, %v3540
  %v3548 = vsel %vm401, %v3538, %v3539
  %v3549 = vsel %vm401, %v3537, %v3538
  %v3550 = vsel %vm401, %v3536, %v3537
  %v3551 = vsel %vm401, %v3535, %v3536
  %v3552 = vsel %vm401, %v3534, %v3535
  %v3553 = vsel %vm401, %v3533, %v3534
  %v3554 = vsel %vm401, %v3532, %v3533
  %v3555 = vsel %vm401, %v3531, %v3532
  %v3556 = vsel %vm401, %v3530, %v3531
  %v3557 = vsel %vm401, %v3529, %v3530
  %v3558 = vsel %vm401, %v3528, %v3529
  %v3559 = vsel %vm401, %v3527, %v3528
  %v3560 = vsel %vm401, %v3526, %v3527
  %v3561 = vsel %vm401, %v3525, %v3526
  %v3562 = vsel %vm401, %v3524, %v3525
  %v3563 = vsel %vm401, %v3523, %v3524
  %v3564 = vsel %vm401, %v3522, %v3523
  %v3565 = vsel %vm401, %v3521, %v3522
  %v3566 = vsel %vm401, %v3520, %v3521
  %v3567 = vsel %vm401, %v3519, %v3520
  %v3568 = vsel %vm401, %v3518, %v3519
  %v3569 = vsel %vm401, %v3517, %v3518
  %v3570 = vsel %vm401, %v3516, %v3517
  %v3571 = vsel %vm401, %v3515, %v3516
  %v3572 = vsel %vm401, %v3514, %v3515
  %v3573 = vsel %vm401, %v3513, %v3514
  %v3574 = vsel %vm401, %v3512, %v3513
  %v3575 = vsel %vm401, %v3543, %v3512
  %v3576 = vsel %vm304, %v3575, 0.0
  %v3577 = vsel %vm305, %v3574, 0.0
  %v3578 = vsel %vm306, %v3573, 0.0
  %v3579 = vsel %vm307, %v3572, 0.0
  %v3580 = vsel %vm308, %v3571, 0.0
  %v3581 = vsel %vm309, %v3570, 0.0
  %v3582 = vsel %vm310, %v3569, 0.0
  %v3583 = vsel %vm311, %v3568, 0.0
  %v3584 = vsel %vm312, %v3567, 0.0
  %v3585 = vsel %vm313, %v3566, 0.0
  %v3586 = vsel %vm314, %v3565, 0.0
  %v3587 = vsel %vm315, %v3564, 0.0
  %v3588 = vsel %vm316, %v3563, 0.0
  %v3589 = vsel %vm317, %v3562, 0.0
  %v3590 = vsel %vm318, %v3561, 0.0
  %v3591 = vsel %vm319, %v3560, 0.0
  %v3592 = vsel %vm320, %v3559, 0.0
  %v3593 = vsel %vm321, %v3558, 0.0
  %v3594 = vsel %vm322, %v3557, 0.0
  %v3595 = vsel %vm323, %v3556, 0.0
  %v3596 = vsel %vm324, %v3555, 0.0
  %v3597 = vsel %vm325, %v3554, 0.0
  %v3598 = vsel %vm326, %v3553, 0.0
  %v3599 = vsel %vm327, %v3552, 0.0
  %v3600 = vsel %vm328, %v3551, 0.0
  %v3601 = vsel %vm329, %v3550, 0.0
  %v3602 = vsel %vm330, %v3549, 0.0
  %v3603 = vsel %vm331, %v3548, 0.0
  %v3604 = vsel %vm332, %v3547, 0.0
  %v3605 = vsel %vm333, %v3546, 0.0
  %v3606 = vsel %vm334, %v3545, 0.0
  %v3607 = vsel %vm335, %v3544, 0.0
  %v3608 = vpack.c.bf16 %v3577, %v3576
  %v3609 = vpack.c.bf16 %v3579, %v3578
  %v3610 = vpack.c.bf16 %v3581, %v3580
  %v3611 = vpack.c.bf16 %v3583, %v3582
  %v3612 = vpack.c.bf16 %v3585, %v3584
  %v3613 = vpack.c.bf16 %v3587, %v3586
  %v3614 = vpack.c.bf16 %v3589, %v3588
  %v3615 = vpack.c.bf16 %v3591, %v3590
  %v3616 = vpack.c.bf16 %v3593, %v3592
  %v3617 = vpack.c.bf16 %v3595, %v3594
  %v3618 = vpack.c.bf16 %v3597, %v3596
  %v3619 = vpack.c.bf16 %v3599, %v3598
  %v3620 = vpack.c.bf16 %v3601, %v3600
  %v3621 = vpack.c.bf16 %v3603, %v3602
  %v3622 = vpack.c.bf16 %v3605, %v3604
  %v3623 = vpack.c.bf16 %v3607, %v3606
  %s3624 = scalar_lea.vmem %s1, 768
  %v3625 = vld [vmem:[%s3624] sm:$0xff]
  %v3626 = vld [vmem:[%s3624 + $0x8] sm:$0xff]
  %v3627 = vld [vmem:[%s3624 + $0x10] sm:$0xff]
  %v3628 = vld [vmem:[%s3624 + $0x18] sm:$0xff]
  %v3629 = vld [vmem:[%s3624 + $0x20] sm:$0xff]
  %v3630 = vld [vmem:[%s3624 + $0x28] sm:$0xff]
  %v3631 = vld [vmem:[%s3624 + $0x30] sm:$0xff]
  %v3632 = vld [vmem:[%s3624 + $0x38] sm:$0xff]
  %v3633 = vld [vmem:[%s3624 + $0x40] sm:$0xff]
  %v3634 = vld [vmem:[%s3624 + $0x48] sm:$0xff]
  %v3635 = vld [vmem:[%s3624 + $0x50] sm:$0xff]
  %v3636 = vld [vmem:[%s3624 + $0x58] sm:$0xff]
  %v3637 = vld [vmem:[%s3624 + $0x60] sm:$0xff]
  %v3638 = vld [vmem:[%s3624 + $0x68] sm:$0xff]
  %v3639 = vld [vmem:[%s3624 + $0x70] sm:$0xff]
  %v3640 = vld [vmem:[%s3624 + $0x78] sm:$0xff]
  %v3657 = vunpack.c.l.b16 %v3625
  %v3658 = vunpack.c.h.b16 %v3625
  %v3659 = vunpack.c.l.b16 %v3626
  %v3660 = vunpack.c.h.b16 %v3626
  %v3661 = vunpack.c.l.b16 %v3627
  %v3662 = vunpack.c.h.b16 %v3627
  %v3663 = vunpack.c.l.b16 %v3628
  %v3664 = vunpack.c.h.b16 %v3628
  %v3665 = vunpack.c.l.b16 %v3629
  %v3666 = vunpack.c.h.b16 %v3629
  %v3667 = vunpack.c.l.b16 %v3630
  %v3668 = vunpack.c.h.b16 %v3630
  %v3669 = vunpack.c.l.b16 %v3631
  %v3670 = vunpack.c.h.b16 %v3631
  %v3671 = vunpack.c.l.b16 %v3632
  %v3672 = vunpack.c.h.b16 %v3632
  %v3673 = vunpack.c.l.b16 %v3633
  %v3674 = vunpack.c.h.b16 %v3633
  %v3675 = vunpack.c.l.b16 %v3634
  %v3676 = vunpack.c.h.b16 %v3634
  %v3677 = vunpack.c.l.b16 %v3635
  %v3678 = vunpack.c.h.b16 %v3635
  %v3679 = vunpack.c.l.b16 %v3636
  %v3680 = vunpack.c.h.b16 %v3636
  %v3681 = vunpack.c.l.b16 %v3637
  %v3682 = vunpack.c.h.b16 %v3637
  %v3683 = vunpack.c.l.b16 %v3638
  %v3684 = vunpack.c.h.b16 %v3638
  %v3685 = vunpack.c.l.b16 %v3639
  %v3686 = vunpack.c.h.b16 %v3639
  %v3687 = vunpack.c.l.b16 %v3640
  %v3688 = vunpack.c.h.b16 %v3640
  %v3689 = vpack.c.b16 %v3659, %v3657
  %v3690 = vpack.c.b16 %v3660, %v3658
  %v3691 = vpack.c.b16 %v3663, %v3661
  %v3692 = vpack.c.b16 %v3664, %v3662
  %v3693 = vpack.c.b16 %v3667, %v3665
  %v3694 = vpack.c.b16 %v3668, %v3666
  %v3695 = vpack.c.b16 %v3671, %v3669
  %v3696 = vpack.c.b16 %v3672, %v3670
  %v3697 = vpack.c.b16 %v3675, %v3673
  %v3698 = vpack.c.b16 %v3676, %v3674
  %v3699 = vpack.c.b16 %v3679, %v3677
  %v3700 = vpack.c.b16 %v3680, %v3678
  %v3701 = vpack.c.b16 %v3683, %v3681
  %v3702 = vpack.c.b16 %v3684, %v3682
  %v3703 = vpack.c.b16 %v3687, %v3685
  %v3704 = vpack.c.b16 %v3688, %v3686
  %3721 = vmatprep.subr.bf16.mxu0 %v3704
  %3722 = vmatpush1.bf16.msra.mxu0 %v3703
  %3723 = vmatprep.subr.bf16.mxu0 %v3702
  %3724 = vmatpush1.bf16.msra.mxu0 %v3701
  %3725 = vmatprep.subr.bf16.mxu0 %v3700
  %3726 = vmatpush1.bf16.msra.mxu0 %v3699
  %3727 = vmatprep.subr.bf16.mxu0 %v3698
  %3728 = vmatpush1.bf16.msra.mxu0 %v3697
  %3729 = vmatprep.subr.bf16.mxu0 %v3696
  %3730 = vmatpush1.bf16.msra.mxu0 %v3695
  %3731 = vmatprep.subr.bf16.mxu0 %v3694
  %3732 = vmatpush1.bf16.msra.mxu0 %v3693
  %3733 = vmatprep.subr.bf16.mxu0 %v3692
  %3734 = vmatpush1.bf16.msra.mxu0 %v3691
  %3735 = vmatprep.subr.bf16.mxu0 %v3690
  %3736 = vmatpush1.bf16.msra.mxu0 %v3689
  %3737 = vmatprep.subr.bf16.mxu0 0
  %3738 = vmatpush2.bf16.msra.mxu0 0
  %3739 = vmatprep.subr.bf16.mxu0 0
  %3740 = vmatpush2.bf16.msra.mxu0 0
  %3741 = vmatprep.subr.bf16.mxu0 0
  %3742 = vmatpush2.bf16.msra.mxu0 0
  %3743 = vmatprep.subr.bf16.mxu0 0
  %3744 = vmatpush2.bf16.msra.mxu0 0
  %3745 = vmatprep.subr.bf16.mxu0 0
  %3746 = vmatpush2.bf16.msra.mxu0 0
  %3747 = vmatprep.subr.bf16.mxu0 0
  %3748 = vmatpush2.bf16.msra.mxu0 0
  %3749 = vmatprep.subr.bf16.mxu0 0
  %3750 = vmatpush2.bf16.msra.mxu0 0
  %3751 = vmatprep.subr.bf16.mxu0 0
  %3752 = vmatpush2.bf16.msra.mxu0 0
  %3753 = vmatprep.mubr.bf16.mxu0 0
  %3754 = vmatmul.mubr.bf16.gmra.mxu0 %v3608
  %v3755 = vpop.f32.mrf.mxu0
  %v3756 = vadd.f32 0.0, %v3755
  %v3757 = vpop.f32.mrf.mxu0
  %v3758 = vadd.f32 0.0, %v3757
  %v3759 = vpop.f32.mrf.mxu0
  %v3760 = vadd.f32 0.0, %v3759
  %v3761 = vpop.f32.mrf.mxu0
  %v3762 = vadd.f32 0.0, %v3761
  %3763 = vmatprep.mubr.bf16.mxu0 0
  %3764 = vmatmul.mubr.bf16.gmra.mxu0 %v3609
  %v3765 = vpop.f32.mrf.mxu0
  %v3766 = vadd.f32 0.0, %v3765
  %v3767 = vpop.f32.mrf.mxu0
  %v3768 = vadd.f32 0.0, %v3767
  %v3769 = vpop.f32.mrf.mxu0
  %v3770 = vadd.f32 0.0, %v3769
  %v3771 = vpop.f32.mrf.mxu0
  %v3772 = vadd.f32 0.0, %v3771
  %3773 = vmatprep.mubr.bf16.mxu0 0
  %3774 = vmatmul.mubr.bf16.gmra.mxu0 %v3610
  %v3775 = vpop.f32.mrf.mxu0
  %v3776 = vadd.f32 0.0, %v3775
  %v3777 = vpop.f32.mrf.mxu0
  %v3778 = vadd.f32 0.0, %v3777
  %v3779 = vpop.f32.mrf.mxu0
  %v3780 = vadd.f32 0.0, %v3779
  %v3781 = vpop.f32.mrf.mxu0
  %v3782 = vadd.f32 0.0, %v3781
  %3783 = vmatprep.mubr.bf16.mxu0 0
  %3784 = vmatmul.mubr.bf16.gmra.mxu0 %v3611
  %v3785 = vpop.f32.mrf.mxu0
  %v3786 = vadd.f32 0.0, %v3785
  %v3787 = vpop.f32.mrf.mxu0
  %v3788 = vadd.f32 0.0, %v3787
  %v3789 = vpop.f32.mrf.mxu0
  %v3790 = vadd.f32 0.0, %v3789
  %v3791 = vpop.f32.mrf.mxu0
  %v3792 = vadd.f32 0.0, %v3791
  %3793 = vmatprep.mubr.bf16.mxu0 0
  %3794 = vmatmul.mubr.bf16.gmra.mxu0 %v3612
  %v3795 = vpop.f32.mrf.mxu0
  %v3796 = vadd.f32 0.0, %v3795
  %v3797 = vpop.f32.mrf.mxu0
  %v3798 = vadd.f32 0.0, %v3797
  %v3799 = vpop.f32.mrf.mxu0
  %v3800 = vadd.f32 0.0, %v3799
  %v3801 = vpop.f32.mrf.mxu0
  %v3802 = vadd.f32 0.0, %v3801
  %3803 = vmatprep.mubr.bf16.mxu0 0
  %3804 = vmatmul.mubr.bf16.gmra.mxu0 %v3613
  %v3805 = vpop.f32.mrf.mxu0
  %v3806 = vadd.f32 0.0, %v3805
  %v3807 = vpop.f32.mrf.mxu0
  %v3808 = vadd.f32 0.0, %v3807
  %v3809 = vpop.f32.mrf.mxu0
  %v3810 = vadd.f32 0.0, %v3809
  %v3811 = vpop.f32.mrf.mxu0
  %v3812 = vadd.f32 0.0, %v3811
  %3813 = vmatprep.mubr.bf16.mxu0 0
  %3814 = vmatmul.mubr.bf16.gmra.mxu0 %v3614
  %v3815 = vpop.f32.mrf.mxu0
  %v3816 = vadd.f32 0.0, %v3815
  %v3817 = vpop.f32.mrf.mxu0
  %v3818 = vadd.f32 0.0, %v3817
  %v3819 = vpop.f32.mrf.mxu0
  %v3820 = vadd.f32 0.0, %v3819
  %v3821 = vpop.f32.mrf.mxu0
  %v3822 = vadd.f32 0.0, %v3821
  %3823 = vmatprep.mubr.bf16.mxu0 0
  %3824 = vmatmul.mubr.bf16.gmra.mxu0 %v3615
  %v3825 = vpop.f32.mrf.mxu0
  %v3826 = vadd.f32 0.0, %v3825
  %v3827 = vpop.f32.mrf.mxu0
  %v3828 = vadd.f32 0.0, %v3827
  %v3829 = vpop.f32.mrf.mxu0
  %v3830 = vadd.f32 0.0, %v3829
  %v3831 = vpop.f32.mrf.mxu0
  %v3832 = vadd.f32 0.0, %v3831
  %3833 = vmatprep.mubr.bf16.mxu0 0
  %3834 = vmatmul.mubr.bf16.gmra.mxu0 %v3616
  %v3835 = vpop.f32.mrf.mxu0
  %v3836 = vadd.f32 0.0, %v3835
  %v3837 = vpop.f32.mrf.mxu0
  %v3838 = vadd.f32 0.0, %v3837
  %v3839 = vpop.f32.mrf.mxu0
  %v3840 = vadd.f32 0.0, %v3839
  %v3841 = vpop.f32.mrf.mxu0
  %v3842 = vadd.f32 0.0, %v3841
  %3843 = vmatprep.mubr.bf16.mxu0 0
  %3844 = vmatmul.mubr.bf16.gmra.mxu0 %v3617
  %v3845 = vpop.f32.mrf.mxu0
  %v3846 = vadd.f32 0.0, %v3845
  %v3847 = vpop.f32.mrf.mxu0
  %v3848 = vadd.f32 0.0, %v3847
  %v3849 = vpop.f32.mrf.mxu0
  %v3850 = vadd.f32 0.0, %v3849
  %v3851 = vpop.f32.mrf.mxu0
  %v3852 = vadd.f32 0.0, %v3851
  %3853 = vmatprep.mubr.bf16.mxu0 0
  %3854 = vmatmul.mubr.bf16.gmra.mxu0 %v3618
  %v3855 = vpop.f32.mrf.mxu0
  %v3856 = vadd.f32 0.0, %v3855
  %v3857 = vpop.f32.mrf.mxu0
  %v3858 = vadd.f32 0.0, %v3857
  %v3859 = vpop.f32.mrf.mxu0
  %v3860 = vadd.f32 0.0, %v3859
  %v3861 = vpop.f32.mrf.mxu0
  %v3862 = vadd.f32 0.0, %v3861
  %3863 = vmatprep.mubr.bf16.mxu0 0
  %3864 = vmatmul.mubr.bf16.gmra.mxu0 %v3619
  %v3865 = vpop.f32.mrf.mxu0
  %v3866 = vadd.f32 0.0, %v3865
  %v3867 = vpop.f32.mrf.mxu0
  %v3868 = vadd.f32 0.0, %v3867
  %v3869 = vpop.f32.mrf.mxu0
  %v3870 = vadd.f32 0.0, %v3869
  %v3871 = vpop.f32.mrf.mxu0
  %v3872 = vadd.f32 0.0, %v3871
  %3873 = vmatprep.mubr.bf16.mxu0 0
  %3874 = vmatmul.mubr.bf16.gmra.mxu0 %v3620
  %v3875 = vpop.f32.mrf.mxu0
  %v3876 = vadd.f32 0.0, %v3875
  %v3877 = vpop.f32.mrf.mxu0
  %v3878 = vadd.f32 0.0, %v3877
  %v3879 = vpop.f32.mrf.mxu0
  %v3880 = vadd.f32 0.0, %v3879
  %v3881 = vpop.f32.mrf.mxu0
  %v3882 = vadd.f32 0.0, %v3881
  %3883 = vmatprep.mubr.bf16.mxu0 0
  %3884 = vmatmul.mubr.bf16.gmra.mxu0 %v3621
  %v3885 = vpop.f32.mrf.mxu0
  %v3886 = vadd.f32 0.0, %v3885
  %v3887 = vpop.f32.mrf.mxu0
  %v3888 = vadd.f32 0.0, %v3887
  %v3889 = vpop.f32.mrf.mxu0
  %v3890 = vadd.f32 0.0, %v3889
  %v3891 = vpop.f32.mrf.mxu0
  %v3892 = vadd.f32 0.0, %v3891
  %3893 = vmatprep.mubr.bf16.mxu0 0
  %3894 = vmatmul.mubr.bf16.gmra.mxu0 %v3622
  %v3895 = vpop.f32.mrf.mxu0
  %v3896 = vadd.f32 0.0, %v3895
  %v3897 = vpop.f32.mrf.mxu0
  %v3898 = vadd.f32 0.0, %v3897
  %v3899 = vpop.f32.mrf.mxu0
  %v3900 = vadd.f32 0.0, %v3899
  %v3901 = vpop.f32.mrf.mxu0
  %v3902 = vadd.f32 0.0, %v3901
  %3903 = vmatprep.mubr.bf16.mxu0 0
  %3904 = vmatmul.mubr.bf16.gmra.mxu0 %v3623
  %v3905 = vpop.f32.mrf.mxu0
  %v3906 = vadd.f32 0.0, %v3905
  %v3907 = vpop.f32.mrf.mxu0
  %v3908 = vadd.f32 0.0, %v3907
  %v3909 = vpop.f32.mrf.mxu0
  %v3910 = vadd.f32 0.0, %v3909
  %v3911 = vpop.f32.mrf.mxu0
  %v3912 = vadd.f32 0.0, %v3911
  %3913 = vdwg.mxu0
  %v3915 = vlaneseq
  %v3916 = vshrl.u32 %v3915, 7
  %v3917 = vsub.s32 0, %v3916
  %v3918 = vrot.slane %v3511, %v3917
  %v3919 = vlaneseq
  %v3920 = vshrl.u32 %v3919, 7
  %v3921 = vsub.s32 1, %v3920
  %v3922 = vrot.slane %v3511, %v3921
  %v3925 = vadd.f32 %v3918, %v3756
  %v3926 = vadd.f32 %v3922, %v3758
  %v3927 = vadd.f32 %v3918, %v3760
  %v3928 = vadd.f32 %v3922, %v3762
  %v3929 = vadd.f32 %v3918, %v3766
  %v3930 = vadd.f32 %v3922, %v3768
  %v3931 = vadd.f32 %v3918, %v3770
  %v3932 = vadd.f32 %v3922, %v3772
  %v3933 = vadd.f32 %v3918, %v3776
  %v3934 = vadd.f32 %v3922, %v3778
  %v3935 = vadd.f32 %v3918, %v3780
  %v3936 = vadd.f32 %v3922, %v3782
  %v3937 = vadd.f32 %v3918, %v3786
  %v3938 = vadd.f32 %v3922, %v3788
  %v3939 = vadd.f32 %v3918, %v3790
  %v3940 = vadd.f32 %v3922, %v3792
  %v3941 = vadd.f32 %v3918, %v3796
  %v3942 = vadd.f32 %v3922, %v3798
  %v3943 = vadd.f32 %v3918, %v3800
  %v3944 = vadd.f32 %v3922, %v3802
  %v3945 = vadd.f32 %v3918, %v3806
  %v3946 = vadd.f32 %v3922, %v3808
  %v3947 = vadd.f32 %v3918, %v3810
  %v3948 = vadd.f32 %v3922, %v3812
  %v3949 = vadd.f32 %v3918, %v3816
  %v3950 = vadd.f32 %v3922, %v3818
  %v3951 = vadd.f32 %v3918, %v3820
  %v3952 = vadd.f32 %v3922, %v3822
  %v3953 = vadd.f32 %v3918, %v3826
  %v3954 = vadd.f32 %v3922, %v3828
  %v3955 = vadd.f32 %v3918, %v3830
  %v3956 = vadd.f32 %v3922, %v3832
  %v3957 = vadd.f32 %v3918, %v3836
  %v3958 = vadd.f32 %v3922, %v3838
  %v3959 = vadd.f32 %v3918, %v3840
  %v3960 = vadd.f32 %v3922, %v3842
  %v3961 = vadd.f32 %v3918, %v3846
  %v3962 = vadd.f32 %v3922, %v3848
  %v3963 = vadd.f32 %v3918, %v3850
  %v3964 = vadd.f32 %v3922, %v3852
  %v3965 = vadd.f32 %v3918, %v3856
  %v3966 = vadd.f32 %v3922, %v3858
  %v3967 = vadd.f32 %v3918, %v3860
  %v3968 = vadd.f32 %v3922, %v3862
  %v3969 = vadd.f32 %v3918, %v3866
  %v3970 = vadd.f32 %v3922, %v3868
  %v3971 = vadd.f32 %v3918, %v3870
  %v3972 = vadd.f32 %v3922, %v3872
  %v3973 = vadd.f32 %v3918, %v3876
  %v3974 = vadd.f32 %v3922, %v3878
  %v3975 = vadd.f32 %v3918, %v3880
  %v3976 = vadd.f32 %v3922, %v3882
  %v3977 = vadd.f32 %v3918, %v3886
  %v3978 = vadd.f32 %v3922, %v3888
  %v3979 = vadd.f32 %v3918, %v3890
  %v3980 = vadd.f32 %v3922, %v3892
  %v3981 = vadd.f32 %v3918, %v3896
  %v3982 = vadd.f32 %v3922, %v3898
  %v3983 = vadd.f32 %v3918, %v3900
  %v3984 = vadd.f32 %v3922, %v3902
  %v3985 = vadd.f32 %v3918, %v3906
  %v3986 = vadd.f32 %v3922, %v3908
  %v3987 = vadd.f32 %v3918, %v3910
  %v3988 = vadd.f32 %v3922, %v3912
  %v3989 = vpack.c.bf16 %v3479, %v3478
  %v3990 = vpack.c.bf16 %v3481, %v3480
  %v3991 = vpack.c.bf16 %v3483, %v3482
  %v3992 = vpack.c.bf16 %v3485, %v3484
  %v3993 = vpack.c.bf16 %v3487, %v3486
  %v3994 = vpack.c.bf16 %v3489, %v3488
  %v3995 = vpack.c.bf16 %v3491, %v3490
  %v3996 = vpack.c.bf16 %v3493, %v3492
  %v3997 = vpack.c.bf16 %v3495, %v3494
  %v3998 = vpack.c.bf16 %v3497, %v3496
  %v3999 = vpack.c.bf16 %v3499, %v3498
  %v4000 = vpack.c.bf16 %v3501, %v3500
  %v4001 = vpack.c.bf16 %v3503, %v3502
  %v4002 = vpack.c.bf16 %v3505, %v3504
  %v4003 = vpack.c.bf16 %v3507, %v3506
  %v4004 = vpack.c.bf16 %v3509, %v3508
  %s4005 = scalar_lea.vmem %s1, 896
  %v4006 = vld [vmem:[%s4005] sm:$0xff]
  %v4007 = vld [vmem:[%s4005 + $0x8] sm:$0xff]
  %v4008 = vld [vmem:[%s4005 + $0x10] sm:$0xff]
  %v4009 = vld [vmem:[%s4005 + $0x18] sm:$0xff]
  %v4010 = vld [vmem:[%s4005 + $0x20] sm:$0xff]
  %v4011 = vld [vmem:[%s4005 + $0x28] sm:$0xff]
  %v4012 = vld [vmem:[%s4005 + $0x30] sm:$0xff]
  %v4013 = vld [vmem:[%s4005 + $0x38] sm:$0xff]
  %v4014 = vld [vmem:[%s4005 + $0x40] sm:$0xff]
  %v4015 = vld [vmem:[%s4005 + $0x48] sm:$0xff]
  %v4016 = vld [vmem:[%s4005 + $0x50] sm:$0xff]
  %v4017 = vld [vmem:[%s4005 + $0x58] sm:$0xff]
  %v4018 = vld [vmem:[%s4005 + $0x60] sm:$0xff]
  %v4019 = vld [vmem:[%s4005 + $0x68] sm:$0xff]
  %v4020 = vld [vmem:[%s4005 + $0x70] sm:$0xff]
  %v4021 = vld [vmem:[%s4005 + $0x78] sm:$0xff]
  %v4038 = vunpack.c.l.b16 %v4006
  %v4039 = vunpack.c.h.b16 %v4006
  %v4040 = vunpack.c.l.b16 %v4007
  %v4041 = vunpack.c.h.b16 %v4007
  %v4042 = vunpack.c.l.b16 %v4008
  %v4043 = vunpack.c.h.b16 %v4008
  %v4044 = vunpack.c.l.b16 %v4009
  %v4045 = vunpack.c.h.b16 %v4009
  %v4046 = vunpack.c.l.b16 %v4010
  %v4047 = vunpack.c.h.b16 %v4010
  %v4048 = vunpack.c.l.b16 %v4011
  %v4049 = vunpack.c.h.b16 %v4011
  %v4050 = vunpack.c.l.b16 %v4012
  %v4051 = vunpack.c.h.b16 %v4012
  %v4052 = vunpack.c.l.b16 %v4013
  %v4053 = vunpack.c.h.b16 %v4013
  %v4054 = vunpack.c.l.b16 %v4014
  %v4055 = vunpack.c.h.b16 %v4014
  %v4056 = vunpack.c.l.b16 %v4015
  %v4057 = vunpack.c.h.b16 %v4015
  %v4058 = vunpack.c.l.b16 %v4016
  %v4059 = vunpack.c.h.b16 %v4016
  %v4060 = vunpack.c.l.b16 %v4017
  %v4061 = vunpack.c.h.b16 %v4017
  %v4062 = vunpack.c.l.b16 %v4018
  %v4063 = vunpack.c.h.b16 %v4018
  %v4064 = vunpack.c.l.b16 %v4019
  %v4065 = vunpack.c.h.b16 %v4019
  %v4066 = vunpack.c.l.b16 %v4020
  %v4067 = vunpack.c.h.b16 %v4020
  %v4068 = vunpack.c.l.b16 %v4021
  %v4069 = vunpack.c.h.b16 %v4021
  %v4070 = vpack.c.b16 %v4040, %v4038
  %v4071 = vpack.c.b16 %v4041, %v4039
  %v4072 = vpack.c.b16 %v4044, %v4042
  %v4073 = vpack.c.b16 %v4045, %v4043
  %v4074 = vpack.c.b16 %v4048, %v4046
  %v4075 = vpack.c.b16 %v4049, %v4047
  %v4076 = vpack.c.b16 %v4052, %v4050
  %v4077 = vpack.c.b16 %v4053, %v4051
  %v4078 = vpack.c.b16 %v4056, %v4054
  %v4079 = vpack.c.b16 %v4057, %v4055
  %v4080 = vpack.c.b16 %v4060, %v4058
  %v4081 = vpack.c.b16 %v4061, %v4059
  %v4082 = vpack.c.b16 %v4064, %v4062
  %v4083 = vpack.c.b16 %v4065, %v4063
  %v4084 = vpack.c.b16 %v4068, %v4066
  %v4085 = vpack.c.b16 %v4069, %v4067
  %4102 = vmatprep.subr.bf16.mxu0 %v4085
  %4103 = vmatpush1.bf16.msra.mxu0 %v4084
  %4104 = vmatprep.subr.bf16.mxu0 %v4083
  %4105 = vmatpush1.bf16.msra.mxu0 %v4082
  %4106 = vmatprep.subr.bf16.mxu0 %v4081
  %4107 = vmatpush1.bf16.msra.mxu0 %v4080
  %4108 = vmatprep.subr.bf16.mxu0 %v4079
  %4109 = vmatpush1.bf16.msra.mxu0 %v4078
  %4110 = vmatprep.subr.bf16.mxu0 %v4077
  %4111 = vmatpush1.bf16.msra.mxu0 %v4076
  %4112 = vmatprep.subr.bf16.mxu0 %v4075
  %4113 = vmatpush1.bf16.msra.mxu0 %v4074
  %4114 = vmatprep.subr.bf16.mxu0 %v4073
  %4115 = vmatpush1.bf16.msra.mxu0 %v4072
  %4116 = vmatprep.subr.bf16.mxu0 %v4071
  %4117 = vmatpush1.bf16.msra.mxu0 %v4070
  %4118 = vmatprep.subr.bf16.mxu0 0
  %4119 = vmatpush2.bf16.msra.mxu0 0
  %4120 = vmatprep.subr.bf16.mxu0 0
  %4121 = vmatpush2.bf16.msra.mxu0 0
  %4122 = vmatprep.subr.bf16.mxu0 0
  %4123 = vmatpush2.bf16.msra.mxu0 0
  %4124 = vmatprep.subr.bf16.mxu0 0
  %4125 = vmatpush2.bf16.msra.mxu0 0
  %4126 = vmatprep.subr.bf16.mxu0 0
  %4127 = vmatpush2.bf16.msra.mxu0 0
  %4128 = vmatprep.subr.bf16.mxu0 0
  %4129 = vmatpush2.bf16.msra.mxu0 0
  %4130 = vmatprep.subr.bf16.mxu0 0
  %4131 = vmatpush2.bf16.msra.mxu0 0
  %4132 = vmatprep.subr.bf16.mxu0 0
  %4133 = vmatpush2.bf16.msra.mxu0 0
  %4134 = vmatprep.mubr.bf16.mxu0 0
  %4135 = vmatmul.mubr.bf16.gmra.mxu0 %v3989
  %v4136 = vpop.f32.mrf.mxu0
  %v4137 = vadd.f32 0.0, %v4136
  %v4138 = vpop.f32.mrf.mxu0
  %v4139 = vadd.f32 0.0, %v4138
  %v4140 = vpop.f32.mrf.mxu0
  %v4141 = vadd.f32 0.0, %v4140
  %v4142 = vpop.f32.mrf.mxu0
  %v4143 = vadd.f32 0.0, %v4142
  %4144 = vmatprep.mubr.bf16.mxu0 0
  %4145 = vmatmul.mubr.bf16.gmra.mxu0 %v3990
  %v4146 = vpop.f32.mrf.mxu0
  %v4147 = vadd.f32 0.0, %v4146
  %v4148 = vpop.f32.mrf.mxu0
  %v4149 = vadd.f32 0.0, %v4148
  %v4150 = vpop.f32.mrf.mxu0
  %v4151 = vadd.f32 0.0, %v4150
  %v4152 = vpop.f32.mrf.mxu0
  %v4153 = vadd.f32 0.0, %v4152
  %4154 = vmatprep.mubr.bf16.mxu0 0
  %4155 = vmatmul.mubr.bf16.gmra.mxu0 %v3991
  %v4156 = vpop.f32.mrf.mxu0
  %v4157 = vadd.f32 0.0, %v4156
  %v4158 = vpop.f32.mrf.mxu0
  %v4159 = vadd.f32 0.0, %v4158
  %v4160 = vpop.f32.mrf.mxu0
  %v4161 = vadd.f32 0.0, %v4160
  %v4162 = vpop.f32.mrf.mxu0
  %v4163 = vadd.f32 0.0, %v4162
  %4164 = vmatprep.mubr.bf16.mxu0 0
  %4165 = vmatmul.mubr.bf16.gmra.mxu0 %v3992
  %v4166 = vpop.f32.mrf.mxu0
  %v4167 = vadd.f32 0.0, %v4166
  %v4168 = vpop.f32.mrf.mxu0
  %v4169 = vadd.f32 0.0, %v4168
  %v4170 = vpop.f32.mrf.mxu0
  %v4171 = vadd.f32 0.0, %v4170
  %v4172 = vpop.f32.mrf.mxu0
  %v4173 = vadd.f32 0.0, %v4172
  %4174 = vmatprep.mubr.bf16.mxu0 0
  %4175 = vmatmul.mubr.bf16.gmra.mxu0 %v3993
  %v4176 = vpop.f32.mrf.mxu0
  %v4177 = vadd.f32 0.0, %v4176
  %v4178 = vpop.f32.mrf.mxu0
  %v4179 = vadd.f32 0.0, %v4178
  %v4180 = vpop.f32.mrf.mxu0
  %v4181 = vadd.f32 0.0, %v4180
  %v4182 = vpop.f32.mrf.mxu0
  %v4183 = vadd.f32 0.0, %v4182
  %4184 = vmatprep.mubr.bf16.mxu0 0
  %4185 = vmatmul.mubr.bf16.gmra.mxu0 %v3994
  %v4186 = vpop.f32.mrf.mxu0
  %v4187 = vadd.f32 0.0, %v4186
  %v4188 = vpop.f32.mrf.mxu0
  %v4189 = vadd.f32 0.0, %v4188
  %v4190 = vpop.f32.mrf.mxu0
  %v4191 = vadd.f32 0.0, %v4190
  %v4192 = vpop.f32.mrf.mxu0
  %v4193 = vadd.f32 0.0, %v4192
  %4194 = vmatprep.mubr.bf16.mxu0 0
  %4195 = vmatmul.mubr.bf16.gmra.mxu0 %v3995
  %v4196 = vpop.f32.mrf.mxu0
  %v4197 = vadd.f32 0.0, %v4196
  %v4198 = vpop.f32.mrf.mxu0
  %v4199 = vadd.f32 0.0, %v4198
  %v4200 = vpop.f32.mrf.mxu0
  %v4201 = vadd.f32 0.0, %v4200
  %v4202 = vpop.f32.mrf.mxu0
  %v4203 = vadd.f32 0.0, %v4202
  %4204 = vmatprep.mubr.bf16.mxu0 0
  %4205 = vmatmul.mubr.bf16.gmra.mxu0 %v3996
  %v4206 = vpop.f32.mrf.mxu0
  %v4207 = vadd.f32 0.0, %v4206
  %v4208 = vpop.f32.mrf.mxu0
  %v4209 = vadd.f32 0.0, %v4208
  %v4210 = vpop.f32.mrf.mxu0
  %v4211 = vadd.f32 0.0, %v4210
  %v4212 = vpop.f32.mrf.mxu0
  %v4213 = vadd.f32 0.0, %v4212
  %4214 = vmatprep.mubr.bf16.mxu0 0
  %4215 = vmatmul.mubr.bf16.gmra.mxu0 %v3997
  %v4216 = vpop.f32.mrf.mxu0
  %v4217 = vadd.f32 0.0, %v4216
  %v4218 = vpop.f32.mrf.mxu0
  %v4219 = vadd.f32 0.0, %v4218
  %v4220 = vpop.f32.mrf.mxu0
  %v4221 = vadd.f32 0.0, %v4220
  %v4222 = vpop.f32.mrf.mxu0
  %v4223 = vadd.f32 0.0, %v4222
  %4224 = vmatprep.mubr.bf16.mxu0 0
  %4225 = vmatmul.mubr.bf16.gmra.mxu0 %v3998
  %v4226 = vpop.f32.mrf.mxu0
  %v4227 = vadd.f32 0.0, %v4226
  %v4228 = vpop.f32.mrf.mxu0
  %v4229 = vadd.f32 0.0, %v4228
  %v4230 = vpop.f32.mrf.mxu0
  %v4231 = vadd.f32 0.0, %v4230
  %v4232 = vpop.f32.mrf.mxu0
  %v4233 = vadd.f32 0.0, %v4232
  %4234 = vmatprep.mubr.bf16.mxu0 0
  %4235 = vmatmul.mubr.bf16.gmra.mxu0 %v3999
  %v4236 = vpop.f32.mrf.mxu0
  %v4237 = vadd.f32 0.0, %v4236
  %v4238 = vpop.f32.mrf.mxu0
  %v4239 = vadd.f32 0.0, %v4238
  %v4240 = vpop.f32.mrf.mxu0
  %v4241 = vadd.f32 0.0, %v4240
  %v4242 = vpop.f32.mrf.mxu0
  %v4243 = vadd.f32 0.0, %v4242
  %4244 = vmatprep.mubr.bf16.mxu0 0
  %4245 = vmatmul.mubr.bf16.gmra.mxu0 %v4000
  %v4246 = vpop.f32.mrf.mxu0
  %v4247 = vadd.f32 0.0, %v4246
  %v4248 = vpop.f32.mrf.mxu0
  %v4249 = vadd.f32 0.0, %v4248
  %v4250 = vpop.f32.mrf.mxu0
  %v4251 = vadd.f32 0.0, %v4250
  %v4252 = vpop.f32.mrf.mxu0
  %v4253 = vadd.f32 0.0, %v4252
  %4254 = vmatprep.mubr.bf16.mxu0 0
  %4255 = vmatmul.mubr.bf16.gmra.mxu0 %v4001
  %v4256 = vpop.f32.mrf.mxu0
  %v4257 = vadd.f32 0.0, %v4256
  %v4258 = vpop.f32.mrf.mxu0
  %v4259 = vadd.f32 0.0, %v4258
  %v4260 = vpop.f32.mrf.mxu0
  %v4261 = vadd.f32 0.0, %v4260
  %v4262 = vpop.f32.mrf.mxu0
  %v4263 = vadd.f32 0.0, %v4262
  %4264 = vmatprep.mubr.bf16.mxu0 0
  %4265 = vmatmul.mubr.bf16.gmra.mxu0 %v4002
  %v4266 = vpop.f32.mrf.mxu0
  %v4267 = vadd.f32 0.0, %v4266
  %v4268 = vpop.f32.mrf.mxu0
  %v4269 = vadd.f32 0.0, %v4268
  %v4270 = vpop.f32.mrf.mxu0
  %v4271 = vadd.f32 0.0, %v4270
  %v4272 = vpop.f32.mrf.mxu0
  %v4273 = vadd.f32 0.0, %v4272
  %4274 = vmatprep.mubr.bf16.mxu0 0
  %4275 = vmatmul.mubr.bf16.gmra.mxu0 %v4003
  %v4276 = vpop.f32.mrf.mxu0
  %v4277 = vadd.f32 0.0, %v4276
  %v4278 = vpop.f32.mrf.mxu0
  %v4279 = vadd.f32 0.0, %v4278
  %v4280 = vpop.f32.mrf.mxu0
  %v4281 = vadd.f32 0.0, %v4280
  %v4282 = vpop.f32.mrf.mxu0
  %v4283 = vadd.f32 0.0, %v4282
  %4284 = vmatprep.mubr.bf16.mxu0 0
  %4285 = vmatmul.mubr.bf16.gmra.mxu0 %v4004
  %v4286 = vpop.f32.mrf.mxu0
  %v4287 = vadd.f32 0.0, %v4286
  %v4288 = vpop.f32.mrf.mxu0
  %v4289 = vadd.f32 0.0, %v4288
  %v4290 = vpop.f32.mrf.mxu0
  %v4291 = vadd.f32 0.0, %v4290
  %v4292 = vpop.f32.mrf.mxu0
  %v4293 = vadd.f32 0.0, %v4292
  %4294 = vdwg.mxu0
  %v4295 = vadd.f32 %v3925, %v4137
  %v4296 = vadd.f32 %v3926, %v4139
  %v4297 = vadd.f32 %v3927, %v4141
  %v4298 = vadd.f32 %v3928, %v4143
  %v4299 = vadd.f32 %v3929, %v4147
  %v4300 = vadd.f32 %v3930, %v4149
  %v4301 = vadd.f32 %v3931, %v4151
  %v4302 = vadd.f32 %v3932, %v4153
  %v4303 = vadd.f32 %v3933, %v4157
  %v4304 = vadd.f32 %v3934, %v4159
  %v4305 = vadd.f32 %v3935, %v4161
  %v4306 = vadd.f32 %v3936, %v4163
  %v4307 = vadd.f32 %v3937, %v4167
  %v4308 = vadd.f32 %v3938, %v4169
  %v4309 = vadd.f32 %v3939, %v4171
  %v4310 = vadd.f32 %v3940, %v4173
  %v4311 = vadd.f32 %v3941, %v4177
  %v4312 = vadd.f32 %v3942, %v4179
  %v4313 = vadd.f32 %v3943, %v4181
  %v4314 = vadd.f32 %v3944, %v4183
  %v4315 = vadd.f32 %v3945, %v4187
  %v4316 = vadd.f32 %v3946, %v4189
  %v4317 = vadd.f32 %v3947, %v4191
  %v4318 = vadd.f32 %v3948, %v4193
  %v4319 = vadd.f32 %v3949, %v4197
  %v4320 = vadd.f32 %v3950, %v4199
  %v4321 = vadd.f32 %v3951, %v4201
  %v4322 = vadd.f32 %v3952, %v4203
  %v4323 = vadd.f32 %v3953, %v4207
  %v4324 = vadd.f32 %v3954, %v4209
  %v4325 = vadd.f32 %v3955, %v4211
  %v4326 = vadd.f32 %v3956, %v4213
  %v4327 = vadd.f32 %v3957, %v4217
  %v4328 = vadd.f32 %v3958, %v4219
  %v4329 = vadd.f32 %v3959, %v4221
  %v4330 = vadd.f32 %v3960, %v4223
  %v4331 = vadd.f32 %v3961, %v4227
  %v4332 = vadd.f32 %v3962, %v4229
  %v4333 = vadd.f32 %v3963, %v4231
  %v4334 = vadd.f32 %v3964, %v4233
  %v4335 = vadd.f32 %v3965, %v4237
  %v4336 = vadd.f32 %v3966, %v4239
  %v4337 = vadd.f32 %v3967, %v4241
  %v4338 = vadd.f32 %v3968, %v4243
  %v4339 = vadd.f32 %v3969, %v4247
  %v4340 = vadd.f32 %v3970, %v4249
  %v4341 = vadd.f32 %v3971, %v4251
  %v4342 = vadd.f32 %v3972, %v4253
  %v4343 = vadd.f32 %v3973, %v4257
  %v4344 = vadd.f32 %v3974, %v4259
  %v4345 = vadd.f32 %v3975, %v4261
  %v4346 = vadd.f32 %v3976, %v4263
  %v4347 = vadd.f32 %v3977, %v4267
  %v4348 = vadd.f32 %v3978, %v4269
  %v4349 = vadd.f32 %v3979, %v4271
  %v4350 = vadd.f32 %v3980, %v4273
  %v4351 = vadd.f32 %v3981, %v4277
  %v4352 = vadd.f32 %v3982, %v4279
  %v4353 = vadd.f32 %v3983, %v4281
  %v4354 = vadd.f32 %v3984, %v4283
  %v4355 = vadd.f32 %v3985, %v4287
  %v4356 = vadd.f32 %v3986, %v4289
  %v4357 = vadd.f32 %v3987, %v4291
  %v4358 = vadd.f32 %v3988, %v4293
  %v4359 = vrot.slane %v3478, 1
  %v4360 = vrot.slane %v3479, 1
  %v4361 = vrot.slane %v3480, 1
  %v4362 = vrot.slane %v3481, 1
  %v4363 = vrot.slane %v3482, 1
  %v4364 = vrot.slane %v3483, 1
  %v4365 = vrot.slane %v3484, 1
  %v4366 = vrot.slane %v3485, 1
  %v4367 = vrot.slane %v3486, 1
  %v4368 = vrot.slane %v3487, 1
  %v4369 = vrot.slane %v3488, 1
  %v4370 = vrot.slane %v3489, 1
  %v4371 = vrot.slane %v3490, 1
  %v4372 = vrot.slane %v3491, 1
  %v4373 = vrot.slane %v3492, 1
  %v4374 = vrot.slane %v3493, 1
  %v4375 = vrot.slane %v3494, 1
  %v4376 = vrot.slane %v3495, 1
  %v4377 = vrot.slane %v3496, 1
  %v4378 = vrot.slane %v3497, 1
  %v4379 = vrot.slane %v3498, 1
  %v4380 = vrot.slane %v3499, 1
  %v4381 = vrot.slane %v3500, 1
  %v4382 = vrot.slane %v3501, 1
  %v4383 = vrot.slane %v3502, 1
  %v4384 = vrot.slane %v3503, 1
  %v4385 = vrot.slane %v3504, 1
  %v4386 = vrot.slane %v3505, 1
  %v4387 = vrot.slane %v3506, 1
  %v4388 = vrot.slane %v3507, 1
  %v4389 = vrot.slane %v3508, 1
  %v4390 = vrot.slane %v3509, 1
  %v4391 = vsel %vm1248, %v4389, %v4390
  %v4392 = vsel %vm1248, %v4388, %v4389
  %v4393 = vsel %vm1248, %v4387, %v4388
  %v4394 = vsel %vm1248, %v4386, %v4387
  %v4395 = vsel %vm1248, %v4385, %v4386
  %v4396 = vsel %vm1248, %v4384, %v4385
  %v4397 = vsel %vm1248, %v4383, %v4384
  %v4398 = vsel %vm1248, %v4382, %v4383
  %v4399 = vsel %vm1248, %v4381, %v4382
  %v4400 = vsel %vm1248, %v4380, %v4381
  %v4401 = vsel %vm1248, %v4379, %v4380
  %v4402 = vsel %vm1248, %v4378, %v4379
  %v4403 = vsel %vm1248, %v4377, %v4378
  %v4404 = vsel %vm1248, %v4376, %v4377
  %v4405 = vsel %vm1248, %v4375, %v4376
  %v4406 = vsel %vm1248, %v4374, %v4375
  %v4407 = vsel %vm1248, %v4373, %v4374
  %v4408 = vsel %vm1248, %v4372, %v4373
  %v4409 = vsel %vm1248, %v4371, %v4372
  %v4410 = vsel %vm1248, %v4370, %v4371
  %v4411 = vsel %vm1248, %v4369, %v4370
  %v4412 = vsel %vm1248, %v4368, %v4369
  %v4413 = vsel %vm1248, %v4367, %v4368
  %v4414 = vsel %vm1248, %v4366, %v4367
  %v4415 = vsel %vm1248, %v4365, %v4366
  %v4416 = vsel %vm1248, %v4364, %v4365
  %v4417 = vsel %vm1248, %v4363, %v4364
  %v4418 = vsel %vm1248, %v4362, %v4363
  %v4419 = vsel %vm1248, %v4361, %v4362
  %v4420 = vsel %vm1248, %v4360, %v4361
  %v4421 = vsel %vm1248, %v4359, %v4360
  %v4422 = vsel %vm1248, %v4390, %v4359
  %v4423 = vsel %vm336, %v4421, 0.0
  %v4424 = vsel %vm337, %v4420, 0.0
  %v4425 = vsel %vm338, %v4419, 0.0
  %v4426 = vsel %vm339, %v4418, 0.0
  %v4427 = vsel %vm340, %v4417, 0.0
  %v4428 = vsel %vm341, %v4416, 0.0
  %v4429 = vsel %vm342, %v4415, 0.0
  %v4430 = vsel %vm343, %v4414, 0.0
  %v4431 = vsel %vm344, %v4413, 0.0
  %v4432 = vsel %vm345, %v4412, 0.0
  %v4433 = vsel %vm346, %v4411, 0.0
  %v4434 = vsel %vm347, %v4410, 0.0
  %v4435 = vsel %vm348, %v4409, 0.0
  %v4436 = vsel %vm349, %v4408, 0.0
  %v4437 = vsel %vm350, %v4407, 0.0
  %v4438 = vsel %vm351, %v4406, 0.0
  %v4439 = vsel %vm352, %v4405, 0.0
  %v4440 = vsel %vm353, %v4404, 0.0
  %v4441 = vsel %vm354, %v4403, 0.0
  %v4442 = vsel %vm355, %v4402, 0.0
  %v4443 = vsel %vm356, %v4401, 0.0
  %v4444 = vsel %vm357, %v4400, 0.0
  %v4445 = vsel %vm358, %v4399, 0.0
  %v4446 = vsel %vm359, %v4398, 0.0
  %v4447 = vsel %vm360, %v4397, 0.0
  %v4448 = vsel %vm361, %v4396, 0.0
  %v4449 = vsel %vm362, %v4395, 0.0
  %v4450 = vsel %vm363, %v4394, 0.0
  %v4451 = vsel %vm364, %v4393, 0.0
  %v4452 = vsel %vm365, %v4392, 0.0
  %v4453 = vsel %vm366, %v4391, 0.0
  %v4454 = vsel %vm367, %v4422, 0.0
  %v4455 = vpack.c.bf16 %v4424, %v4423
  %v4456 = vpack.c.bf16 %v4426, %v4425
  %v4457 = vpack.c.bf16 %v4428, %v4427
  %v4458 = vpack.c.bf16 %v4430, %v4429
  %v4459 = vpack.c.bf16 %v4432, %v4431
  %v4460 = vpack.c.bf16 %v4434, %v4433
  %v4461 = vpack.c.bf16 %v4436, %v4435
  %v4462 = vpack.c.bf16 %v4438, %v4437
  %v4463 = vpack.c.bf16 %v4440, %v4439
  %v4464 = vpack.c.bf16 %v4442, %v4441
  %v4465 = vpack.c.bf16 %v4444, %v4443
  %v4466 = vpack.c.bf16 %v4446, %v4445
  %v4467 = vpack.c.bf16 %v4448, %v4447
  %v4468 = vpack.c.bf16 %v4450, %v4449
  %v4469 = vpack.c.bf16 %v4452, %v4451
  %v4470 = vpack.c.bf16 %v4454, %v4453
  %s4471 = scalar_lea.vmem %s1, 1024
  %v4472 = vld [vmem:[%s4471] sm:$0xff]
  %v4473 = vld [vmem:[%s4471 + $0x8] sm:$0xff]
  %v4474 = vld [vmem:[%s4471 + $0x10] sm:$0xff]
  %v4475 = vld [vmem:[%s4471 + $0x18] sm:$0xff]
  %v4476 = vld [vmem:[%s4471 + $0x20] sm:$0xff]
  %v4477 = vld [vmem:[%s4471 + $0x28] sm:$0xff]
  %v4478 = vld [vmem:[%s4471 + $0x30] sm:$0xff]
  %v4479 = vld [vmem:[%s4471 + $0x38] sm:$0xff]
  %v4480 = vld [vmem:[%s4471 + $0x40] sm:$0xff]
  %v4481 = vld [vmem:[%s4471 + $0x48] sm:$0xff]
  %v4482 = vld [vmem:[%s4471 + $0x50] sm:$0xff]
  %v4483 = vld [vmem:[%s4471 + $0x58] sm:$0xff]
  %v4484 = vld [vmem:[%s4471 + $0x60] sm:$0xff]
  %v4485 = vld [vmem:[%s4471 + $0x68] sm:$0xff]
  %v4486 = vld [vmem:[%s4471 + $0x70] sm:$0xff]
  %v4487 = vld [vmem:[%s4471 + $0x78] sm:$0xff]
  %v4504 = vunpack.c.l.b16 %v4472
  %v4505 = vunpack.c.h.b16 %v4472
  %v4506 = vunpack.c.l.b16 %v4473
  %v4507 = vunpack.c.h.b16 %v4473
  %v4508 = vunpack.c.l.b16 %v4474
  %v4509 = vunpack.c.h.b16 %v4474
  %v4510 = vunpack.c.l.b16 %v4475
  %v4511 = vunpack.c.h.b16 %v4475
  %v4512 = vunpack.c.l.b16 %v4476
  %v4513 = vunpack.c.h.b16 %v4476
  %v4514 = vunpack.c.l.b16 %v4477
  %v4515 = vunpack.c.h.b16 %v4477
  %v4516 = vunpack.c.l.b16 %v4478
  %v4517 = vunpack.c.h.b16 %v4478
  %v4518 = vunpack.c.l.b16 %v4479
  %v4519 = vunpack.c.h.b16 %v4479
  %v4520 = vunpack.c.l.b16 %v4480
  %v4521 = vunpack.c.h.b16 %v4480
  %v4522 = vunpack.c.l.b16 %v4481
  %v4523 = vunpack.c.h.b16 %v4481
  %v4524 = vunpack.c.l.b16 %v4482
  %v4525 = vunpack.c.h.b16 %v4482
  %v4526 = vunpack.c.l.b16 %v4483
  %v4527 = vunpack.c.h.b16 %v4483
  %v4528 = vunpack.c.l.b16 %v4484
  %v4529 = vunpack.c.h.b16 %v4484
  %v4530 = vunpack.c.l.b16 %v4485
  %v4531 = vunpack.c.h.b16 %v4485
  %v4532 = vunpack.c.l.b16 %v4486
  %v4533 = vunpack.c.h.b16 %v4486
  %v4534 = vunpack.c.l.b16 %v4487
  %v4535 = vunpack.c.h.b16 %v4487
  %v4536 = vpack.c.b16 %v4506, %v4504
  %v4537 = vpack.c.b16 %v4507, %v4505
  %v4538 = vpack.c.b16 %v4510, %v4508
  %v4539 = vpack.c.b16 %v4511, %v4509
  %v4540 = vpack.c.b16 %v4514, %v4512
  %v4541 = vpack.c.b16 %v4515, %v4513
  %v4542 = vpack.c.b16 %v4518, %v4516
  %v4543 = vpack.c.b16 %v4519, %v4517
  %v4544 = vpack.c.b16 %v4522, %v4520
  %v4545 = vpack.c.b16 %v4523, %v4521
  %v4546 = vpack.c.b16 %v4526, %v4524
  %v4547 = vpack.c.b16 %v4527, %v4525
  %v4548 = vpack.c.b16 %v4530, %v4528
  %v4549 = vpack.c.b16 %v4531, %v4529
  %v4550 = vpack.c.b16 %v4534, %v4532
  %v4551 = vpack.c.b16 %v4535, %v4533
  %4568 = vmatprep.subr.bf16.mxu0 %v4551
  %4569 = vmatpush1.bf16.msra.mxu0 %v4550
  %4570 = vmatprep.subr.bf16.mxu0 %v4549
  %4571 = vmatpush1.bf16.msra.mxu0 %v4548
  %4572 = vmatprep.subr.bf16.mxu0 %v4547
  %4573 = vmatpush1.bf16.msra.mxu0 %v4546
  %4574 = vmatprep.subr.bf16.mxu0 %v4545
  %4575 = vmatpush1.bf16.msra.mxu0 %v4544
  %4576 = vmatprep.subr.bf16.mxu0 %v4543
  %4577 = vmatpush1.bf16.msra.mxu0 %v4542
  %4578 = vmatprep.subr.bf16.mxu0 %v4541
  %4579 = vmatpush1.bf16.msra.mxu0 %v4540
  %4580 = vmatprep.subr.bf16.mxu0 %v4539
  %4581 = vmatpush1.bf16.msra.mxu0 %v4538
  %4582 = vmatprep.subr.bf16.mxu0 %v4537
  %4583 = vmatpush1.bf16.msra.mxu0 %v4536
  %4584 = vmatprep.subr.bf16.mxu0 0
  %4585 = vmatpush2.bf16.msra.mxu0 0
  %4586 = vmatprep.subr.bf16.mxu0 0
  %4587 = vmatpush2.bf16.msra.mxu0 0
  %4588 = vmatprep.subr.bf16.mxu0 0
  %4589 = vmatpush2.bf16.msra.mxu0 0
  %4590 = vmatprep.subr.bf16.mxu0 0
  %4591 = vmatpush2.bf16.msra.mxu0 0
  %4592 = vmatprep.subr.bf16.mxu0 0
  %4593 = vmatpush2.bf16.msra.mxu0 0
  %4594 = vmatprep.subr.bf16.mxu0 0
  %4595 = vmatpush2.bf16.msra.mxu0 0
  %4596 = vmatprep.subr.bf16.mxu0 0
  %4597 = vmatpush2.bf16.msra.mxu0 0
  %4598 = vmatprep.subr.bf16.mxu0 0
  %4599 = vmatpush2.bf16.msra.mxu0 0
  %4600 = vmatprep.mubr.bf16.mxu0 0
  %4601 = vmatmul.mubr.bf16.gmra.mxu0 %v4455
  %v4602 = vpop.f32.mrf.mxu0
  %v4603 = vadd.f32 0.0, %v4602
  %v4604 = vpop.f32.mrf.mxu0
  %v4605 = vadd.f32 0.0, %v4604
  %v4606 = vpop.f32.mrf.mxu0
  %v4607 = vadd.f32 0.0, %v4606
  %v4608 = vpop.f32.mrf.mxu0
  %v4609 = vadd.f32 0.0, %v4608
  %4610 = vmatprep.mubr.bf16.mxu0 0
  %4611 = vmatmul.mubr.bf16.gmra.mxu0 %v4456
  %v4612 = vpop.f32.mrf.mxu0
  %v4613 = vadd.f32 0.0, %v4612
  %v4614 = vpop.f32.mrf.mxu0
  %v4615 = vadd.f32 0.0, %v4614
  %v4616 = vpop.f32.mrf.mxu0
  %v4617 = vadd.f32 0.0, %v4616
  %v4618 = vpop.f32.mrf.mxu0
  %v4619 = vadd.f32 0.0, %v4618
  %4620 = vmatprep.mubr.bf16.mxu0 0
  %4621 = vmatmul.mubr.bf16.gmra.mxu0 %v4457
  %v4622 = vpop.f32.mrf.mxu0
  %v4623 = vadd.f32 0.0, %v4622
  %v4624 = vpop.f32.mrf.mxu0
  %v4625 = vadd.f32 0.0, %v4624
  %v4626 = vpop.f32.mrf.mxu0
  %v4627 = vadd.f32 0.0, %v4626
  %v4628 = vpop.f32.mrf.mxu0
  %v4629 = vadd.f32 0.0, %v4628
  %4630 = vmatprep.mubr.bf16.mxu0 0
  %4631 = vmatmul.mubr.bf16.gmra.mxu0 %v4458
  %v4632 = vpop.f32.mrf.mxu0
  %v4633 = vadd.f32 0.0, %v4632
  %v4634 = vpop.f32.mrf.mxu0
  %v4635 = vadd.f32 0.0, %v4634
  %v4636 = vpop.f32.mrf.mxu0
  %v4637 = vadd.f32 0.0, %v4636
  %v4638 = vpop.f32.mrf.mxu0
  %v4639 = vadd.f32 0.0, %v4638
  %4640 = vmatprep.mubr.bf16.mxu0 0
  %4641 = vmatmul.mubr.bf16.gmra.mxu0 %v4459
  %v4642 = vpop.f32.mrf.mxu0
  %v4643 = vadd.f32 0.0, %v4642
  %v4644 = vpop.f32.mrf.mxu0
  %v4645 = vadd.f32 0.0, %v4644
  %v4646 = vpop.f32.mrf.mxu0
  %v4647 = vadd.f32 0.0, %v4646
  %v4648 = vpop.f32.mrf.mxu0
  %v4649 = vadd.f32 0.0, %v4648
  %4650 = vmatprep.mubr.bf16.mxu0 0
  %4651 = vmatmul.mubr.bf16.gmra.mxu0 %v4460
  %v4652 = vpop.f32.mrf.mxu0
  %v4653 = vadd.f32 0.0, %v4652
  %v4654 = vpop.f32.mrf.mxu0
  %v4655 = vadd.f32 0.0, %v4654
  %v4656 = vpop.f32.mrf.mxu0
  %v4657 = vadd.f32 0.0, %v4656
  %v4658 = vpop.f32.mrf.mxu0
  %v4659 = vadd.f32 0.0, %v4658
  %4660 = vmatprep.mubr.bf16.mxu0 0
  %4661 = vmatmul.mubr.bf16.gmra.mxu0 %v4461
  %v4662 = vpop.f32.mrf.mxu0
  %v4663 = vadd.f32 0.0, %v4662
  %v4664 = vpop.f32.mrf.mxu0
  %v4665 = vadd.f32 0.0, %v4664
  %v4666 = vpop.f32.mrf.mxu0
  %v4667 = vadd.f32 0.0, %v4666
  %v4668 = vpop.f32.mrf.mxu0
  %v4669 = vadd.f32 0.0, %v4668
  %4670 = vmatprep.mubr.bf16.mxu0 0
  %4671 = vmatmul.mubr.bf16.gmra.mxu0 %v4462
  %v4672 = vpop.f32.mrf.mxu0
  %v4673 = vadd.f32 0.0, %v4672
  %v4674 = vpop.f32.mrf.mxu0
  %v4675 = vadd.f32 0.0, %v4674
  %v4676 = vpop.f32.mrf.mxu0
  %v4677 = vadd.f32 0.0, %v4676
  %v4678 = vpop.f32.mrf.mxu0
  %v4679 = vadd.f32 0.0, %v4678
  %4680 = vmatprep.mubr.bf16.mxu0 0
  %4681 = vmatmul.mubr.bf16.gmra.mxu0 %v4463
  %v4682 = vpop.f32.mrf.mxu0
  %v4683 = vadd.f32 0.0, %v4682
  %v4684 = vpop.f32.mrf.mxu0
  %v4685 = vadd.f32 0.0, %v4684
  %v4686 = vpop.f32.mrf.mxu0
  %v4687 = vadd.f32 0.0, %v4686
  %v4688 = vpop.f32.mrf.mxu0
  %v4689 = vadd.f32 0.0, %v4688
  %4690 = vmatprep.mubr.bf16.mxu0 0
  %4691 = vmatmul.mubr.bf16.gmra.mxu0 %v4464
  %v4692 = vpop.f32.mrf.mxu0
  %v4693 = vadd.f32 0.0, %v4692
  %v4694 = vpop.f32.mrf.mxu0
  %v4695 = vadd.f32 0.0, %v4694
  %v4696 = vpop.f32.mrf.mxu0
  %v4697 = vadd.f32 0.0, %v4696
  %v4698 = vpop.f32.mrf.mxu0
  %v4699 = vadd.f32 0.0, %v4698
  %4700 = vmatprep.mubr.bf16.mxu0 0
  %4701 = vmatmul.mubr.bf16.gmra.mxu0 %v4465
  %v4702 = vpop.f32.mrf.mxu0
  %v4703 = vadd.f32 0.0, %v4702
  %v4704 = vpop.f32.mrf.mxu0
  %v4705 = vadd.f32 0.0, %v4704
  %v4706 = vpop.f32.mrf.mxu0
  %v4707 = vadd.f32 0.0, %v4706
  %v4708 = vpop.f32.mrf.mxu0
  %v4709 = vadd.f32 0.0, %v4708
  %4710 = vmatprep.mubr.bf16.mxu0 0
  %4711 = vmatmul.mubr.bf16.gmra.mxu0 %v4466
  %v4712 = vpop.f32.mrf.mxu0
  %v4713 = vadd.f32 0.0, %v4712
  %v4714 = vpop.f32.mrf.mxu0
  %v4715 = vadd.f32 0.0, %v4714
  %v4716 = vpop.f32.mrf.mxu0
  %v4717 = vadd.f32 0.0, %v4716
  %v4718 = vpop.f32.mrf.mxu0
  %v4719 = vadd.f32 0.0, %v4718
  %4720 = vmatprep.mubr.bf16.mxu0 0
  %4721 = vmatmul.mubr.bf16.gmra.mxu0 %v4467
  %v4722 = vpop.f32.mrf.mxu0
  %v4723 = vadd.f32 0.0, %v4722
  %v4724 = vpop.f32.mrf.mxu0
  %v4725 = vadd.f32 0.0, %v4724
  %v4726 = vpop.f32.mrf.mxu0
  %v4727 = vadd.f32 0.0, %v4726
  %v4728 = vpop.f32.mrf.mxu0
  %v4729 = vadd.f32 0.0, %v4728
  %4730 = vmatprep.mubr.bf16.mxu0 0
  %4731 = vmatmul.mubr.bf16.gmra.mxu0 %v4468
  %v4732 = vpop.f32.mrf.mxu0
  %v4733 = vadd.f32 0.0, %v4732
  %v4734 = vpop.f32.mrf.mxu0
  %v4735 = vadd.f32 0.0, %v4734
  %v4736 = vpop.f32.mrf.mxu0
  %v4737 = vadd.f32 0.0, %v4736
  %v4738 = vpop.f32.mrf.mxu0
  %v4739 = vadd.f32 0.0, %v4738
  %4740 = vmatprep.mubr.bf16.mxu0 0
  %4741 = vmatmul.mubr.bf16.gmra.mxu0 %v4469
  %v4742 = vpop.f32.mrf.mxu0
  %v4743 = vadd.f32 0.0, %v4742
  %v4744 = vpop.f32.mrf.mxu0
  %v4745 = vadd.f32 0.0, %v4744
  %v4746 = vpop.f32.mrf.mxu0
  %v4747 = vadd.f32 0.0, %v4746
  %v4748 = vpop.f32.mrf.mxu0
  %v4749 = vadd.f32 0.0, %v4748
  %4750 = vmatprep.mubr.bf16.mxu0 0
  %4751 = vmatmul.mubr.bf16.gmra.mxu0 %v4470
  %v4752 = vpop.f32.mrf.mxu0
  %v4753 = vadd.f32 0.0, %v4752
  %v4754 = vpop.f32.mrf.mxu0
  %v4755 = vadd.f32 0.0, %v4754
  %v4756 = vpop.f32.mrf.mxu0
  %v4757 = vadd.f32 0.0, %v4756
  %v4758 = vpop.f32.mrf.mxu0
  %v4759 = vadd.f32 0.0, %v4758
  %4760 = vdwg.mxu0
  %v4761 = vadd.f32 %v4295, %v4603
  %v4762 = vadd.f32 %v4296, %v4605
  %v4763 = vadd.f32 %v4297, %v4607
  %v4764 = vadd.f32 %v4298, %v4609
  %v4765 = vadd.f32 %v4299, %v4613
  %v4766 = vadd.f32 %v4300, %v4615
  %v4767 = vadd.f32 %v4301, %v4617
  %v4768 = vadd.f32 %v4302, %v4619
  %v4769 = vadd.f32 %v4303, %v4623
  %v4770 = vadd.f32 %v4304, %v4625
  %v4771 = vadd.f32 %v4305, %v4627
  %v4772 = vadd.f32 %v4306, %v4629
  %v4773 = vadd.f32 %v4307, %v4633
  %v4774 = vadd.f32 %v4308, %v4635
  %v4775 = vadd.f32 %v4309, %v4637
  %v4776 = vadd.f32 %v4310, %v4639
  %v4777 = vadd.f32 %v4311, %v4643
  %v4778 = vadd.f32 %v4312, %v4645
  %v4779 = vadd.f32 %v4313, %v4647
  %v4780 = vadd.f32 %v4314, %v4649
  %v4781 = vadd.f32 %v4315, %v4653
  %v4782 = vadd.f32 %v4316, %v4655
  %v4783 = vadd.f32 %v4317, %v4657
  %v4784 = vadd.f32 %v4318, %v4659
  %v4785 = vadd.f32 %v4319, %v4663
  %v4786 = vadd.f32 %v4320, %v4665
  %v4787 = vadd.f32 %v4321, %v4667
  %v4788 = vadd.f32 %v4322, %v4669
  %v4789 = vadd.f32 %v4323, %v4673
  %v4790 = vadd.f32 %v4324, %v4675
  %v4791 = vadd.f32 %v4325, %v4677
  %v4792 = vadd.f32 %v4326, %v4679
  %v4793 = vadd.f32 %v4327, %v4683
  %v4794 = vadd.f32 %v4328, %v4685
  %v4795 = vadd.f32 %v4329, %v4687
  %v4796 = vadd.f32 %v4330, %v4689
  %v4797 = vadd.f32 %v4331, %v4693
  %v4798 = vadd.f32 %v4332, %v4695
  %v4799 = vadd.f32 %v4333, %v4697
  %v4800 = vadd.f32 %v4334, %v4699
  %v4801 = vadd.f32 %v4335, %v4703
  %v4802 = vadd.f32 %v4336, %v4705
  %v4803 = vadd.f32 %v4337, %v4707
  %v4804 = vadd.f32 %v4338, %v4709
  %v4805 = vadd.f32 %v4339, %v4713
  %v4806 = vadd.f32 %v4340, %v4715
  %v4807 = vadd.f32 %v4341, %v4717
  %v4808 = vadd.f32 %v4342, %v4719
  %v4809 = vadd.f32 %v4343, %v4723
  %v4810 = vadd.f32 %v4344, %v4725
  %v4811 = vadd.f32 %v4345, %v4727
  %v4812 = vadd.f32 %v4346, %v4729
  %v4813 = vadd.f32 %v4347, %v4733
  %v4814 = vadd.f32 %v4348, %v4735
  %v4815 = vadd.f32 %v4349, %v4737
  %v4816 = vadd.f32 %v4350, %v4739
  %v4817 = vadd.f32 %v4351, %v4743
  %v4818 = vadd.f32 %v4352, %v4745
  %v4819 = vadd.f32 %v4353, %v4747
  %v4820 = vadd.f32 %v4354, %v4749
  %v4821 = vadd.f32 %v4355, %v4753
  %v4822 = vadd.f32 %v4356, %v4755
  %v4823 = vadd.f32 %v4357, %v4757
  %v4824 = vadd.f32 %v4358, %v4759
  %v4825 = vxor.u32 %v4762, 2147483648
  %v4826 = vxor.u32 %v4764, 2147483648
  %v4827 = vxor.u32 %v4766, 2147483648
  %v4828 = vxor.u32 %v4768, 2147483648
  %v4829 = vxor.u32 %v4770, 2147483648
  %v4830 = vxor.u32 %v4772, 2147483648
  %v4831 = vxor.u32 %v4774, 2147483648
  %v4832 = vxor.u32 %v4776, 2147483648
  %v4833 = vxor.u32 %v4778, 2147483648
  %v4834 = vxor.u32 %v4780, 2147483648
  %v4835 = vxor.u32 %v4782, 2147483648
  %v4836 = vxor.u32 %v4784, 2147483648
  %v4837 = vxor.u32 %v4786, 2147483648
  %v4838 = vxor.u32 %v4788, 2147483648
  %v4839 = vxor.u32 %v4790, 2147483648
  %v4840 = vxor.u32 %v4792, 2147483648
  %v4841 = vxor.u32 %v4794, 2147483648
  %v4842 = vxor.u32 %v4796, 2147483648
  %v4843 = vxor.u32 %v4798, 2147483648
  %v4844 = vxor.u32 %v4800, 2147483648
  %v4845 = vxor.u32 %v4802, 2147483648
  %v4846 = vxor.u32 %v4804, 2147483648
  %v4847 = vxor.u32 %v4806, 2147483648
  %v4848 = vxor.u32 %v4808, 2147483648
  %v4849 = vxor.u32 %v4810, 2147483648
  %v4850 = vxor.u32 %v4812, 2147483648
  %v4851 = vxor.u32 %v4814, 2147483648
  %v4852 = vxor.u32 %v4816, 2147483648
  %v4853 = vxor.u32 %v4818, 2147483648
  %v4854 = vxor.u32 %v4820, 2147483648
  %v4855 = vxor.u32 %v4822, 2147483648
  %v4856 = vxor.u32 %v4824, 2147483648
  %v4857 = vmul.f32 %v4825, 1.442695
  %v4858 = vpow.pop %v4857
  %v4859 = vmul.f32 %v4826, 1.442695
  %v4860 = vpow.pop %v4859
  %v4861 = vmul.f32 %v4827, 1.442695
  %v4862 = vpow.pop %v4861
  %v4863 = vmul.f32 %v4828, 1.442695
  %v4864 = vpow.pop %v4863
  %v4865 = vmul.f32 %v4829, 1.442695
  %v4866 = vpow.pop %v4865
  %v4867 = vmul.f32 %v4830, 1.442695
  %v4868 = vpow.pop %v4867
  %v4869 = vmul.f32 %v4831, 1.442695
  %v4870 = vpow.pop %v4869
  %v4871 = vmul.f32 %v4832, 1.442695
  %v4872 = vpow.pop %v4871
  %v4873 = vmul.f32 %v4833, 1.442695
  %v4874 = vpow.pop %v4873
  %v4875 = vmul.f32 %v4834, 1.442695
  %v4876 = vpow.pop %v4875
  %v4877 = vmul.f32 %v4835, 1.442695
  %v4878 = vpow.pop %v4877
  %v4879 = vmul.f32 %v4836, 1.442695
  %v4880 = vpow.pop %v4879
  %v4881 = vmul.f32 %v4837, 1.442695
  %v4882 = vpow.pop %v4881
  %v4883 = vmul.f32 %v4838, 1.442695
  %v4884 = vpow.pop %v4883
  %v4885 = vmul.f32 %v4839, 1.442695
  %v4886 = vpow.pop %v4885
  %v4887 = vmul.f32 %v4840, 1.442695
  %v4888 = vpow.pop %v4887
  %v4889 = vmul.f32 %v4841, 1.442695
  %v4890 = vpow.pop %v4889
  %v4891 = vmul.f32 %v4842, 1.442695
  %v4892 = vpow.pop %v4891
  %v4893 = vmul.f32 %v4843, 1.442695
  %v4894 = vpow.pop %v4893
  %v4895 = vmul.f32 %v4844, 1.442695
  %v4896 = vpow.pop %v4895
  %v4897 = vmul.f32 %v4845, 1.442695
  %v4898 = vpow.pop %v4897
  %v4899 = vmul.f32 %v4846, 1.442695
  %v4900 = vpow.pop %v4899
  %v4901 = vmul.f32 %v4847, 1.442695
  %v4902 = vpow.pop %v4901
  %v4903 = vmul.f32 %v4848, 1.442695
  %v4904 = vpow.pop %v4903
  %v4905 = vmul.f32 %v4849, 1.442695
  %v4906 = vpow.pop %v4905
  %v4907 = vmul.f32 %v4850, 1.442695
  %v4908 = vpow.pop %v4907
  %v4909 = vmul.f32 %v4851, 1.442695
  %v4910 = vpow.pop %v4909
  %v4911 = vmul.f32 %v4852, 1.442695
  %v4912 = vpow.pop %v4911
  %v4913 = vmul.f32 %v4853, 1.442695
  %v4914 = vpow.pop %v4913
  %v4915 = vmul.f32 %v4854, 1.442695
  %v4916 = vpow.pop %v4915
  %v4917 = vmul.f32 %v4855, 1.442695
  %v4918 = vpow.pop %v4917
  %v4919 = vmul.f32 %v4856, 1.442695
  %v4920 = vpow.pop %v4919
  %v4921 = vadd.f32 %v4858, 1.0
  %v4922 = vadd.f32 %v4860, 1.0
  %v4923 = vadd.f32 %v4862, 1.0
  %v4924 = vadd.f32 %v4864, 1.0
  %v4925 = vadd.f32 %v4866, 1.0
  %v4926 = vadd.f32 %v4868, 1.0
  %v4927 = vadd.f32 %v4870, 1.0
  %v4928 = vadd.f32 %v4872, 1.0
  %v4929 = vadd.f32 %v4874, 1.0
  %v4930 = vadd.f32 %v4876, 1.0
  %v4931 = vadd.f32 %v4878, 1.0
  %v4932 = vadd.f32 %v4880, 1.0
  %v4933 = vadd.f32 %v4882, 1.0
  %v4934 = vadd.f32 %v4884, 1.0
  %v4935 = vadd.f32 %v4886, 1.0
  %v4936 = vadd.f32 %v4888, 1.0
  %v4937 = vadd.f32 %v4890, 1.0
  %v4938 = vadd.f32 %v4892, 1.0
  %v4939 = vadd.f32 %v4894, 1.0
  %v4940 = vadd.f32 %v4896, 1.0
  %v4941 = vadd.f32 %v4898, 1.0
  %v4942 = vadd.f32 %v4900, 1.0
  %v4943 = vadd.f32 %v4902, 1.0
  %v4944 = vadd.f32 %v4904, 1.0
  %v4945 = vadd.f32 %v4906, 1.0
  %v4946 = vadd.f32 %v4908, 1.0
  %v4947 = vadd.f32 %v4910, 1.0
  %v4948 = vadd.f32 %v4912, 1.0
  %v4949 = vadd.f32 %v4914, 1.0
  %v4950 = vadd.f32 %v4916, 1.0
  %v4951 = vadd.f32 %v4918, 1.0
  %v4952 = vadd.f32 %v4920, 1.0
  %v4953 = vrcp.pop %v4921
  %v4954 = vmul.f32 1.0, %v4953
  %v4955 = vrcp.pop %v4922
  %v4956 = vmul.f32 1.0, %v4955
  %v4957 = vrcp.pop %v4923
  %v4958 = vmul.f32 1.0, %v4957
  %v4959 = vrcp.pop %v4924
  %v4960 = vmul.f32 1.0, %v4959
  %v4961 = vrcp.pop %v4925
  %v4962 = vmul.f32 1.0, %v4961
  %v4963 = vrcp.pop %v4926
  %v4964 = vmul.f32 1.0, %v4963
  %v4965 = vrcp.pop %v4927
  %v4966 = vmul.f32 1.0, %v4965
  %v4967 = vrcp.pop %v4928
  %v4968 = vmul.f32 1.0, %v4967
  %v4969 = vrcp.pop %v4929
  %v4970 = vmul.f32 1.0, %v4969
  %v4971 = vrcp.pop %v4930
  %v4972 = vmul.f32 1.0, %v4971
  %v4973 = vrcp.pop %v4931
  %v4974 = vmul.f32 1.0, %v4973
  %v4975 = vrcp.pop %v4932
  %v4976 = vmul.f32 1.0, %v4975
  %v4977 = vrcp.pop %v4933
  %v4978 = vmul.f32 1.0, %v4977
  %v4979 = vrcp.pop %v4934
  %v4980 = vmul.f32 1.0, %v4979
  %v4981 = vrcp.pop %v4935
  %v4982 = vmul.f32 1.0, %v4981
  %v4983 = vrcp.pop %v4936
  %v4984 = vmul.f32 1.0, %v4983
  %v4985 = vrcp.pop %v4937
  %v4986 = vmul.f32 1.0, %v4985
  %v4987 = vrcp.pop %v4938
  %v4988 = vmul.f32 1.0, %v4987
  %v4989 = vrcp.pop %v4939
  %v4990 = vmul.f32 1.0, %v4989
  %v4991 = vrcp.pop %v4940
  %v4992 = vmul.f32 1.0, %v4991
  %v4993 = vrcp.pop %v4941
  %v4994 = vmul.f32 1.0, %v4993
  %v4995 = vrcp.pop %v4942
  %v4996 = vmul.f32 1.0, %v4995
  %v4997 = vrcp.pop %v4943
  %v4998 = vmul.f32 1.0, %v4997
  %v4999 = vrcp.pop %v4944
  %v5000 = vmul.f32 1.0, %v4999
  %v5001 = vrcp.pop %v4945
  %v5002 = vmul.f32 1.0, %v5001
  %v5003 = vrcp.pop %v4946
  %v5004 = vmul.f32 1.0, %v5003
  %v5005 = vrcp.pop %v4947
  %v5006 = vmul.f32 1.0, %v5005
  %v5007 = vrcp.pop %v4948
  %v5008 = vmul.f32 1.0, %v5007
  %v5009 = vrcp.pop %v4949
  %v5010 = vmul.f32 1.0, %v5009
  %v5011 = vrcp.pop %v4950
  %v5012 = vmul.f32 1.0, %v5011
  %v5013 = vrcp.pop %v4951
  %v5014 = vmul.f32 1.0, %v5013
  %v5015 = vrcp.pop %v4952
  %v5016 = vmul.f32 1.0, %v5015
  %v5017 = vmul.f32 %v4761, %v4954
  %v5018 = vmul.f32 %v4763, %v4956
  %v5019 = vmul.f32 %v4765, %v4958
  %v5020 = vmul.f32 %v4767, %v4960
  %v5021 = vmul.f32 %v4769, %v4962
  %v5022 = vmul.f32 %v4771, %v4964
  %v5023 = vmul.f32 %v4773, %v4966
  %v5024 = vmul.f32 %v4775, %v4968
  %v5025 = vmul.f32 %v4777, %v4970
  %v5026 = vmul.f32 %v4779, %v4972
  %v5027 = vmul.f32 %v4781, %v4974
  %v5028 = vmul.f32 %v4783, %v4976
  %v5029 = vmul.f32 %v4785, %v4978
  %v5030 = vmul.f32 %v4787, %v4980
  %v5031 = vmul.f32 %v4789, %v4982
  %v5032 = vmul.f32 %v4791, %v4984
  %v5033 = vmul.f32 %v4793, %v4986
  %v5034 = vmul.f32 %v4795, %v4988
  %v5035 = vmul.f32 %v4797, %v4990
  %v5036 = vmul.f32 %v4799, %v4992
  %v5037 = vmul.f32 %v4801, %v4994
  %v5038 = vmul.f32 %v4803, %v4996
  %v5039 = vmul.f32 %v4805, %v4998
  %v5040 = vmul.f32 %v4807, %v5000
  %v5041 = vmul.f32 %v4809, %v5002
  %v5042 = vmul.f32 %v4811, %v5004
  %v5043 = vmul.f32 %v4813, %v5006
  %v5044 = vmul.f32 %v4815, %v5008
  %v5045 = vmul.f32 %v4817, %v5010
  %v5046 = vmul.f32 %v4819, %v5012
  %v5047 = vmul.f32 %v4821, %v5014
  %v5048 = vmul.f32 %v4823, %v5016
  %v5049 = vadd.f32 %v3478, %v5017
  %v5050 = vadd.f32 %v3479, %v5018
  %v5051 = vadd.f32 %v3480, %v5019
  %v5052 = vadd.f32 %v3481, %v5020
  %v5053 = vadd.f32 %v3482, %v5021
  %v5054 = vadd.f32 %v3483, %v5022
  %v5055 = vadd.f32 %v3484, %v5023
  %v5056 = vadd.f32 %v3485, %v5024
  %v5057 = vadd.f32 %v3486, %v5025
  %v5058 = vadd.f32 %v3487, %v5026
  %v5059 = vadd.f32 %v3488, %v5027
  %v5060 = vadd.f32 %v3489, %v5028
  %v5061 = vadd.f32 %v3490, %v5029
  %v5062 = vadd.f32 %v3491, %v5030
  %v5063 = vadd.f32 %v3492, %v5031
  %v5064 = vadd.f32 %v3493, %v5032
  %v5065 = vadd.f32 %v3494, %v5033
  %v5066 = vadd.f32 %v3495, %v5034
  %v5067 = vadd.f32 %v3496, %v5035
  %v5068 = vadd.f32 %v3497, %v5036
  %v5069 = vadd.f32 %v3498, %v5037
  %v5070 = vadd.f32 %v3499, %v5038
  %v5071 = vadd.f32 %v3500, %v5039
  %v5072 = vadd.f32 %v3501, %v5040
  %v5073 = vadd.f32 %v3502, %v5041
  %v5074 = vadd.f32 %v3503, %v5042
  %v5075 = vadd.f32 %v3504, %v5043
  %v5076 = vadd.f32 %v3505, %v5044
  %v5077 = vadd.f32 %v3506, %v5045
  %v5078 = vadd.f32 %v3507, %v5046
  %v5079 = vadd.f32 %v3508, %v5047
  %v5080 = vadd.f32 %v3509, %v5048
  %5081 = vst [vmem:[%s3] sm:$0xff] %v5049
  %5082 = vst [vmem:[%s3 + $0x8] sm:$0xff] %v5050
  %5083 = vst [vmem:[%s3 + $0x10] sm:$0xff] %v5051
  %5084 = vst [vmem:[%s3 + $0x18] sm:$0xff] %v5052
  %5085 = vst [vmem:[%s3 + $0x20] sm:$0xff] %v5053
  %5086 = vst [vmem:[%s3 + $0x28] sm:$0xff] %v5054
  %5087 = vst [vmem:[%s3 + $0x30] sm:$0xff] %v5055
  %5088 = vst [vmem:[%s3 + $0x38] sm:$0xff] %v5056
  %5089 = vst [vmem:[%s3 + $0x40] sm:$0xff] %v5057
  %5090 = vst [vmem:[%s3 + $0x48] sm:$0xff] %v5058
  %5091 = vst [vmem:[%s3 + $0x50] sm:$0xff] %v5059
  %5092 = vst [vmem:[%s3 + $0x58] sm:$0xff] %v5060
  %5093 = vst [vmem:[%s3 + $0x60] sm:$0xff] %v5061
  %5094 = vst [vmem:[%s3 + $0x68] sm:$0xff] %v5062
  %5095 = vst [vmem:[%s3 + $0x70] sm:$0xff] %v5063
  %5096 = vst [vmem:[%s3 + $0x78] sm:$0xff] %v5064
  %5097 = vst [vmem:[%s3 + $0x80] sm:$0xff] %v5065
  %5098 = vst [vmem:[%s3 + $0x88] sm:$0xff] %v5066
  %5099 = vst [vmem:[%s3 + $0x90] sm:$0xff] %v5067
  %5100 = vst [vmem:[%s3 + $0x98] sm:$0xff] %v5068
  %5101 = vst [vmem:[%s3 + $0xa0] sm:$0xff] %v5069
  %5102 = vst [vmem:[%s3 + $0xa8] sm:$0xff] %v5070
  %5103 = vst [vmem:[%s3 + $0xb0] sm:$0xff] %v5071
  %5104 = vst [vmem:[%s3 + $0xb8] sm:$0xff] %v5072
  %5105 = vst [vmem:[%s3 + $0xc0] sm:$0xff] %v5073
  %5106 = vst [vmem:[%s3 + $0xc8] sm:$0xff] %v5074
  %5107 = vst [vmem:[%s3 + $0xd0] sm:$0xff] %v5075
  %5108 = vst [vmem:[%s3 + $0xd8] sm:$0xff] %v5076
  %5109 = vst [vmem:[%s3 + $0xe0] sm:$0xff] %v5077
  %5110 = vst [vmem:[%s3 + $0xe8] sm:$0xff] %v5078
  %5111 = vst [vmem:[%s3 + $0xf0] sm:$0xff] %v5079
  %5112 = vst [vmem:[%s3 + $0xf8] sm:$0xff] %v5080
  // Predicated region
  $region14: #{stacked_residual_cnn.1} parent=0 // pred_check
    _
  $region15: #{stacked_residual_cnn.1} parent=0 // pred_check_branch
    %5114 = sbr.rel (0) target = $region17
  $region16: #{stacked_residual_cnn.1} parent=0 // pred_region
    _
  $region17: #{stacked_residual_cnn.1} parent=0 // pred_fallthru
    _
  // Predicated region
  $region18: #{stacked_residual_cnn.1} parent=0 // pred_check
    _
  $region19: #{stacked_residual_cnn.1} parent=0 // pred_check_branch
    %5116 = sbr.rel (0) target = $region21
  $region20: #{stacked_residual_cnn.1} parent=0 // pred_region
    _
  $region21: #{stacked_residual_cnn.1} parent=0 // pred_fallthru
    _

</llo_original>
